<compile_context>
chip_gen: v6e
topology: v6e:2x2x1
jax: 0.10.0
libtpu: 0.0.40
codegen_flags: <defaults>
</compile_context>

<pallas_src>
import functools
import math

import jax
import jax.numpy as jnp
from jax.experimental import pallas as pl
from jax.experimental.pallas import tpu as pltpu

_EPS = 1e-5      # BatchNorm1d default eps
_K = 8           # Conv1d kernel size
_PAD = 4         # Conv1d padding
_CO3_PAD = 128   # stage-3 output channels padded 60 -> 128 (lane-dense store)


# ----------------------------------------------------------------------------
# In-kernel helpers (all operate on the whole flattened batch at once).
# ----------------------------------------------------------------------------
def _conv_im2col(src_ref, wflat_ref, rows):
    """Stage-1 conv: tiny im2col (K*C_in = 32 lanes) + one MXU matmul."""
    lhs = jnp.concatenate(
        [src_ref[pl.ds(k, rows), :] for k in range(_K)], axis=1)   # (rows, K*c_in) bf16
    return jnp.dot(lhs, wflat_ref[...], preferred_element_type=jnp.float32)


def _conv_taps(src_ref, w_ref, rows):
    """Conv as K accumulated per-tap matmuls (no 8x im2col duplication).

    src_ref : (rows + 8, c_in) bf16 ref in the strided-block layout.
    w_ref   : (K, c_in, c_out) bf16 taps.
    Rows whose in-block offset >= l_out are garbage and are masked by caller.
    """
    acc = None
    for k in range(_K):
        part = jnp.dot(src_ref[pl.ds(k, rows), :], w_ref[k],
                       preferred_element_type=jnp.float32)
        acc = part if acc is None else acc + part
    return acc


def _bn_relu_mask(y, *, block, l_out, n):
    """BatchNorm1d (training batch stats, gamma=1/beta=0) + ReLU on valid rows.

    y : (n*block, c) f32 conv output; rows with (row % block) < l_out are real
        conv outputs, everything else is zeroed on output.
    """
    rows = y.shape[0]
    ridx = jax.lax.broadcasted_iota(jnp.int32, (rows, 1), 0)
    valid = (ridx % block) < l_out
    inv_cnt = 1.0 / float(n * l_out)
    mean = jnp.sum(jnp.where(valid, y, 0.0), axis=0, keepdims=True) * inv_cnt
    yc = y - mean
    ycm = jnp.where(valid, yc, 0.0)
    var = jnp.sum(ycm * ycm, axis=0, keepdims=True) * inv_cnt      # biased, centered
    yn = yc * jax.lax.rsqrt(var + _EPS)
    return jnp.where(valid, jnp.maximum(yn, 0.0), 0.0)


def _pool_compact(yclean, y_scr, rows_in, rows_out):
    """MaxPool1d(k=2,s=2,p=1) + re-layout to the next block stride, batch-wide.

    yclean : (rows_in, c) f32, post-ReLU, exactly zero outside valid rows (so
             0-padding is equivalent to -inf padding).
    y_scr  : (rows_in + 16, c) f32 VMEM scratch.
    Returns (rows_out, c) f32 already laid out for the next stage (block stride
    halves, data at offset 4): out[t] = max(Y[2t], Y[2t+1]) with Y = [9 zero
    rows; yclean].
    """
    c = yclean.shape[1]
    y_scr[0:16, :] = jnp.zeros((16, c), y_scr.dtype)
    y_scr[pl.ds(9, rows_in), :] = yclean
    return jnp.maximum(y_scr[pl.ds(0, rows_out, 2), :],
                       y_scr[pl.ds(1, rows_out, 2), :])


def _tfc_kernel(x_ref, w1_ref, w2_ref, w3_ref, o_ref,
                y1_scr, p2_scr, y2_scr, p3_scr, y3_scr, *, n, s1, l1):
    """Fused 3-stage TFC conv block; all intermediates stay on-chip."""
    s2, s3, s4 = s1 // 2, s1 // 4, s1 // 8
    lo1 = l1 + 1
    l2 = lo1 // 2 + 1
    lo2 = l2 + 1
    l3 = lo2 // 2 + 1
    lo3 = l3 + 1

    # ---- stage 1: Conv(C_in->32) -> BN -> ReLU -> MaxPool -------------------
    y = _conv_im2col(x_ref, w1_ref, n * s1)
    y = _bn_relu_mask(y, block=s1, l_out=lo1, n=n)
    pooled = _pool_compact(y, y1_scr, n * s1, n * s2)
    # TODO(synk): nn.Dropout(0.35) after stage 1 is stochastic in training
    # mode; treated as identity (eval / deterministic forward) here.
    p2_scr[pl.ds(0, n * s2), :] = pooled.astype(p2_scr.dtype)     # single bf16 cast
    p2_scr[pl.ds(n * s2, 8), :] = jnp.zeros((8, p2_scr.shape[1]), p2_scr.dtype)

    # ---- stage 2: Conv(32->64) -> BN -> ReLU -> MaxPool ---------------------
    y = _conv_taps(p2_scr, w2_ref, n * s2)
    y = _bn_relu_mask(y, block=s2, l_out=lo2, n=n)
    pooled = _pool_compact(y, y2_scr, n * s2, n * s3)
    p3_scr[pl.ds(0, n * s3), :] = pooled.astype(p3_scr.dtype)
    p3_scr[pl.ds(n * s3, 8), :] = jnp.zeros((8, p3_scr.shape[1]), p3_scr.dtype)

    # ---- stage 3: Conv(64->128pad) -> BN -> ReLU -> MaxPool -> dense store ---
    y = _conv_taps(p3_scr, w3_ref, n * s3)
    y = _bn_relu_mask(y, block=s3, l_out=lo3, n=n)
    o_ref[...] = _pool_compact(y, y3_scr, n * s3, n * s4)         # 128-lane f32 store


# ----------------------------------------------------------------------------
# Host wrapper
# ----------------------------------------------------------------------------
def _pool_len(l_out):
    return l_out // 2 + 1


@jax.jit
def tfc_conv_block(x_ncl, w1, w2, w3):
    """Full TFC_Conv_Block forward.

    x_ncl : (N, C_in, L)  PyTorch NCL layout (f32).
    w*    : (K=8, C_in, C_out) conv taps (transposed PyTorch weights).
    Returns (N, 60, L_final) in NCL layout (f32).
    """
    n, c_in, l1 = x_ncl.shape
    co1, co2, co3 = w1.shape[-1], w2.shape[-1], w3.shape[-1]

    lo1 = l1 + 1; lp1 = _pool_len(lo1)
    l2 = lp1;     lo2 = l2 + 1; lp2 = _pool_len(lo2)
    l3 = lp2;     lo3 = l3 + 1; lp3 = _pool_len(lo3)

    # Block stride S per batch item: halves every stage; big enough that the
    # inter-block zero gap covers conv padding + pooling boundary reads.
    need = max(l1 + 10, 2 * (l2 + 10), 4 * (l3 + 10), 8 * (lp3 + 4))
    s1 = ((need + 7) // 8) * 8
    s2, s3, s4 = s1 // 2, s1 // 4, s1 // 8
    assert s1 >= l1 + 10 and s2 >= l2 + 10 and s3 >= l3 + 8 and s4 >= lp3 + 4

    # Input -> bf16 strided-block layout: (n, S1, C_in) with data at rows
    # 4..4+L-1, flattened to (n*S1 + 8, C_in).  Feeds the MXU directly.
    x_nlc = jnp.transpose(x_ncl, (0, 2, 1)).astype(jnp.bfloat16)
    x_pad = jnp.pad(x_nlc, ((0, 0), (_PAD, s1 - _PAD - l1), (0, 0)))
    x_flat = jnp.pad(x_pad.reshape(n * s1, c_in), ((0, 8), (0, 0)))

    # Stage-1 weights flattened for the tiny im2col (row index = k*c_in + ci);
    # stages 2/3 keep (K, C_in, C_out) taps; stage 3 zero-padded to 128 lanes.
    w1f = w1.reshape(_K * c_in, co1).astype(jnp.bfloat16)
    w2b = w2.astype(jnp.bfloat16)
    w3b = jnp.pad(w3, ((0, 0), (0, 0), (0, _CO3_PAD - co3))).astype(jnp.bfloat16)

    kernel = functools.partial(_tfc_kernel, n=n, s1=s1, l1=l1)
    out2d = pl.pallas_call(
        kernel,
        out_shape=jax.ShapeDtypeStruct((n * s4, _CO3_PAD), jnp.float32),
        in_specs=[pl.BlockSpec(memory_space=pltpu.MemorySpace.VMEM)] * 4,
        out_specs=pl.BlockSpec(memory_space=pltpu.MemorySpace.VMEM),
        scratch_shapes=[
            pltpu.VMEM((n * s1 + 16, co1), jnp.float32),        # Y1 pool staging
            pltpu.VMEM((n * s2 + 8, co1), jnp.bfloat16),        # P2 stage-2 operand
            pltpu.VMEM((n * s2 + 16, co2), jnp.float32),        # Y2 pool staging
            pltpu.VMEM((n * s3 + 8, co2), jnp.bfloat16),        # P3 stage-3 operand
            pltpu.VMEM((n * s3 + 16, _CO3_PAD), jnp.float32),   # Y3 pool staging
        ],
        compiler_params=pltpu.CompilerParams(
            vmem_limit_bytes=32 * 1024 * 1024),
    )(x_flat, w1f, w2b, w3b)

    # Drop padded rows / channels; back to NCL.
    out = out2d.reshape(n, s4, _CO3_PAD)[:, _PAD:_PAD + lp3, :co3]
    return jnp.transpose(out, (0, 2, 1))


# ----------------------------------------------------------------------------
# Pure-JAX reference (mirrors the kernel's precision choices) + demo
# ----------------------------------------------------------------------------
def _ref_stage(x_nlc, w):
    n, l, _ = x_nlc.shape
    lo = l + 1
    xp = jnp.pad(x_nlc, ((0, 0), (_PAD, _PAD), (0, 0)))
    y = jnp.zeros((n, lo, w.shape[-1]), jnp.float32)
    for k in range(_K):
        y = y + jnp.einsum('nlc,cd->nld', xp[:, k:k + lo, :], w[k],
                           precision=jax.lax.Precision.HIGHEST)
    mean = jnp.mean(y, axis=(0, 1), keepdims=True)
    var = jnp.mean((y - mean) ** 2, axis=(0, 1), keepdims=True)
    y = jnp.maximum((y - mean) * jax.lax.rsqrt(var + _EPS), 0.0)
    lp = lo // 2 + 1
    yp = jnp.pad(y, ((0, 0), (1, 2 * lp - lo - 1), (0, 0)))       # 0-pad ok post-ReLU
    return jnp.maximum(yp[:, 0:2 * lp:2, :], yp[:, 1:2 * lp:2, :])


def _tfc_ref(x_ncl, w1, w2, w3):
    rb = lambda a: a.astype(jnp.bfloat16).astype(jnp.float32)
    y = rb(jnp.transpose(x_ncl, (0, 2, 1)))
    y = rb(_ref_stage(y, rb(w1)))
    y = rb(_ref_stage(y, rb(w2)))
    y = _ref_stage(y, rb(w3))
    return jnp.transpose(y, (0, 2, 1))


def _init_conv_weight(key, c_out, c_in, k=_K):
    """Deterministic Conv1d-style init; returns taps shaped (K, C_in, C_out)."""
    bound = 1.0 / math.sqrt(c_in * k)
    w = jax.random.uniform(key, (c_out, c_in, k), jnp.float32, -bound, bound)
    return jnp.transpose(w, (2, 1, 0))


if __name__ == "__main__":
    key = jax.random.PRNGKey(0)
    k1, k2, k3, kx = jax.random.split(key, 4)

    N, C_IN, L = 2, 4, 16
    w1 = _init_conv_weight(k1, 32, C_IN)
    w2 = _init_conv_weight(k2, 64, 32)
    w3 = _init_conv_weight(k3, 60, 64)
    x = jax.random.normal(kx, (N, C_IN, L), jnp.float32)

    out = jax.block_until_ready(tfc_conv_block(x, w1, w2, w3))

    # L=16 -> conv 17 -> pool 9 -> conv 10 -> pool 6 -> conv 7 -> pool 4.
    assert out.shape == (N, 60, 4), out.shape
    assert bool(jnp.all(jnp.isfinite(out)))

    ref = _tfc_ref(x, w1, w2, w3)
    err = float(jnp.max(jnp.abs(out - ref)))
    assert err < 2e-2, f"max abs diff vs reference: {err}"

    print("KERNEL_OK")
</pallas_src>

<mosaic_0001>
module attributes {stable_mosaic.version = 11 : i64} {
  func.func @_tfc_kernel(%arg0: memref<136x4xbf16, #tpu.memory_space<vmem>>, %arg1: memref<32x32xbf16, #tpu.memory_space<vmem>>, %arg2: memref<8x32x64xbf16, #tpu.memory_space<vmem>>, %arg3: memref<8x64x128xbf16, #tpu.memory_space<vmem>>, %arg4: memref<16x128xf32, #tpu.memory_space<vmem>>, %arg5: memref<144x32xf32, #tpu.memory_space<vmem>>, %arg6: memref<72x32xbf16, #tpu.memory_space<vmem>>, %arg7: memref<80x64xf32, #tpu.memory_space<vmem>>, %arg8: memref<40x64xbf16, #tpu.memory_space<vmem>>, %arg9: memref<48x128xf32, #tpu.memory_space<vmem>>) attributes {dimension_semantics = [], scalar_prefetch = 0 : i64, scratch_operands = 5 : i64, tpu.core_type = #tpu.core_type<tc>} {
    %c0 = arith.constant 0 : index
    %c0_0 = arith.constant 0 : index
    %0 = vector.load %arg0[%c0, %c0_0] : memref<136x4xbf16, #tpu.memory_space<vmem>>, vector<128x4xbf16>
    %c1 = arith.constant 1 : index
    %c0_1 = arith.constant 0 : index
    %1 = vector.load %arg0[%c1, %c0_1] : memref<136x4xbf16, #tpu.memory_space<vmem>>, vector<128x4xbf16>
    %c2 = arith.constant 2 : index
    %c0_2 = arith.constant 0 : index
    %2 = vector.load %arg0[%c2, %c0_2] : memref<136x4xbf16, #tpu.memory_space<vmem>>, vector<128x4xbf16>
    %c3 = arith.constant 3 : index
    %c0_3 = arith.constant 0 : index
    %3 = vector.load %arg0[%c3, %c0_3] : memref<136x4xbf16, #tpu.memory_space<vmem>>, vector<128x4xbf16>
    %c4 = arith.constant 4 : index
    %c0_4 = arith.constant 0 : index
    %4 = vector.load %arg0[%c4, %c0_4] : memref<136x4xbf16, #tpu.memory_space<vmem>>, vector<128x4xbf16>
    %c5 = arith.constant 5 : index
    %c0_5 = arith.constant 0 : index
    %5 = vector.load %arg0[%c5, %c0_5] : memref<136x4xbf16, #tpu.memory_space<vmem>>, vector<128x4xbf16>
    %c6 = arith.constant 6 : index
    %c0_6 = arith.constant 0 : index
    %6 = vector.load %arg0[%c6, %c0_6] : memref<136x4xbf16, #tpu.memory_space<vmem>>, vector<128x4xbf16>
    %c7 = arith.constant 7 : index
    %c0_7 = arith.constant 0 : index
    %7 = vector.load %arg0[%c7, %c0_7] : memref<136x4xbf16, #tpu.memory_space<vmem>>, vector<128x4xbf16>
    %8 = tpu.concatenate %0, %1, %2, %3, %4, %5, %6, %7 in 1 : vector<128x4xbf16>, vector<128x4xbf16>, vector<128x4xbf16>, vector<128x4xbf16>, vector<128x4xbf16>, vector<128x4xbf16>, vector<128x4xbf16>, vector<128x4xbf16> -> vector<128x32xbf16>
    %c0_8 = arith.constant 0 : index
    %c0_9 = arith.constant 0 : index
    %9 = vector.load %arg1[%c0_8, %c0_9] : memref<32x32xbf16, #tpu.memory_space<vmem>>, vector<32x32xbf16>
    %cst = arith.constant dense<0.000000e+00> : vector<128x32xf32>
    %10 = tpu.matmul %8, %9, %cst {dimension_numbers = #tpu.dot_dimension_numbers<[1], [0], [0], [1], [0, 0, 1, 1], [], []>} : vector<128x32xbf16>, vector<32x32xbf16>, vector<128x32xf32> -> vector<128x32xf32>
    %11 = tpu.iota {dimensions = array<i32: 0>} : vector<128x1xi32>
    %c64_i32 = arith.constant 64 : i32
    %c0_i32 = arith.constant 0 : i32
    %12 = arith.cmpi eq, %c64_i32, %c0_i32 : i32
    %c1_i32 = arith.constant 1 : i32
    %13 = arith.select %12, %c1_i32, %c64_i32 : i32
    %14 = vector.broadcast %13 : i32 to vector<128x1xi32>
    %15 = arith.remsi %11, %14 : vector<128x1xi32>
    %c0_i32_10 = arith.constant 0 : i32
    %16 = vector.broadcast %c0_i32_10 : i32 to vector<128x1xi32>
    %17 = arith.cmpi ne, %15, %16 : vector<128x1xi32>
    %c0_i32_11 = arith.constant 0 : i32
    %18 = vector.broadcast %c0_i32_11 : i32 to vector<128x1xi32>
    %19 = arith.cmpi slt, %15, %18 : vector<128x1xi32>
    %c0_i32_12 = arith.constant 0 : i32
    %20 = arith.cmpi slt, %13, %c0_i32_12 : i32
    %21 = vector.broadcast %20 : i1 to vector<128x1xi1>
    %22 = vector.broadcast %21 : vector<128x1xi1> to vector<128x1xi1>
    %23 = arith.xori %19, %22 : vector<128x1xi1>
    %24 = arith.andi %23, %17 : vector<128x1xi1>
    %25 = vector.broadcast %13 : i32 to vector<128x1xi32>
    %26 = arith.addi %15, %25 : vector<128x1xi32>
    %27 = arith.select %24, %26, %15 : vector<128x1xi1>, vector<128x1xi32>
    %c17_i32 = arith.constant 17 : i32
    %28 = vector.broadcast %c17_i32 : i32 to vector<128x1xi32>
    %29 = arith.cmpi slt, %27, %28 : vector<128x1xi32>
    %cst_13 = arith.constant 0.000000e+00 : f32
    %30 = vector.shape_cast %29 : vector<128x1xi1> to vector<128x1xi1>
    %31 = vector.broadcast %30 : vector<128x1xi1> to vector<128x32xi1>
    %32 = vector.broadcast %cst_13 : f32 to vector<128x32xf32>
    %33 = arith.select %31, %10, %32 : vector<128x32xi1>, vector<128x32xf32>
    %cst_14 = arith.constant dense<0.000000e+00> : vector<32xf32>
    %34 = vector.multi_reduction <add>, %33, %cst_14 [0] : vector<128x32xf32> to vector<32xf32>
    %35 = vector.shape_cast %34 : vector<32xf32> to vector<1x32xf32>
    %cst_15 = arith.constant 0.0294117648 : f32
    %36 = vector.broadcast %cst_15 : f32 to vector<1x32xf32>
    %37 = arith.mulf %35, %36 : vector<1x32xf32>
    %38 = vector.broadcast %37 : vector<1x32xf32> to vector<128x32xf32>
    %39 = arith.subf %10, %38 : vector<128x32xf32>
    %cst_16 = arith.constant 0.000000e+00 : f32
    %40 = vector.shape_cast %29 : vector<128x1xi1> to vector<128x1xi1>
    %41 = vector.broadcast %40 : vector<128x1xi1> to vector<128x32xi1>
    %42 = vector.broadcast %cst_16 : f32 to vector<128x32xf32>
    %43 = arith.select %41, %39, %42 : vector<128x32xi1>, vector<128x32xf32>
    %44 = arith.mulf %43, %43 : vector<128x32xf32>
    %cst_17 = arith.constant dense<0.000000e+00> : vector<32xf32>
    %45 = vector.multi_reduction <add>, %44, %cst_17 [0] : vector<128x32xf32> to vector<32xf32>
    %46 = vector.shape_cast %45 : vector<32xf32> to vector<1x32xf32>
    %cst_18 = arith.constant 0.0294117648 : f32
    %47 = vector.broadcast %cst_18 : f32 to vector<1x32xf32>
    %48 = arith.mulf %46, %47 : vector<1x32xf32>
    %cst_19 = arith.constant 9.99999974E-6 : f32
    %49 = vector.broadcast %cst_19 : f32 to vector<1x32xf32>
    %50 = arith.addf %48, %49 : vector<1x32xf32>
    %51 = math.rsqrt %50 : vector<1x32xf32>
    %52 = vector.broadcast %51 : vector<1x32xf32> to vector<128x32xf32>
    %53 = arith.mulf %39, %52 : vector<128x32xf32>
    %cst_20 = arith.constant 0.000000e+00 : f32
    %54 = vector.broadcast %cst_20 : f32 to vector<128x32xf32>
    %55 = arith.maximumf %53, %54 : vector<128x32xf32>
    %cst_21 = arith.constant 0.000000e+00 : f32
    %56 = vector.shape_cast %29 : vector<128x1xi1> to vector<128x1xi1>
    %57 = vector.broadcast %56 : vector<128x1xi1> to vector<128x32xi1>
    %58 = vector.broadcast %cst_21 : f32 to vector<128x32xf32>
    %59 = arith.select %57, %55, %58 : vector<128x32xi1>, vector<128x32xf32>
    %cst_22 = arith.constant 0.000000e+00 : f32
    %60 = vector.broadcast %cst_22 : f32 to vector<16x32xf32>
    %c0_23 = arith.constant 0 : index
    %c0_24 = arith.constant 0 : index
    %61 = vector.load %arg5[%c0_23, %c0_24] : memref<144x32xf32, #tpu.memory_space<vmem>>, vector<16x32xf32>
    tpu.vector_store %arg5[%c0_23, %c0_24], %60 {strides = array<i32>} : memref<144x32xf32, #tpu.memory_space<vmem>>, vector<16x32xf32>,
    %c9 = arith.constant 9 : index
    %c0_25 = arith.constant 0 : index
    %62 = vector.load %arg5[%c9, %c0_25] : memref<144x32xf32, #tpu.memory_space<vmem>>, vector<128x32xf32>
    tpu.vector_store %arg5[%c9, %c0_25], %59 {strides = array<i32>} : memref<144x32xf32, #tpu.memory_space<vmem>>, vector<128x32xf32>,
    %c0_26 = arith.constant 0 : index
    %c0_27 = arith.constant 0 : index
    %63 = tpu.strided_load %arg5[%c0_26, %c0_27] {strides = array<i32: 2, 1>} : memref<144x32xf32, #tpu.memory_space<vmem>>, vector<64x32xf32>
    %c1_28 = arith.constant 1 : index
    %c0_29 = arith.constant 0 : index
    %64 = tpu.strided_load %arg5[%c1_28, %c0_29] {strides = array<i32: 2, 1>} : memref<144x32xf32, #tpu.memory_space<vmem>>, vector<64x32xf32>
    %65 = arith.maximumf %63, %64 : vector<64x32xf32>
    %66 = arith.truncf %65 : vector<64x32xf32> to vector<64x32xbf16>
    %c0_30 = arith.constant 0 : index
    %c0_31 = arith.constant 0 : index
    %67 = vector.load %arg6[%c0_30, %c0_31] : memref<72x32xbf16, #tpu.memory_space<vmem>>, vector<64x32xbf16>
    tpu.vector_store %arg6[%c0_30, %c0_31], %66 {strides = array<i32>} : memref<72x32xbf16, #tpu.memory_space<vmem>>, vector<64x32xbf16>,
    %cst_32 = arith.constant 0.000000e+00 : bf16
    %68 = vector.broadcast %cst_32 : bf16 to vector<8x32xbf16>
    %c64 = arith.constant 64 : index
    %c0_33 = arith.constant 0 : index
    %69 = vector.load %arg6[%c64, %c0_33] : memref<72x32xbf16, #tpu.memory_space<vmem>>, vector<8x32xbf16>
    tpu.vector_store %arg6[%c64, %c0_33], %68 {strides = array<i32>} : memref<72x32xbf16, #tpu.memory_space<vmem>>, vector<8x32xbf16>,
    %c0_34 = arith.constant 0 : index
    %c0_35 = arith.constant 0 : index
    %70 = vector.load %arg6[%c0_34, %c0_35] : memref<72x32xbf16, #tpu.memory_space<vmem>>, vector<64x32xbf16>
    %c0_36 = arith.constant 0 : index
    %c0_37 = arith.constant 0 : index
    %c0_38 = arith.constant 0 : index
    %71 = vector.load %arg2[%c0_36, %c0_37, %c0_38] : memref<8x32x64xbf16, #tpu.memory_space<vmem>>, vector<1x32x64xbf16>
    %72 = vector.shape_cast %71 : vector<1x32x64xbf16> to vector<32x64xbf16>
    %cst_39 = arith.constant dense<0.000000e+00> : vector<64x64xf32>
    %73 = tpu.matmul %70, %72, %cst_39 {dimension_numbers = #tpu.dot_dimension_numbers<[1], [0], [0], [1], [0, 0, 1, 1], [], []>} : vector<64x32xbf16>, vector<32x64xbf16>, vector<64x64xf32> -> vector<64x64xf32>
    %c1_40 = arith.constant 1 : index
    %c0_41 = arith.constant 0 : index
    %74 = vector.load %arg6[%c1_40, %c0_41] : memref<72x32xbf16, #tpu.memory_space<vmem>>, vector<64x32xbf16>
    %c1_42 = arith.constant 1 : index
    %c0_43 = arith.constant 0 : index
    %c0_44 = arith.constant 0 : index
    %75 = vector.load %arg2[%c1_42, %c0_43, %c0_44] : memref<8x32x64xbf16, #tpu.memory_space<vmem>>, vector<1x32x64xbf16>
    %76 = vector.shape_cast %75 : vector<1x32x64xbf16> to vector<32x64xbf16>
    %cst_45 = arith.constant dense<0.000000e+00> : vector<64x64xf32>
    %77 = tpu.matmul %74, %76, %cst_45 {dimension_numbers = #tpu.dot_dimension_numbers<[1], [0], [0], [1], [0, 0, 1, 1], [], []>} : vector<64x32xbf16>, vector<32x64xbf16>, vector<64x64xf32> -> vector<64x64xf32>
    %78 = arith.addf %73, %77 : vector<64x64xf32>
    %c2_46 = arith.constant 2 : index
    %c0_47 = arith.constant 0 : index
    %79 = vector.load %arg6[%c2_46, %c0_47] : memref<72x32xbf16, #tpu.memory_space<vmem>>, vector<64x32xbf16>
    %c2_48 = arith.constant 2 : index
    %c0_49 = arith.constant 0 : index
    %c0_50 = arith.constant 0 : index
    %80 = vector.load %arg2[%c2_48, %c0_49, %c0_50] : memref<8x32x64xbf16, #tpu.memory_space<vmem>>, vector<1x32x64xbf16>
    %81 = vector.shape_cast %80 : vector<1x32x64xbf16> to vector<32x64xbf16>
    %cst_51 = arith.constant dense<0.000000e+00> : vector<64x64xf32>
    %82 = tpu.matmul %79, %81, %cst_51 {dimension_numbers = #tpu.dot_dimension_numbers<[1], [0], [0], [1], [0, 0, 1, 1], [], []>} : vector<64x32xbf16>, vector<32x64xbf16>, vector<64x64xf32> -> vector<64x64xf32>
    %83 = arith.addf %78, %82 : vector<64x64xf32>
    %c3_52 = arith.constant 3 : index
    %c0_53 = arith.constant 0 : index
    %84 = vector.load %arg6[%c3_52, %c0_53] : memref<72x32xbf16, #tpu.memory_space<vmem>>, vector<64x32xbf16>
    %c3_54 = arith.constant 3 : index
    %c0_55 = arith.constant 0 : index
    %c0_56 = arith.constant 0 : index
    %85 = vector.load %arg2[%c3_54, %c0_55, %c0_56] : memref<8x32x64xbf16, #tpu.memory_space<vmem>>, vector<1x32x64xbf16>
    %86 = vector.shape_cast %85 : vector<1x32x64xbf16> to vector<32x64xbf16>
    %cst_57 = arith.constant dense<0.000000e+00> : vector<64x64xf32>
    %87 = tpu.matmul %84, %86, %cst_57 {dimension_numbers = #tpu.dot_dimension_numbers<[1], [0], [0], [1], [0, 0, 1, 1], [], []>} : vector<64x32xbf16>, vector<32x64xbf16>, vector<64x64xf32> -> vector<64x64xf32>
    %88 = arith.addf %83, %87 : vector<64x64xf32>
    %c4_58 = arith.constant 4 : index
    %c0_59 = arith.constant 0 : index
    %89 = vector.load %arg6[%c4_58, %c0_59] : memref<72x32xbf16, #tpu.memory_space<vmem>>, vector<64x32xbf16>
    %c4_60 = arith.constant 4 : index
    %c0_61 = arith.constant 0 : index
    %c0_62 = arith.constant 0 : index
    %90 = vector.load %arg2[%c4_60, %c0_61, %c0_62] : memref<8x32x64xbf16, #tpu.memory_space<vmem>>, vector<1x32x64xbf16>
    %91 = vector.shape_cast %90 : vector<1x32x64xbf16> to vector<32x64xbf16>
    %cst_63 = arith.constant dense<0.000000e+00> : vector<64x64xf32>
    %92 = tpu.matmul %89, %91, %cst_63 {dimension_numbers = #tpu.dot_dimension_numbers<[1], [0], [0], [1], [0, 0, 1, 1], [], []>} : vector<64x32xbf16>, vector<32x64xbf16>, vector<64x64xf32> -> vector<64x64xf32>
    %93 = arith.addf %88, %92 : vector<64x64xf32>
    %c5_64 = arith.constant 5 : index
    %c0_65 = arith.constant 0 : index
    %94 = vector.load %arg6[%c5_64, %c0_65] : memref<72x32xbf16, #tpu.memory_space<vmem>>, vector<64x32xbf16>
    %c5_66 = arith.constant 5 : index
    %c0_67 = arith.constant 0 : index
    %c0_68 = arith.constant 0 : index
    %95 = vector.load %arg2[%c5_66, %c0_67, %c0_68] : memref<8x32x64xbf16, #tpu.memory_space<vmem>>, vector<1x32x64xbf16>
    %96 = vector.shape_cast %95 : vector<1x32x64xbf16> to vector<32x64xbf16>
    %cst_69 = arith.constant dense<0.000000e+00> : vector<64x64xf32>
    %97 = tpu.matmul %94, %96, %cst_69 {dimension_numbers = #tpu.dot_dimension_numbers<[1], [0], [0], [1], [0, 0, 1, 1], [], []>} : vector<64x32xbf16>, vector<32x64xbf16>, vector<64x64xf32> -> vector<64x64xf32>
    %98 = arith.addf %93, %97 : vector<64x64xf32>
    %c6_70 = arith.constant 6 : index
    %c0_71 = arith.constant 0 : index
    %99 = vector.load %arg6[%c6_70, %c0_71] : memref<72x32xbf16, #tpu.memory_space<vmem>>, vector<64x32xbf16>
    %c6_72 = arith.constant 6 : index
    %c0_73 = arith.constant 0 : index
    %c0_74 = arith.constant 0 : index
    %100 = vector.load %arg2[%c6_72, %c0_73, %c0_74] : memref<8x32x64xbf16, #tpu.memory_space<vmem>>, vector<1x32x64xbf16>
    %101 = vector.shape_cast %100 : vector<1x32x64xbf16> to vector<32x64xbf16>
    %cst_75 = arith.constant dense<0.000000e+00> : vector<64x64xf32>
    %102 = tpu.matmul %99, %101, %cst_75 {dimension_numbers = #tpu.dot_dimension_numbers<[1], [0], [0], [1], [0, 0, 1, 1], [], []>} : vector<64x32xbf16>, vector<32x64xbf16>, vector<64x64xf32> -> vector<64x64xf32>
    %103 = arith.addf %98, %102 : vector<64x64xf32>
    %c7_76 = arith.constant 7 : index
    %c0_77 = arith.constant 0 : index
    %104 = vector.load %arg6[%c7_76, %c0_77] : memref<72x32xbf16, #tpu.memory_space<vmem>>, vector<64x32xbf16>
    %c7_78 = arith.constant 7 : index
    %c0_79 = arith.constant 0 : index
    %c0_80 = arith.constant 0 : index
    %105 = vector.load %arg2[%c7_78, %c0_79, %c0_80] : memref<8x32x64xbf16, #tpu.memory_space<vmem>>, vector<1x32x64xbf16>
    %106 = vector.shape_cast %105 : vector<1x32x64xbf16> to vector<32x64xbf16>
    %cst_81 = arith.constant dense<0.000000e+00> : vector<64x64xf32>
    %107 = tpu.matmul %104, %106, %cst_81 {dimension_numbers = #tpu.dot_dimension_numbers<[1], [0], [0], [1], [0, 0, 1, 1], [], []>} : vector<64x32xbf16>, vector<32x64xbf16>, vector<64x64xf32> -> vector<64x64xf32>
    %108 = arith.addf %103, %107 : vector<64x64xf32>
    %109 = tpu.iota {dimensions = array<i32: 0>} : vector<64x1xi32>
    %c32_i32 = arith.constant 32 : i32
    %c0_i32_82 = arith.constant 0 : i32
    %110 = arith.cmpi eq, %c32_i32, %c0_i32_82 : i32
    %c1_i32_83 = arith.constant 1 : i32
    %111 = arith.select %110, %c1_i32_83, %c32_i32 : i32
    %112 = vector.broadcast %111 : i32 to vector<64x1xi32>
    %113 = arith.remsi %109, %112 : vector<64x1xi32>
    %c0_i32_84 = arith.constant 0 : i32
    %114 = vector.broadcast %c0_i32_84 : i32 to vector<64x1xi32>
    %115 = arith.cmpi ne, %113, %114 : vector<64x1xi32>
    %c0_i32_85 = arith.constant 0 : i32
    %116 = vector.broadcast %c0_i32_85 : i32 to vector<64x1xi32>
    %117 = arith.cmpi slt, %113, %116 : vector<64x1xi32>
    %c0_i32_86 = arith.constant 0 : i32
    %118 = arith.cmpi slt, %111, %c0_i32_86 : i32
    %119 = vector.broadcast %118 : i1 to vector<64x1xi1>
    %120 = vector.broadcast %119 : vector<64x1xi1> to vector<64x1xi1>
    %121 = arith.xori %117, %120 : vector<64x1xi1>
    %122 = arith.andi %121, %115 : vector<64x1xi1>
    %123 = vector.broadcast %111 : i32 to vector<64x1xi32>
    %124 = arith.addi %113, %123 : vector<64x1xi32>
    %125 = arith.select %122, %124, %113 : vector<64x1xi1>, vector<64x1xi32>
    %c10_i32 = arith.constant 10 : i32
    %126 = vector.broadcast %c10_i32 : i32 to vector<64x1xi32>
    %127 = arith.cmpi slt, %125, %126 : vector<64x1xi32>
    %cst_87 = arith.constant 0.000000e+00 : f32
    %128 = vector.shape_cast %127 : vector<64x1xi1> to vector<64x1xi1>
    %129 = vector.broadcast %128 : vector<64x1xi1> to vector<64x64xi1>
    %130 = vector.broadcast %cst_87 : f32 to vector<64x64xf32>
    %131 = arith.select %129, %108, %130 : vector<64x64xi1>, vector<64x64xf32>
    %cst_88 = arith.constant dense<0.000000e+00> : vector<64xf32>
    %132 = vector.multi_reduction <add>, %131, %cst_88 [0] : vector<64x64xf32> to vector<64xf32>
    %133 = vector.shape_cast %132 : vector<64xf32> to vector<1x64xf32>
    %cst_89 = arith.constant 5.000000e-02 : f32
    %134 = vector.broadcast %cst_89 : f32 to vector<1x64xf32>
    %135 = arith.mulf %133, %134 : vector<1x64xf32>
    %136 = vector.broadcast %135 : vector<1x64xf32> to vector<64x64xf32>
    %137 = arith.subf %108, %136 : vector<64x64xf32>
    %cst_90 = arith.constant 0.000000e+00 : f32
    %138 = vector.shape_cast %127 : vector<64x1xi1> to vector<64x1xi1>
    %139 = vector.broadcast %138 : vector<64x1xi1> to vector<64x64xi1>
    %140 = vector.broadcast %cst_90 : f32 to vector<64x64xf32>
    %141 = arith.select %139, %137, %140 : vector<64x64xi1>, vector<64x64xf32>
    %142 = arith.mulf %141, %141 : vector<64x64xf32>
    %cst_91 = arith.constant dense<0.000000e+00> : vector<64xf32>
    %143 = vector.multi_reduction <add>, %142, %cst_91 [0] : vector<64x64xf32> to vector<64xf32>
    %144 = vector.shape_cast %143 : vector<64xf32> to vector<1x64xf32>
    %cst_92 = arith.constant 5.000000e-02 : f32
    %145 = vector.broadcast %cst_92 : f32 to vector<1x64xf32>
    %146 = arith.mulf %144, %145 : vector<1x64xf32>
    %cst_93 = arith.constant 9.99999974E-6 : f32
    %147 = vector.broadcast %cst_93 : f32 to vector<1x64xf32>
    %148 = arith.addf %146, %147 : vector<1x64xf32>
    %149 = math.rsqrt %148 : vector<1x64xf32>
    %150 = vector.broadcast %149 : vector<1x64xf32> to vector<64x64xf32>
    %151 = arith.mulf %137, %150 : vector<64x64xf32>
    %cst_94 = arith.constant 0.000000e+00 : f32
    %152 = vector.broadcast %cst_94 : f32 to vector<64x64xf32>
    %153 = arith.maximumf %151, %152 : vector<64x64xf32>
    %cst_95 = arith.constant 0.000000e+00 : f32
    %154 = vector.shape_cast %127 : vector<64x1xi1> to vector<64x1xi1>
    %155 = vector.broadcast %154 : vector<64x1xi1> to vector<64x64xi1>
    %156 = vector.broadcast %cst_95 : f32 to vector<64x64xf32>
    %157 = arith.select %155, %153, %156 : vector<64x64xi1>, vector<64x64xf32>
    %cst_96 = arith.constant 0.000000e+00 : f32
    %158 = vector.broadcast %cst_96 : f32 to vector<16x64xf32>
    %c0_97 = arith.constant 0 : index
    %c0_98 = arith.constant 0 : index
    %159 = vector.load %arg7[%c0_97, %c0_98] : memref<80x64xf32, #tpu.memory_space<vmem>>, vector<16x64xf32>
    tpu.vector_store %arg7[%c0_97, %c0_98], %158 {strides = array<i32>} : memref<80x64xf32, #tpu.memory_space<vmem>>, vector<16x64xf32>,
    %c9_99 = arith.constant 9 : index
    %c0_100 = arith.constant 0 : index
    %160 = vector.load %arg7[%c9_99, %c0_100] : memref<80x64xf32, #tpu.memory_space<vmem>>, vector<64x64xf32>
    tpu.vector_store %arg7[%c9_99, %c0_100], %157 {strides = array<i32>} : memref<80x64xf32, #tpu.memory_space<vmem>>, vector<64x64xf32>,
    %c0_101 = arith.constant 0 : index
    %c0_102 = arith.constant 0 : index
    %161 = tpu.strided_load %arg7[%c0_101, %c0_102] {strides = array<i32: 2, 1>} : memref<80x64xf32, #tpu.memory_space<vmem>>, vector<32x64xf32>
    %c1_103 = arith.constant 1 : index
    %c0_104 = arith.constant 0 : index
    %162 = tpu.strided_load %arg7[%c1_103, %c0_104] {strides = array<i32: 2, 1>} : memref<80x64xf32, #tpu.memory_space<vmem>>, vector<32x64xf32>
    %163 = arith.maximumf %161, %162 : vector<32x64xf32>
    %164 = arith.truncf %163 : vector<32x64xf32> to vector<32x64xbf16>
    %c0_105 = arith.constant 0 : index
    %c0_106 = arith.constant 0 : index
    %165 = vector.load %arg8[%c0_105, %c0_106] : memref<40x64xbf16, #tpu.memory_space<vmem>>, vector<32x64xbf16>
    tpu.vector_store %arg8[%c0_105, %c0_106], %164 {strides = array<i32>} : memref<40x64xbf16, #tpu.memory_space<vmem>>, vector<32x64xbf16>,
    %cst_107 = arith.constant 0.000000e+00 : bf16
    %166 = vector.broadcast %cst_107 : bf16 to vector<8x64xbf16>
    %c32 = arith.constant 32 : index
    %c0_108 = arith.constant 0 : index
    %167 = vector.load %arg8[%c32, %c0_108] : memref<40x64xbf16, #tpu.memory_space<vmem>>, vector<8x64xbf16>
    tpu.vector_store %arg8[%c32, %c0_108], %166 {strides = array<i32>} : memref<40x64xbf16, #tpu.memory_space<vmem>>, vector<8x64xbf16>,
    %c0_109 = arith.constant 0 : index
    %c0_110 = arith.constant 0 : index
    %168 = vector.load %arg8[%c0_109, %c0_110] : memref<40x64xbf16, #tpu.memory_space<vmem>>, vector<32x64xbf16>
    %c0_111 = arith.constant 0 : index
    %c0_112 = arith.constant 0 : index
    %c0_113 = arith.constant 0 : index
    %169 = vector.load %arg3[%c0_111, %c0_112, %c0_113] : memref<8x64x128xbf16, #tpu.memory_space<vmem>>, vector<1x64x128xbf16>
    %170 = vector.shape_cast %169 : vector<1x64x128xbf16> to vector<64x128xbf16>
    %cst_114 = arith.constant dense<0.000000e+00> : vector<32x128xf32>
    %171 = tpu.matmul %168, %170, %cst_114 {dimension_numbers = #tpu.dot_dimension_numbers<[1], [0], [0], [1], [0, 0, 1, 1], [], []>} : vector<32x64xbf16>, vector<64x128xbf16>, vector<32x128xf32> -> vector<32x128xf32>
    %c1_115 = arith.constant 1 : index
    %c0_116 = arith.constant 0 : index
    %172 = vector.load %arg8[%c1_115, %c0_116] : memref<40x64xbf16, #tpu.memory_space<vmem>>, vector<32x64xbf16>
    %c1_117 = arith.constant 1 : index
    %c0_118 = arith.constant 0 : index
    %c0_119 = arith.constant 0 : index
    %173 = vector.load %arg3[%c1_117, %c0_118, %c0_119] : memref<8x64x128xbf16, #tpu.memory_space<vmem>>, vector<1x64x128xbf16>
    %174 = vector.shape_cast %173 : vector<1x64x128xbf16> to vector<64x128xbf16>
    %cst_120 = arith.constant dense<0.000000e+00> : vector<32x128xf32>
    %175 = tpu.matmul %172, %174, %cst_120 {dimension_numbers = #tpu.dot_dimension_numbers<[1], [0], [0], [1], [0, 0, 1, 1], [], []>} : vector<32x64xbf16>, vector<64x128xbf16>, vector<32x128xf32> -> vector<32x128xf32>
    %176 = arith.addf %171, %175 : vector<32x128xf32>
    %c2_121 = arith.constant 2 : index
    %c0_122 = arith.constant 0 : index
    %177 = vector.load %arg8[%c2_121, %c0_122] : memref<40x64xbf16, #tpu.memory_space<vmem>>, vector<32x64xbf16>
    %c2_123 = arith.constant 2 : index
    %c0_124 = arith.constant 0 : index
    %c0_125 = arith.constant 0 : index
    %178 = vector.load %arg3[%c2_123, %c0_124, %c0_125] : memref<8x64x128xbf16, #tpu.memory_space<vmem>>, vector<1x64x128xbf16>
    %179 = vector.shape_cast %178 : vector<1x64x128xbf16> to vector<64x128xbf16>
    %cst_126 = arith.constant dense<0.000000e+00> : vector<32x128xf32>
    %180 = tpu.matmul %177, %179, %cst_126 {dimension_numbers = #tpu.dot_dimension_numbers<[1], [0], [0], [1], [0, 0, 1, 1], [], []>} : vector<32x64xbf16>, vector<64x128xbf16>, vector<32x128xf32> -> vector<32x128xf32>
    %181 = arith.addf %176, %180 : vector<32x128xf32>
    %c3_127 = arith.constant 3 : index
    %c0_128 = arith.constant 0 : index
    %182 = vector.load %arg8[%c3_127, %c0_128] : memref<40x64xbf16, #tpu.memory_space<vmem>>, vector<32x64xbf16>
    %c3_129 = arith.constant 3 : index
    %c0_130 = arith.constant 0 : index
    %c0_131 = arith.constant 0 : index
    %183 = vector.load %arg3[%c3_129, %c0_130, %c0_131] : memref<8x64x128xbf16, #tpu.memory_space<vmem>>, vector<1x64x128xbf16>
    %184 = vector.shape_cast %183 : vector<1x64x128xbf16> to vector<64x128xbf16>
    %cst_132 = arith.constant dense<0.000000e+00> : vector<32x128xf32>
    %185 = tpu.matmul %182, %184, %cst_132 {dimension_numbers = #tpu.dot_dimension_numbers<[1], [0], [0], [1], [0, 0, 1, 1], [], []>} : vector<32x64xbf16>, vector<64x128xbf16>, vector<32x128xf32> -> vector<32x128xf32>
    %186 = arith.addf %181, %185 : vector<32x128xf32>
    %c4_133 = arith.constant 4 : index
    %c0_134 = arith.constant 0 : index
    %187 = vector.load %arg8[%c4_133, %c0_134] : memref<40x64xbf16, #tpu.memory_space<vmem>>, vector<32x64xbf16>
    %c4_135 = arith.constant 4 : index
    %c0_136 = arith.constant 0 : index
    %c0_137 = arith.constant 0 : index
    %188 = vector.load %arg3[%c4_135, %c0_136, %c0_137] : memref<8x64x128xbf16, #tpu.memory_space<vmem>>, vector<1x64x128xbf16>
    %189 = vector.shape_cast %188 : vector<1x64x128xbf16> to vector<64x128xbf16>
    %cst_138 = arith.constant dense<0.000000e+00> : vector<32x128xf32>
    %190 = tpu.matmul %187, %189, %cst_138 {dimension_numbers = #tpu.dot_dimension_numbers<[1], [0], [0], [1], [0, 0, 1, 1], [], []>} : vector<32x64xbf16>, vector<64x128xbf16>, vector<32x128xf32> -> vector<32x128xf32>
    %191 = arith.addf %186, %190 : vector<32x128xf32>
    %c5_139 = arith.constant 5 : index
    %c0_140 = arith.constant 0 : index
    %192 = vector.load %arg8[%c5_139, %c0_140] : memref<40x64xbf16, #tpu.memory_space<vmem>>, vector<32x64xbf16>
    %c5_141 = arith.constant 5 : index
    %c0_142 = arith.constant 0 : index
    %c0_143 = arith.constant 0 : index
    %193 = vector.load %arg3[%c5_141, %c0_142, %c0_143] : memref<8x64x128xbf16, #tpu.memory_space<vmem>>, vector<1x64x128xbf16>
    %194 = vector.shape_cast %193 : vector<1x64x128xbf16> to vector<64x128xbf16>
    %cst_144 = arith.constant dense<0.000000e+00> : vector<32x128xf32>
    %195 = tpu.matmul %192, %194, %cst_144 {dimension_numbers = #tpu.dot_dimension_numbers<[1], [0], [0], [1], [0, 0, 1, 1], [], []>} : vector<32x64xbf16>, vector<64x128xbf16>, vector<32x128xf32> -> vector<32x128xf32>
    %196 = arith.addf %191, %195 : vector<32x128xf32>
    %c6_145 = arith.constant 6 : index
    %c0_146 = arith.constant 0 : index
    %197 = vector.load %arg8[%c6_145, %c0_146] : memref<40x64xbf16, #tpu.memory_space<vmem>>, vector<32x64xbf16>
    %c6_147 = arith.constant 6 : index
    %c0_148 = arith.constant 0 : index
    %c0_149 = arith.constant 0 : index
    %198 = vector.load %arg3[%c6_147, %c0_148, %c0_149] : memref<8x64x128xbf16, #tpu.memory_space<vmem>>, vector<1x64x128xbf16>
    %199 = vector.shape_cast %198 : vector<1x64x128xbf16> to vector<64x128xbf16>
    %cst_150 = arith.constant dense<0.000000e+00> : vector<32x128xf32>
    %200 = tpu.matmul %197, %199, %cst_150 {dimension_numbers = #tpu.dot_dimension_numbers<[1], [0], [0], [1], [0, 0, 1, 1], [], []>} : vector<32x64xbf16>, vector<64x128xbf16>, vector<32x128xf32> -> vector<32x128xf32>
    %201 = arith.addf %196, %200 : vector<32x128xf32>
    %c7_151 = arith.constant 7 : index
    %c0_152 = arith.constant 0 : index
    %202 = vector.load %arg8[%c7_151, %c0_152] : memref<40x64xbf16, #tpu.memory_space<vmem>>, vector<32x64xbf16>
    %c7_153 = arith.constant 7 : index
    %c0_154 = arith.constant 0 : index
    %c0_155 = arith.constant 0 : index
    %203 = vector.load %arg3[%c7_153, %c0_154, %c0_155] : memref<8x64x128xbf16, #tpu.memory_space<vmem>>, vector<1x64x128xbf16>
    %204 = vector.shape_cast %203 : vector<1x64x128xbf16> to vector<64x128xbf16>
    %cst_156 = arith.constant dense<0.000000e+00> : vector<32x128xf32>
    %205 = tpu.matmul %202, %204, %cst_156 {dimension_numbers = #tpu.dot_dimension_numbers<[1], [0], [0], [1], [0, 0, 1, 1], [], []>} : vector<32x64xbf16>, vector<64x128xbf16>, vector<32x128xf32> -> vector<32x128xf32>
    %206 = arith.addf %201, %205 : vector<32x128xf32>
    %207 = tpu.iota {dimensions = array<i32: 0>} : vector<32x1xi32>
    %c16_i32 = arith.constant 16 : i32
    %c0_i32_157 = arith.constant 0 : i32
    %208 = arith.cmpi eq, %c16_i32, %c0_i32_157 : i32
    %c1_i32_158 = arith.constant 1 : i32
    %209 = arith.select %208, %c1_i32_158, %c16_i32 : i32
    %210 = vector.broadcast %209 : i32 to vector<32x1xi32>
    %211 = arith.remsi %207, %210 : vector<32x1xi32>
    %c0_i32_159 = arith.constant 0 : i32
    %212 = vector.broadcast %c0_i32_159 : i32 to vector<32x1xi32>
    %213 = arith.cmpi ne, %211, %212 : vector<32x1xi32>
    %c0_i32_160 = arith.constant 0 : i32
    %214 = vector.broadcast %c0_i32_160 : i32 to vector<32x1xi32>
    %215 = arith.cmpi slt, %211, %214 : vector<32x1xi32>
    %c0_i32_161 = arith.constant 0 : i32
    %216 = arith.cmpi slt, %209, %c0_i32_161 : i32
    %217 = vector.broadcast %216 : i1 to vector<32x1xi1>
    %218 = vector.broadcast %217 : vector<32x1xi1> to vector<32x1xi1>
    %219 = arith.xori %215, %218 : vector<32x1xi1>
    %220 = arith.andi %219, %213 : vector<32x1xi1>
    %221 = vector.broadcast %209 : i32 to vector<32x1xi32>
    %222 = arith.addi %211, %221 : vector<32x1xi32>
    %223 = arith.select %220, %222, %211 : vector<32x1xi1>, vector<32x1xi32>
    %c7_i32 = arith.constant 7 : i32
    %224 = vector.broadcast %c7_i32 : i32 to vector<32x1xi32>
    %225 = arith.cmpi slt, %223, %224 : vector<32x1xi32>
    %cst_162 = arith.constant 0.000000e+00 : f32
    %226 = vector.shape_cast %225 : vector<32x1xi1> to vector<32x1xi1>
    %227 = vector.broadcast %226 : vector<32x1xi1> to vector<32x128xi1>
    %228 = vector.broadcast %cst_162 : f32 to vector<32x128xf32>
    %229 = arith.select %227, %206, %228 : vector<32x128xi1>, vector<32x128xf32>
    %cst_163 = arith.constant dense<0.000000e+00> : vector<128xf32>
    %230 = vector.multi_reduction <add>, %229, %cst_163 [0] : vector<32x128xf32> to vector<128xf32>
    %231 = vector.shape_cast %230 : vector<128xf32> to vector<1x128xf32>
    %cst_164 = arith.constant 0.0714285746 : f32
    %232 = vector.broadcast %cst_164 : f32 to vector<1x128xf32>
    %233 = arith.mulf %231, %232 : vector<1x128xf32>
    %234 = vector.broadcast %233 : vector<1x128xf32> to vector<32x128xf32>
    %235 = arith.subf %206, %234 : vector<32x128xf32>
    %cst_165 = arith.constant 0.000000e+00 : f32
    %236 = vector.shape_cast %225 : vector<32x1xi1> to vector<32x1xi1>
    %237 = vector.broadcast %236 : vector<32x1xi1> to vector<32x128xi1>
    %238 = vector.broadcast %cst_165 : f32 to vector<32x128xf32>
    %239 = arith.select %237, %235, %238 : vector<32x128xi1>, vector<32x128xf32>
    %240 = arith.mulf %239, %239 : vector<32x128xf32>
    %cst_166 = arith.constant dense<0.000000e+00> : vector<128xf32>
    %241 = vector.multi_reduction <add>, %240, %cst_166 [0] : vector<32x128xf32> to vector<128xf32>
    %242 = vector.shape_cast %241 : vector<128xf32> to vector<1x128xf32>
    %cst_167 = arith.constant 0.0714285746 : f32
    %243 = vector.broadcast %cst_167 : f32 to vector<1x128xf32>
    %244 = arith.mulf %242, %243 : vector<1x128xf32>
    %cst_168 = arith.constant 9.99999974E-6 : f32
    %245 = vector.broadcast %cst_168 : f32 to vector<1x128xf32>
    %246 = arith.addf %244, %245 : vector<1x128xf32>
    %247 = math.rsqrt %246 : vector<1x128xf32>
    %248 = vector.broadcast %247 : vector<1x128xf32> to vector<32x128xf32>
    %249 = arith.mulf %235, %248 : vector<32x128xf32>
    %cst_169 = arith.constant 0.000000e+00 : f32
    %250 = vector.broadcast %cst_169 : f32 to vector<32x128xf32>
    %251 = arith.maximumf %249, %250 : vector<32x128xf32>
    %cst_170 = arith.constant 0.000000e+00 : f32
    %252 = vector.shape_cast %225 : vector<32x1xi1> to vector<32x1xi1>
    %253 = vector.broadcast %252 : vector<32x1xi1> to vector<32x128xi1>
    %254 = vector.broadcast %cst_170 : f32 to vector<32x128xf32>
    %255 = arith.select %253, %251, %254 : vector<32x128xi1>, vector<32x128xf32>
    %cst_171 = arith.constant 0.000000e+00 : f32
    %256 = vector.broadcast %cst_171 : f32 to vector<16x128xf32>
    %c0_172 = arith.constant 0 : index
    %c0_173 = arith.constant 0 : index
    %257 = vector.load %arg9[%c0_172, %c0_173] : memref<48x128xf32, #tpu.memory_space<vmem>>, vector<16x128xf32>
    tpu.vector_store %arg9[%c0_172, %c0_173], %256 {strides = array<i32>} : memref<48x128xf32, #tpu.memory_space<vmem>>, vector<16x128xf32>,
    %c9_174 = arith.constant 9 : index
    %c0_175 = arith.constant 0 : index
    %258 = vector.load %arg9[%c9_174, %c0_175] : memref<48x128xf32, #tpu.memory_space<vmem>>, vector<32x128xf32>
    tpu.vector_store %arg9[%c9_174, %c0_175], %255 {strides = array<i32>} : memref<48x128xf32, #tpu.memory_space<vmem>>, vector<32x128xf32>,
    %c0_176 = arith.constant 0 : index
    %c0_177 = arith.constant 0 : index
    %259 = tpu.strided_load %arg9[%c0_176, %c0_177] {strides = array<i32: 2, 1>} : memref<48x128xf32, #tpu.memory_space<vmem>>, vector<16x128xf32>
    %c1_178 = arith.constant 1 : index
    %c0_179 = arith.constant 0 : index
    %260 = tpu.strided_load %arg9[%c1_178, %c0_179] {strides = array<i32: 2, 1>} : memref<48x128xf32, #tpu.memory_space<vmem>>, vector<16x128xf32>
    %261 = arith.maximumf %259, %260 : vector<16x128xf32>
    %c0_180 = arith.constant 0 : index
    %c0_181 = arith.constant 0 : index
    %262 = vector.load %arg4[%c0_180, %c0_181] : memref<16x128xf32, #tpu.memory_space<vmem>>, vector<16x128xf32>
    tpu.vector_store %arg4[%c0_180, %c0_181], %261 {strides = array<i32>} : memref<16x128xf32, #tpu.memory_space<vmem>>, vector<16x128xf32>,
    return
  }
}

</mosaic_0001>

<llo_original>
// kernel: tfc_conv_block.1
$region0: #{tfc_conv_block.1}
  #allocation0 [shape = 'u32[]', space=smem, size = 0x4, offset = 0x4, fixed_abs, tag = 'smem constant byte address 0x4 - core index']
  #allocation1 [shape = 'u32[144,128]{1,0:T(1,128)}', space=vmem, size = 0x12000, scoped, tag = 'internal scratch']
  #allocation2 [shape = 'f32[144,32]{1,0:T(8,128)}', space=vmem, size = 0x12000, scoped, tag = 'scratch operand']
  #allocation3 [shape = 'bf16[72,32]{1,0:T(8,128)(2,1)}', space=vmem, size = 0x4800, scoped, tag = 'scratch operand']
  #allocation4 [shape = 'f32[80,64]{1,0:T(8,128)}', space=vmem, size = 0xa000, scoped, tag = 'scratch operand']
  #allocation5 [shape = 'bf16[40,64]{1,0:T(8,128)(2,1)}', space=vmem, size = 0x2800, scoped, tag = 'scratch operand']
  #allocation6 [shape = 'f32[48,128]{1,0:T(8,128)}', space=vmem, size = 0x6000, scoped, tag = 'scratch operand']
  %s0 = inlined_call_operand.vmem [shape: bf16[136,4], index: 0, kind: input, shape index: {}]
  %s1 = inlined_call_operand.vmem [shape: bf16[32,32], index: 1, kind: input, shape index: {}]
  %s2 = inlined_call_operand.vmem [shape: bf16[8,32,64], index: 2, kind: input, shape index: {}]
  %s3 = inlined_call_operand.vmem [shape: bf16[8,64,128], index: 3, kind: input, shape index: {}]
  %s4 = inlined_call_operand.vmem [shape: f32[16,128], index: 4, kind: output, shape index: {}]
  %s5 = sld [smem:[#allocation0]]
  $region26: #{tfc_conv_block.1} parent=0
    _
  %s7 = ssub.s32 1, %s5
  %s8 = scalar_select 0, %s7, %s5
  // Predicated region
  $region2: #{tfc_conv_block.1} parent=0 // pred_check
    _
  $region3: #{tfc_conv_block.1} parent=0 // pred_check_branch
    %10 = sbr.rel (0) target = $region5
  $region4: #{tfc_conv_block.1} parent=0 // pred_region
    _
  $region5: #{tfc_conv_block.1} parent=0 // pred_fallthru
    _
  // Predicated region
  $region6: #{tfc_conv_block.1} parent=0 // pred_check
    _
  $region7: #{tfc_conv_block.1} parent=0 // pred_check_branch
    %12 = sbr.rel (0) target = $region9
  $region8: #{tfc_conv_block.1} parent=0 // pred_region
    _
  $region9: #{tfc_conv_block.1} parent=0 // pred_fallthru
    _
  // Predicated region
  $region10: #{tfc_conv_block.1} parent=0 // pred_check
    _
  $region11: #{tfc_conv_block.1} parent=0 // pred_check_branch
    %14 = sbr.rel (0) target = $region13
  $region12: #{tfc_conv_block.1} parent=0 // pred_region
    _
  $region13: #{tfc_conv_block.1} parent=0 // pred_fallthru
    _
  // Predicated region
  $region14: #{tfc_conv_block.1} parent=0 // pred_check
    _
  $region15: #{tfc_conv_block.1} parent=0 // pred_check_branch
    %16 = sbr.rel (0) target = $region17
  $region16: #{tfc_conv_block.1} parent=0 // pred_region
    _
  $region17: #{tfc_conv_block.1} parent=0 // pred_fallthru
    _
  %v18 = vld [vmem:[%s0] sm:$0xf]
  %v19 = vld [vmem:[%s0 + $0x4] sm:$0xf]
  %v20 = vld [vmem:[%s0 + $0x8] sm:$0xf]
  %v21 = vld [vmem:[%s0 + $0xc] sm:$0xf]
  %v22 = vld [vmem:[%s0 + $0x10] sm:$0xf]
  %v23 = vld [vmem:[%s0 + $0x14] sm:$0xf]
  %v24 = vld [vmem:[%s0 + $0x18] sm:$0xf]
  %v25 = vld [vmem:[%s0 + $0x1c] sm:$0xf]
  %v26 = vld [vmem:[%s0 + $0x20] sm:$0xf]
  %v27 = vld [vmem:[%s0 + $0x24] sm:$0xf]
  %v28 = vld [vmem:[%s0 + $0x28] sm:$0xf]
  %v29 = vld [vmem:[%s0 + $0x2c] sm:$0xf]
  %v30 = vld [vmem:[%s0 + $0x30] sm:$0xf]
  %v31 = vld [vmem:[%s0 + $0x34] sm:$0xf]
  %v32 = vld [vmem:[%s0 + $0x38] sm:$0xf]
  %v33 = vld [vmem:[%s0 + $0x3c] sm:$0xf]
  %v34 = vld [vmem:[%s0 + $0x40] sm:$0x1]
  %v35 = vld [vmem:[%s0] sm:$0xe]
  %v36 = vld [vmem:[%s0 + $0x40] sm:$0x3]
  %v37 = vld [vmem:[%s0] sm:$0xc]
  %v38 = vld [vmem:[%s0 + $0x40] sm:$0x7]
  %v39 = vld [vmem:[%s0] sm:$0x8]
  %v40 = vld [vmem:[%s0 + $0x40] sm:$0xf]
  %v57 = vunpack.c.l.b16 %v18
  %v58 = vunpack.c.l.b16 %v19
  %v59 = vunpack.c.l.b16 %v20
  %v60 = vunpack.c.l.b16 %v21
  %v61 = vunpack.c.l.b16 %v22
  %v62 = vunpack.c.l.b16 %v23
  %v63 = vunpack.c.l.b16 %v24
  %v64 = vunpack.c.l.b16 %v25
  %v65 = vunpack.c.l.b16 %v26
  %v66 = vunpack.c.l.b16 %v27
  %v67 = vunpack.c.l.b16 %v28
  %v68 = vunpack.c.l.b16 %v29
  %v69 = vunpack.c.l.b16 %v30
  %v70 = vunpack.c.l.b16 %v31
  %v71 = vunpack.c.l.b16 %v32
  %v72 = vunpack.c.l.b16 %v33
  %v73 = vpack.c.b16 %v58, %v57
  %v74 = vpack.c.b16 %v60, %v59
  %v75 = vpack.c.b16 %v62, %v61
  %v76 = vpack.c.b16 %v64, %v63
  %v77 = vpack.c.b16 %v66, %v65
  %v78 = vpack.c.b16 %v68, %v67
  %v79 = vpack.c.b16 %v70, %v69
  %v80 = vpack.c.b16 %v72, %v71
  %v82 = vunpack.c.l.b16 %v34
  %v83 = vpack.c.b16 %v82, %v82
  %vm84 = vsmask.f32 7424
  %v86 = vshrl.u32 %v73, 16
  %v88 = vshll.u32 %v73, 16
  %v90 = vrot.slane %v88, 1
  %v91 = vor.u32 %v86, %v90
  %v93 = vshll.u32 %v74, 16
  %v95 = vrot.slane %v93, 1
  %v96 = vsel %vm84, %v91, %v95
  %v97 = vshrl.u32 %v74, 16
  %v99 = vor.u32 %v97, %v95
  %v101 = vshll.u32 %v75, 16
  %v103 = vrot.slane %v101, 1
  %v104 = vsel %vm84, %v99, %v103
  %v105 = vshrl.u32 %v75, 16
  %v107 = vor.u32 %v105, %v103
  %v109 = vshll.u32 %v76, 16
  %v111 = vrot.slane %v109, 1
  %v112 = vsel %vm84, %v107, %v111
  %v113 = vshrl.u32 %v76, 16
  %v115 = vor.u32 %v113, %v111
  %v117 = vshll.u32 %v77, 16
  %v119 = vrot.slane %v117, 1
  %v120 = vsel %vm84, %v115, %v119
  %v121 = vshrl.u32 %v77, 16
  %v123 = vor.u32 %v121, %v119
  %v125 = vshll.u32 %v78, 16
  %v127 = vrot.slane %v125, 1
  %v128 = vsel %vm84, %v123, %v127
  %v129 = vshrl.u32 %v78, 16
  %v131 = vor.u32 %v129, %v127
  %v133 = vshll.u32 %v79, 16
  %v135 = vrot.slane %v133, 1
  %v136 = vsel %vm84, %v131, %v135
  %v137 = vshrl.u32 %v79, 16
  %v139 = vor.u32 %v137, %v135
  %v141 = vshll.u32 %v80, 16
  %v143 = vrot.slane %v141, 1
  %v144 = vsel %vm84, %v139, %v143
  %v145 = vshrl.u32 %v80, 16
  %v147 = vor.u32 %v145, %v143
  %v149 = vshll.u32 %v83, 16
  %v151 = vrot.slane %v149, 1
  %v152 = vsel %vm84, %v147, %v151
  %153 = vrot.lane.b32.xlu0 %v96, 4
  %v154 = vpop.permute.xlu0 %153
  %155 = vrot.lane.b32.xlu0 %v104, 4
  %v156 = vpop.permute.xlu0 %155
  %157 = vrot.lane.b32.xlu0 %v112, 4
  %v158 = vpop.permute.xlu0 %157
  %159 = vrot.lane.b32.xlu0 %v120, 4
  %v160 = vpop.permute.xlu0 %159
  %161 = vrot.lane.b32.xlu0 %v128, 4
  %v162 = vpop.permute.xlu0 %161
  %163 = vrot.lane.b32.xlu0 %v136, 4
  %v164 = vpop.permute.xlu0 %163
  %165 = vrot.lane.b32.xlu0 %v144, 4
  %v166 = vpop.permute.xlu0 %165
  %167 = vrot.lane.b32.xlu0 %v152, 4
  %v168 = vpop.permute.xlu0 %167
  %v170 = vunpack.c.l.b16 %v35
  %v171 = vpack.c.b16 %v58, %v170
  %vm172 = vcmask 1046528
  %v173 = vrot.slane %v171, 1
  %v174 = vrot.slane %v74, 1
  %v175 = vsel %vm172, %v173, %v174
  %v176 = vrot.slane %v75, 1
  %v177 = vsel %vm172, %v174, %v176
  %v178 = vrot.slane %v76, 1
  %v179 = vsel %vm172, %v176, %v178
  %v180 = vrot.slane %v77, 1
  %v181 = vsel %vm172, %v178, %v180
  %v182 = vrot.slane %v78, 1
  %v183 = vsel %vm172, %v180, %v182
  %v184 = vrot.slane %v79, 1
  %v185 = vsel %vm172, %v182, %v184
  %v186 = vrot.slane %v80, 1
  %v187 = vsel %vm172, %v184, %v186
  %v188 = vrot.slane %v83, 1
  %v189 = vsel %vm172, %v186, %v188
  %190 = vrot.lane.b32.xlu0 %v175, 8
  %v191 = vpop.permute.xlu0 %190
  %192 = vrot.lane.b32.xlu0 %v177, 8
  %v193 = vpop.permute.xlu0 %192
  %194 = vrot.lane.b32.xlu0 %v179, 8
  %v195 = vpop.permute.xlu0 %194
  %196 = vrot.lane.b32.xlu0 %v181, 8
  %v197 = vpop.permute.xlu0 %196
  %198 = vrot.lane.b32.xlu0 %v183, 8
  %v199 = vpop.permute.xlu0 %198
  %200 = vrot.lane.b32.xlu0 %v185, 8
  %v201 = vpop.permute.xlu0 %200
  %202 = vrot.lane.b32.xlu0 %v187, 8
  %v203 = vpop.permute.xlu0 %202
  %204 = vrot.lane.b32.xlu0 %v189, 8
  %v205 = vpop.permute.xlu0 %204
  %v207 = vunpack.c.l.b16 %v36
  %v208 = vpack.c.b16 %v207, %v207
  %vm209 = vsmask.f32 6400
  %v211 = vshrl.u32 %v171, 16
  %v213 = vrot.slane %v211, 1
  %v214 = vshll.u32 %v171, 16
  %v216 = vrot.slane %v214, 2
  %v217 = vor.u32 %v213, %v216
  %v218 = vrot.slane %v97, 1
  %v219 = vrot.slane %v93, 2
  %v220 = vor.u32 %v218, %v219
  %v221 = vsel %vm209, %v217, %v220
  %v222 = vrot.slane %v105, 1
  %v223 = vrot.slane %v101, 2
  %v224 = vor.u32 %v222, %v223
  %v225 = vsel %vm209, %v220, %v224
  %v226 = vrot.slane %v113, 1
  %v227 = vrot.slane %v109, 2
  %v228 = vor.u32 %v226, %v227
  %v229 = vsel %vm209, %v224, %v228
  %v230 = vrot.slane %v121, 1
  %v231 = vrot.slane %v117, 2
  %v232 = vor.u32 %v230, %v231
  %v233 = vsel %vm209, %v228, %v232
  %v234 = vrot.slane %v129, 1
  %v235 = vrot.slane %v125, 2
  %v236 = vor.u32 %v234, %v235
  %v237 = vsel %vm209, %v232, %v236
  %v238 = vrot.slane %v137, 1
  %v239 = vrot.slane %v133, 2
  %v240 = vor.u32 %v238, %v239
  %v241 = vsel %vm209, %v236, %v240
  %v242 = vrot.slane %v145, 1
  %v243 = vrot.slane %v141, 2
  %v244 = vor.u32 %v242, %v243
  %v245 = vsel %vm209, %v240, %v244
  %v247 = vshrl.u32 %v208, 16
  %v249 = vrot.slane %v247, 1
  %v250 = vshll.u32 %v208, 16
  %v252 = vrot.slane %v250, 2
  %v253 = vor.u32 %v249, %v252
  %v254 = vsel %vm209, %v244, %v253
  %255 = vrot.lane.b32.xlu0 %v221, 12
  %v256 = vpop.permute.xlu0 %255
  %257 = vrot.lane.b32.xlu0 %v225, 12
  %v258 = vpop.permute.xlu0 %257
  %259 = vrot.lane.b32.xlu0 %v229, 12
  %v260 = vpop.permute.xlu0 %259
  %261 = vrot.lane.b32.xlu0 %v233, 12
  %v262 = vpop.permute.xlu0 %261
  %263 = vrot.lane.b32.xlu0 %v237, 12
  %v264 = vpop.permute.xlu0 %263
  %265 = vrot.lane.b32.xlu0 %v241, 12
  %v266 = vpop.permute.xlu0 %265
  %267 = vrot.lane.b32.xlu0 %v245, 12
  %v268 = vpop.permute.xlu0 %267
  %269 = vrot.lane.b32.xlu0 %v254, 12
  %v270 = vpop.permute.xlu0 %269
  %v272 = vunpack.c.l.b16 %v37
  %v273 = vpack.c.b16 %v58, %v272
  %vm274 = vcmask 1045504
  %v275 = vrot.slane %v273, 2
  %v276 = vrot.slane %v74, 2
  %v277 = vsel %vm274, %v275, %v276
  %v278 = vrot.slane %v75, 2
  %v279 = vsel %vm274, %v276, %v278
  %v280 = vrot.slane %v76, 2
  %v281 = vsel %vm274, %v278, %v280
  %v282 = vrot.slane %v77, 2
  %v283 = vsel %vm274, %v280, %v282
  %v284 = vrot.slane %v78, 2
  %v285 = vsel %vm274, %v282, %v284
  %v286 = vrot.slane %v79, 2
  %v287 = vsel %vm274, %v284, %v286
  %v288 = vrot.slane %v80, 2
  %v289 = vsel %vm274, %v286, %v288
  %v290 = vrot.slane %v208, 2
  %v291 = vsel %vm274, %v288, %v290
  %292 = vrot.lane.b32.xlu0 %v277, 16
  %v293 = vpop.permute.xlu0 %292
  %294 = vrot.lane.b32.xlu0 %v279, 16
  %v295 = vpop.permute.xlu0 %294
  %296 = vrot.lane.b32.xlu0 %v281, 16
  %v297 = vpop.permute.xlu0 %296
  %298 = vrot.lane.b32.xlu0 %v283, 16
  %v299 = vpop.permute.xlu0 %298
  %300 = vrot.lane.b32.xlu0 %v285, 16
  %v301 = vpop.permute.xlu0 %300
  %302 = vrot.lane.b32.xlu0 %v287, 16
  %v303 = vpop.permute.xlu0 %302
  %304 = vrot.lane.b32.xlu0 %v289, 16
  %v305 = vpop.permute.xlu0 %304
  %306 = vrot.lane.b32.xlu0 %v291, 16
  %v307 = vpop.permute.xlu0 %306
  %v309 = vunpack.c.l.b16 %v38
  %v310 = vpack.c.b16 %v309, %v309
  %vm311 = vsmask.f32 5376
  %v313 = vshrl.u32 %v273, 16
  %v315 = vrot.slane %v313, 2
  %v316 = vshll.u32 %v273, 16
  %v318 = vrot.slane %v316, 3
  %v319 = vor.u32 %v315, %v318
  %v320 = vrot.slane %v97, 2
  %v321 = vrot.slane %v93, 3
  %v322 = vor.u32 %v320, %v321
  %v323 = vsel %vm311, %v319, %v322
  %v324 = vrot.slane %v105, 2
  %v325 = vrot.slane %v101, 3
  %v326 = vor.u32 %v324, %v325
  %v327 = vsel %vm311, %v322, %v326
  %v328 = vrot.slane %v113, 2
  %v329 = vrot.slane %v109, 3
  %v330 = vor.u32 %v328, %v329
  %v331 = vsel %vm311, %v326, %v330
  %v332 = vrot.slane %v121, 2
  %v333 = vrot.slane %v117, 3
  %v334 = vor.u32 %v332, %v333
  %v335 = vsel %vm311, %v330, %v334
  %v336 = vrot.slane %v129, 2
  %v337 = vrot.slane %v125, 3
  %v338 = vor.u32 %v336, %v337
  %v339 = vsel %vm311, %v334, %v338
  %v340 = vrot.slane %v137, 2
  %v341 = vrot.slane %v133, 3
  %v342 = vor.u32 %v340, %v341
  %v343 = vsel %vm311, %v338, %v342
  %v344 = vrot.slane %v145, 2
  %v345 = vrot.slane %v141, 3
  %v346 = vor.u32 %v344, %v345
  %v347 = vsel %vm311, %v342, %v346
  %v349 = vshrl.u32 %v310, 16
  %v351 = vrot.slane %v349, 2
  %v352 = vshll.u32 %v310, 16
  %v354 = vrot.slane %v352, 3
  %v355 = vor.u32 %v351, %v354
  %v356 = vsel %vm311, %v346, %v355
  %357 = vrot.lane.b32.xlu0 %v323, 20
  %v358 = vpop.permute.xlu0 %357
  %359 = vrot.lane.b32.xlu0 %v327, 20
  %v360 = vpop.permute.xlu0 %359
  %361 = vrot.lane.b32.xlu0 %v331, 20
  %v362 = vpop.permute.xlu0 %361
  %363 = vrot.lane.b32.xlu0 %v335, 20
  %v364 = vpop.permute.xlu0 %363
  %365 = vrot.lane.b32.xlu0 %v339, 20
  %v366 = vpop.permute.xlu0 %365
  %367 = vrot.lane.b32.xlu0 %v343, 20
  %v368 = vpop.permute.xlu0 %367
  %369 = vrot.lane.b32.xlu0 %v347, 20
  %v370 = vpop.permute.xlu0 %369
  %371 = vrot.lane.b32.xlu0 %v356, 20
  %v372 = vpop.permute.xlu0 %371
  %v374 = vunpack.c.l.b16 %v39
  %v375 = vpack.c.b16 %v58, %v374
  %vm376 = vcmask 1044480
  %v377 = vrot.slane %v375, 3
  %v378 = vrot.slane %v74, 3
  %v379 = vsel %vm376, %v377, %v378
  %v380 = vrot.slane %v75, 3
  %v381 = vsel %vm376, %v378, %v380
  %v382 = vrot.slane %v76, 3
  %v383 = vsel %vm376, %v380, %v382
  %v384 = vrot.slane %v77, 3
  %v385 = vsel %vm376, %v382, %v384
  %v386 = vrot.slane %v78, 3
  %v387 = vsel %vm376, %v384, %v386
  %v388 = vrot.slane %v79, 3
  %v389 = vsel %vm376, %v386, %v388
  %v390 = vrot.slane %v80, 3
  %v391 = vsel %vm376, %v388, %v390
  %v392 = vrot.slane %v310, 3
  %v393 = vsel %vm376, %v390, %v392
  %394 = vrot.lane.b32.xlu0 %v379, 24
  %v395 = vpop.permute.xlu0 %394
  %396 = vrot.lane.b32.xlu0 %v381, 24
  %v397 = vpop.permute.xlu0 %396
  %398 = vrot.lane.b32.xlu0 %v383, 24
  %v399 = vpop.permute.xlu0 %398
  %400 = vrot.lane.b32.xlu0 %v385, 24
  %v401 = vpop.permute.xlu0 %400
  %402 = vrot.lane.b32.xlu0 %v387, 24
  %v403 = vpop.permute.xlu0 %402
  %404 = vrot.lane.b32.xlu0 %v389, 24
  %v405 = vpop.permute.xlu0 %404
  %406 = vrot.lane.b32.xlu0 %v391, 24
  %v407 = vpop.permute.xlu0 %406
  %408 = vrot.lane.b32.xlu0 %v393, 24
  %v409 = vpop.permute.xlu0 %408
  %v411 = vunpack.c.l.b16 %v40
  %v412 = vpack.c.b16 %v411, %v411
  %vm413 = vsmask.f32 4352
  %v415 = vshrl.u32 %v375, 16
  %v417 = vrot.slane %v415, 3
  %v418 = vshll.u32 %v375, 16
  %v420 = vrot.slane %v418, 4
  %v421 = vor.u32 %v417, %v420
  %v422 = vrot.slane %v97, 3
  %v423 = vrot.slane %v93, 4
  %v424 = vor.u32 %v422, %v423
  %v425 = vsel %vm413, %v421, %v424
  %v426 = vrot.slane %v105, 3
  %v427 = vrot.slane %v101, 4
  %v428 = vor.u32 %v426, %v427
  %v429 = vsel %vm413, %v424, %v428
  %v430 = vrot.slane %v113, 3
  %v431 = vrot.slane %v109, 4
  %v432 = vor.u32 %v430, %v431
  %v433 = vsel %vm413, %v428, %v432
  %v434 = vrot.slane %v121, 3
  %v435 = vrot.slane %v117, 4
  %v436 = vor.u32 %v434, %v435
  %v437 = vsel %vm413, %v432, %v436
  %v438 = vrot.slane %v129, 3
  %v439 = vrot.slane %v125, 4
  %v440 = vor.u32 %v438, %v439
  %v441 = vsel %vm413, %v436, %v440
  %v442 = vrot.slane %v137, 3
  %v443 = vrot.slane %v133, 4
  %v444 = vor.u32 %v442, %v443
  %v445 = vsel %vm413, %v440, %v444
  %v446 = vrot.slane %v145, 3
  %v447 = vrot.slane %v141, 4
  %v448 = vor.u32 %v446, %v447
  %v449 = vsel %vm413, %v444, %v448
  %v451 = vshrl.u32 %v412, 16
  %v453 = vrot.slane %v451, 3
  %v454 = vshll.u32 %v412, 16
  %v456 = vrot.slane %v454, 4
  %v457 = vor.u32 %v453, %v456
  %v458 = vsel %vm413, %v448, %v457
  %459 = vrot.lane.b32.xlu0 %v425, 28
  %v460 = vpop.permute.xlu0 %459
  %461 = vrot.lane.b32.xlu0 %v429, 28
  %v462 = vpop.permute.xlu0 %461
  %463 = vrot.lane.b32.xlu0 %v433, 28
  %v464 = vpop.permute.xlu0 %463
  %465 = vrot.lane.b32.xlu0 %v437, 28
  %v466 = vpop.permute.xlu0 %465
  %467 = vrot.lane.b32.xlu0 %v441, 28
  %v468 = vpop.permute.xlu0 %467
  %469 = vrot.lane.b32.xlu0 %v445, 28
  %v470 = vpop.permute.xlu0 %469
  %471 = vrot.lane.b32.xlu0 %v449, 28
  %v472 = vpop.permute.xlu0 %471
  %473 = vrot.lane.b32.xlu0 %v458, 28
  %v474 = vpop.permute.xlu0 %473
  %vm475 = vcmask 31744
  %v477 = vsel %vm475, %v73, %v154
  %v479 = vsel %vm475, %v74, %v156
  %v481 = vsel %vm475, %v75, %v158
  %v483 = vsel %vm475, %v76, %v160
  %v485 = vsel %vm475, %v77, %v162
  %v487 = vsel %vm475, %v78, %v164
  %v489 = vsel %vm475, %v79, %v166
  %v491 = vsel %vm475, %v80, %v168
  %vm492 = vcmask 64512
  %v494 = vsel %vm492, %v477, %v191
  %v496 = vsel %vm492, %v479, %v193
  %v498 = vsel %vm492, %v481, %v195
  %v500 = vsel %vm492, %v483, %v197
  %v502 = vsel %vm492, %v485, %v199
  %v504 = vsel %vm492, %v487, %v201
  %v506 = vsel %vm492, %v489, %v203
  %v508 = vsel %vm492, %v491, %v205
  %vm509 = vcmask 97280
  %v511 = vsel %vm509, %v494, %v256
  %v513 = vsel %vm509, %v496, %v258
  %v515 = vsel %vm509, %v498, %v260
  %v517 = vsel %vm509, %v500, %v262
  %v519 = vsel %vm509, %v502, %v264
  %v521 = vsel %vm509, %v504, %v266
  %v523 = vsel %vm509, %v506, %v268
  %v525 = vsel %vm509, %v508, %v270
  %vm526 = vcmask 130048
  %v528 = vsel %vm526, %v511, %v293
  %v530 = vsel %vm526, %v513, %v295
  %v532 = vsel %vm526, %v515, %v297
  %v534 = vsel %vm526, %v517, %v299
  %v536 = vsel %vm526, %v519, %v301
  %v538 = vsel %vm526, %v521, %v303
  %v540 = vsel %vm526, %v523, %v305
  %v542 = vsel %vm526, %v525, %v307
  %vm543 = vcmask 162816
  %v545 = vsel %vm543, %v528, %v358
  %v547 = vsel %vm543, %v530, %v360
  %v549 = vsel %vm543, %v532, %v362
  %v551 = vsel %vm543, %v534, %v364
  %v553 = vsel %vm543, %v536, %v366
  %v555 = vsel %vm543, %v538, %v368
  %v557 = vsel %vm543, %v540, %v370
  %v559 = vsel %vm543, %v542, %v372
  %vm560 = vcmask 195584
  %v562 = vsel %vm560, %v545, %v395
  %v564 = vsel %vm560, %v547, %v397
  %v566 = vsel %vm560, %v549, %v399
  %v568 = vsel %vm560, %v551, %v401
  %v570 = vsel %vm560, %v553, %v403
  %v572 = vsel %vm560, %v555, %v405
  %v574 = vsel %vm560, %v557, %v407
  %v576 = vsel %vm560, %v559, %v409
  %vm577 = vcmask 228352
  %v579 = vsel %vm577, %v562, %v460
  %v581 = vsel %vm577, %v564, %v462
  %v583 = vsel %vm577, %v566, %v464
  %v585 = vsel %vm577, %v568, %v466
  %v587 = vsel %vm577, %v570, %v468
  %v589 = vsel %vm577, %v572, %v470
  %v591 = vsel %vm577, %v574, %v472
  %v593 = vsel %vm577, %v576, %v474
  %v594 = vld [vmem:[%s1] sm:$0xf]
  %v595 = vld [vmem:[%s1 + $0x4] sm:$0xf]
  %v596 = vld [vmem:[%s1 + $0x8] sm:$0xf]
  %v597 = vld [vmem:[%s1 + $0xc] sm:$0xf]
  %v602 = vunpack.c.l.b16 %v594
  %v603 = vunpack.c.l.b16 %v595
  %v604 = vunpack.c.l.b16 %v596
  %v605 = vunpack.c.l.b16 %v597
  %v606 = vpack.c.b16 %v603, %v602
  %v607 = vpack.c.b16 %v605, %v604
  %vm610 = vcmask 261120
  %v611 = vsel %vm610, %v579, 0
  %v613 = vsel %vm610, %v581, 0
  %v615 = vsel %vm610, %v583, 0
  %v617 = vsel %vm610, %v585, 0
  %v619 = vsel %vm610, %v587, 0
  %v621 = vsel %vm610, %v589, 0
  %v623 = vsel %vm610, %v591, 0
  %v625 = vsel %vm610, %v593, 0
  %627 = vmatprep.subr.bf16.mxu0 0
  %628 = vmatpush1.bf16.msra.mxu0 0
  %629 = vmatprep.subr.bf16.mxu0 0
  %630 = vmatpush1.bf16.msra.mxu0 0
  %631 = vmatprep.subr.bf16.mxu0 0
  %632 = vmatpush1.bf16.msra.mxu0 0
  %633 = vmatprep.subr.bf16.mxu0 0
  %634 = vmatpush1.bf16.msra.mxu0 0
  %635 = vmatprep.subr.bf16.mxu0 0
  %636 = vmatpush1.bf16.msra.mxu0 0
  %637 = vmatprep.subr.bf16.mxu0 0
  %638 = vmatpush1.bf16.msra.mxu0 0
  %639 = vmatprep.subr.bf16.mxu0 0
  %640 = vmatpush1.bf16.msra.mxu0 %v607
  %641 = vmatprep.subr.bf16.mxu0 0
  %642 = vmatpush1.bf16.msra.mxu0 %v606
  %643 = vmatprep.subr.bf16.mxu0 0
  %644 = vmatpush2.bf16.msra.mxu0 0
  %645 = vmatprep.subr.bf16.mxu0 0
  %646 = vmatpush2.bf16.msra.mxu0 0
  %647 = vmatprep.subr.bf16.mxu0 0
  %648 = vmatpush2.bf16.msra.mxu0 0
  %649 = vmatprep.subr.bf16.mxu0 0
  %650 = vmatpush2.bf16.msra.mxu0 0
  %651 = vmatprep.subr.bf16.mxu0 0
  %652 = vmatpush2.bf16.msra.mxu0 0
  %653 = vmatprep.subr.bf16.mxu0 0
  %654 = vmatpush2.bf16.msra.mxu0 0
  %655 = vmatprep.subr.bf16.mxu0 0
  %656 = vmatpush2.bf16.msra.mxu0 0
  %657 = vmatprep.subr.bf16.mxu0 0
  %658 = vmatpush2.bf16.msra.mxu0 0
  %659 = vmatprep.mubr.bf16.mxu0 0
  %660 = vmatmul.mubr.bf16.gmra.mxu0 %v611
  %v661 = vpop.f32.mrf.mxu0
  %v662 = vadd.f32 0.0, %v661
  %v663 = vpop.f32.mrf.mxu0
  %v664 = vpop.f32.mrf.mxu0
  %v665 = vadd.f32 0.0, %v664
  %v666 = vpop.f32.mrf.mxu0
  %667 = vmatprep.mubr.bf16.mxu0 0
  %668 = vmatmul.mubr.bf16.gmra.mxu0 %v613
  %v669 = vpop.f32.mrf.mxu0
  %v670 = vadd.f32 0.0, %v669
  %v671 = vpop.f32.mrf.mxu0
  %v672 = vpop.f32.mrf.mxu0
  %v673 = vadd.f32 0.0, %v672
  %v674 = vpop.f32.mrf.mxu0
  %675 = vmatprep.mubr.bf16.mxu0 0
  %676 = vmatmul.mubr.bf16.gmra.mxu0 %v615
  %v677 = vpop.f32.mrf.mxu0
  %v678 = vadd.f32 0.0, %v677
  %v679 = vpop.f32.mrf.mxu0
  %v680 = vpop.f32.mrf.mxu0
  %v681 = vadd.f32 0.0, %v680
  %v682 = vpop.f32.mrf.mxu0
  %683 = vmatprep.mubr.bf16.mxu0 0
  %684 = vmatmul.mubr.bf16.gmra.mxu0 %v617
  %v685 = vpop.f32.mrf.mxu0
  %v686 = vadd.f32 0.0, %v685
  %v687 = vpop.f32.mrf.mxu0
  %v688 = vpop.f32.mrf.mxu0
  %v689 = vadd.f32 0.0, %v688
  %v690 = vpop.f32.mrf.mxu0
  %691 = vmatprep.mubr.bf16.mxu0 0
  %692 = vmatmul.mubr.bf16.gmra.mxu0 %v619
  %v693 = vpop.f32.mrf.mxu0
  %v694 = vadd.f32 0.0, %v693
  %v695 = vpop.f32.mrf.mxu0
  %v696 = vpop.f32.mrf.mxu0
  %v697 = vadd.f32 0.0, %v696
  %v698 = vpop.f32.mrf.mxu0
  %699 = vmatprep.mubr.bf16.mxu0 0
  %700 = vmatmul.mubr.bf16.gmra.mxu0 %v621
  %v701 = vpop.f32.mrf.mxu0
  %v702 = vadd.f32 0.0, %v701
  %v703 = vpop.f32.mrf.mxu0
  %v704 = vpop.f32.mrf.mxu0
  %v705 = vadd.f32 0.0, %v704
  %v706 = vpop.f32.mrf.mxu0
  %707 = vmatprep.mubr.bf16.mxu0 0
  %708 = vmatmul.mubr.bf16.gmra.mxu0 %v623
  %v709 = vpop.f32.mrf.mxu0
  %v710 = vadd.f32 0.0, %v709
  %v711 = vpop.f32.mrf.mxu0
  %v712 = vpop.f32.mrf.mxu0
  %v713 = vadd.f32 0.0, %v712
  %v714 = vpop.f32.mrf.mxu0
  %715 = vmatprep.mubr.bf16.mxu0 0
  %716 = vmatmul.mubr.bf16.gmra.mxu0 %v625
  %v717 = vpop.f32.mrf.mxu0
  %v718 = vadd.f32 0.0, %v717
  %v719 = vpop.f32.mrf.mxu0
  %v720 = vpop.f32.mrf.mxu0
  %v721 = vadd.f32 0.0, %v720
  %v722 = vpop.f32.mrf.mxu0
  %723 = vdwg.mxu0
  %v724 = vlaneseq
  %v725 = vshrl.u32 %v724, 7
  %v726 = vadd.s32 %v725, 8
  %v727 = vadd.s32 %v725, 16
  %v728 = vadd.s32 %v725, 24
  %v729 = vadd.s32 %v725, 32
  %v730 = vadd.s32 %v725, 40
  %v731 = vadd.s32 %v725, 48
  %v732 = vadd.s32 %v725, 56
  %v733 = vadd.s32 %v725, 64
  %v734 = vadd.s32 %v725, 72
  %v735 = vadd.s32 %v725, 80
  %v736 = vadd.s32 %v725, 88
  %v737 = vadd.s32 %v725, 96
  %v738 = vadd.s32 %v725, 104
  %v739 = vadd.s32 %v725, 112
  %v740 = vadd.s32 %v725, 120
  %vm741 = vcmp.lt.s32.totalorder %v725, 0
  %v742 = vsub.s32 0, %v725
  %v743 = vsel %vm741, %v742, %v725
  %v744 = vshrl.u32 %v743, 6
  %v745 = vand.u32 %v743, 63
  %v746 = vsub.s32 0, %v745
  %v747 = vsel %vm741, %v746, %v745
  %vm748 = vcmp.lt.s32.totalorder %v726, 0
  %v749 = vsub.s32 0, %v726
  %v750 = vsel %vm748, %v749, %v726
  %v751 = vshrl.u32 %v750, 6
  %v752 = vand.u32 %v750, 63
  %v753 = vsub.s32 0, %v752
  %v754 = vsel %vm748, %v753, %v752
  %vm755 = vcmp.lt.s32.totalorder %v727, 0
  %v756 = vsub.s32 0, %v727
  %v757 = vsel %vm755, %v756, %v727
  %v758 = vshrl.u32 %v757, 6
  %v759 = vand.u32 %v757, 63
  %v760 = vsub.s32 0, %v759
  %v761 = vsel %vm755, %v760, %v759
  %vm762 = vcmp.lt.s32.totalorder %v728, 0
  %v763 = vsub.s32 0, %v728
  %v764 = vsel %vm762, %v763, %v728
  %v765 = vshrl.u32 %v764, 6
  %v766 = vand.u32 %v764, 63
  %v767 = vsub.s32 0, %v766
  %v768 = vsel %vm762, %v767, %v766
  %vm769 = vcmp.lt.s32.totalorder %v729, 0
  %v770 = vsub.s32 0, %v729
  %v771 = vsel %vm769, %v770, %v729
  %v772 = vshrl.u32 %v771, 6
  %v773 = vand.u32 %v771, 63
  %v774 = vsub.s32 0, %v773
  %v775 = vsel %vm769, %v774, %v773
  %vm776 = vcmp.lt.s32.totalorder %v730, 0
  %v777 = vsub.s32 0, %v730
  %v778 = vsel %vm776, %v777, %v730
  %v779 = vshrl.u32 %v778, 6
  %v780 = vand.u32 %v778, 63
  %v781 = vsub.s32 0, %v780
  %v782 = vsel %vm776, %v781, %v780
  %vm783 = vcmp.lt.s32.totalorder %v731, 0
  %v784 = vsub.s32 0, %v731
  %v785 = vsel %vm783, %v784, %v731
  %v786 = vshrl.u32 %v785, 6
  %v787 = vand.u32 %v785, 63
  %v788 = vsub.s32 0, %v787
  %v789 = vsel %vm783, %v788, %v787
  %vm790 = vcmp.lt.s32.totalorder %v732, 0
  %v791 = vsub.s32 0, %v732
  %v792 = vsel %vm790, %v791, %v732
  %v793 = vshrl.u32 %v792, 6
  %v794 = vand.u32 %v792, 63
  %v795 = vsub.s32 0, %v794
  %v796 = vsel %vm790, %v795, %v794
  %vm797 = vcmp.lt.s32.totalorder %v733, 0
  %v798 = vsub.s32 0, %v733
  %v799 = vsel %vm797, %v798, %v733
  %v800 = vshrl.u32 %v799, 6
  %v801 = vand.u32 %v799, 63
  %v802 = vsub.s32 0, %v801
  %v803 = vsel %vm797, %v802, %v801
  %vm804 = vcmp.lt.s32.totalorder %v734, 0
  %v805 = vsub.s32 0, %v734
  %v806 = vsel %vm804, %v805, %v734
  %v807 = vshrl.u32 %v806, 6
  %v808 = vand.u32 %v806, 63
  %v809 = vsub.s32 0, %v808
  %v810 = vsel %vm804, %v809, %v808
  %vm811 = vcmp.lt.s32.totalorder %v735, 0
  %v812 = vsub.s32 0, %v735
  %v813 = vsel %vm811, %v812, %v735
  %v814 = vshrl.u32 %v813, 6
  %v815 = vand.u32 %v813, 63
  %v816 = vsub.s32 0, %v815
  %v817 = vsel %vm811, %v816, %v815
  %vm818 = vcmp.lt.s32.totalorder %v736, 0
  %v819 = vsub.s32 0, %v736
  %v820 = vsel %vm818, %v819, %v736
  %v821 = vshrl.u32 %v820, 6
  %v822 = vand.u32 %v820, 63
  %v823 = vsub.s32 0, %v822
  %v824 = vsel %vm818, %v823, %v822
  %vm825 = vcmp.lt.s32.totalorder %v737, 0
  %v826 = vsub.s32 0, %v737
  %v827 = vsel %vm825, %v826, %v737
  %v828 = vshrl.u32 %v827, 6
  %v829 = vand.u32 %v827, 63
  %v830 = vsub.s32 0, %v829
  %v831 = vsel %vm825, %v830, %v829
  %vm832 = vcmp.lt.s32.totalorder %v738, 0
  %v833 = vsub.s32 0, %v738
  %v834 = vsel %vm832, %v833, %v738
  %v835 = vshrl.u32 %v834, 6
  %v836 = vand.u32 %v834, 63
  %v837 = vsub.s32 0, %v836
  %v838 = vsel %vm832, %v837, %v836
  %vm839 = vcmp.lt.s32.totalorder %v739, 0
  %v840 = vsub.s32 0, %v739
  %v841 = vsel %vm839, %v840, %v739
  %v842 = vshrl.u32 %v841, 6
  %v843 = vand.u32 %v841, 63
  %v844 = vsub.s32 0, %v843
  %v845 = vsel %vm839, %v844, %v843
  %vm846 = vcmp.lt.s32.totalorder %v740, 0
  %v847 = vsub.s32 0, %v740
  %v848 = vsel %vm846, %v847, %v740
  %v849 = vshrl.u32 %v848, 6
  %v850 = vand.u32 %v848, 63
  %v851 = vsub.s32 0, %v850
  %v852 = vsel %vm846, %v851, %v850
  %vm853 = vcmp.ne.s32.totalorder %v747, 0
  %vm854 = vcmp.ne.s32.totalorder %v754, 0
  %vm855 = vcmp.ne.s32.totalorder %v761, 0
  %vm856 = vcmp.ne.s32.totalorder %v768, 0
  %vm857 = vcmp.ne.s32.totalorder %v775, 0
  %vm858 = vcmp.ne.s32.totalorder %v782, 0
  %vm859 = vcmp.ne.s32.totalorder %v789, 0
  %vm860 = vcmp.ne.s32.totalorder %v796, 0
  %vm861 = vcmp.ne.s32.totalorder %v803, 0
  %vm862 = vcmp.ne.s32.totalorder %v810, 0
  %vm863 = vcmp.ne.s32.totalorder %v817, 0
  %vm864 = vcmp.ne.s32.totalorder %v824, 0
  %vm865 = vcmp.ne.s32.totalorder %v831, 0
  %vm866 = vcmp.ne.s32.totalorder %v838, 0
  %vm867 = vcmp.ne.s32.totalorder %v845, 0
  %vm868 = vcmp.ne.s32.totalorder %v852, 0
  %vm869 = vcmp.lt.s32.totalorder %v747, 0
  %vm870 = vcmp.lt.s32.totalorder %v754, 0
  %vm871 = vcmp.lt.s32.totalorder %v761, 0
  %vm872 = vcmp.lt.s32.totalorder %v768, 0
  %vm873 = vcmp.lt.s32.totalorder %v775, 0
  %vm874 = vcmp.lt.s32.totalorder %v782, 0
  %vm875 = vcmp.lt.s32.totalorder %v789, 0
  %vm876 = vcmp.lt.s32.totalorder %v796, 0
  %vm877 = vcmp.lt.s32.totalorder %v803, 0
  %vm878 = vcmp.lt.s32.totalorder %v810, 0
  %vm879 = vcmp.lt.s32.totalorder %v817, 0
  %vm880 = vcmp.lt.s32.totalorder %v824, 0
  %vm881 = vcmp.lt.s32.totalorder %v831, 0
  %vm882 = vcmp.lt.s32.totalorder %v838, 0
  %vm883 = vcmp.lt.s32.totalorder %v845, 0
  %vm884 = vcmp.lt.s32.totalorder %v852, 0
  %vm885 = vmand %vm869, %vm853
  %vm886 = vmand %vm870, %vm854
  %vm887 = vmand %vm871, %vm855
  %vm888 = vmand %vm872, %vm856
  %vm889 = vmand %vm873, %vm857
  %vm890 = vmand %vm874, %vm858
  %vm891 = vmand %vm875, %vm859
  %vm892 = vmand %vm876, %vm860
  %vm893 = vmand %vm877, %vm861
  %vm894 = vmand %vm878, %vm862
  %vm895 = vmand %vm879, %vm863
  %vm896 = vmand %vm880, %vm864
  %vm897 = vmand %vm881, %vm865
  %vm898 = vmand %vm882, %vm866
  %vm899 = vmand %vm883, %vm867
  %vm900 = vmand %vm884, %vm868
  %v901 = vadd.s32 %v747, 64
  %v902 = vadd.s32 %v754, 64
  %v903 = vadd.s32 %v761, 64
  %v904 = vadd.s32 %v768, 64
  %v905 = vadd.s32 %v775, 64
  %v906 = vadd.s32 %v782, 64
  %v907 = vadd.s32 %v789, 64
  %v908 = vadd.s32 %v796, 64
  %v909 = vadd.s32 %v803, 64
  %v910 = vadd.s32 %v810, 64
  %v911 = vadd.s32 %v817, 64
  %v912 = vadd.s32 %v824, 64
  %v913 = vadd.s32 %v831, 64
  %v914 = vadd.s32 %v838, 64
  %v915 = vadd.s32 %v845, 64
  %v916 = vadd.s32 %v852, 64
  %v917 = vsel %vm885, %v901, %v747
  %v918 = vsel %vm886, %v902, %v754
  %v919 = vsel %vm887, %v903, %v761
  %v920 = vsel %vm888, %v904, %v768
  %v921 = vsel %vm889, %v905, %v775
  %v922 = vsel %vm890, %v906, %v782
  %v923 = vsel %vm891, %v907, %v789
  %v924 = vsel %vm892, %v908, %v796
  %v925 = vsel %vm893, %v909, %v803
  %v926 = vsel %vm894, %v910, %v810
  %v927 = vsel %vm895, %v911, %v817
  %v928 = vsel %vm896, %v912, %v824
  %v929 = vsel %vm897, %v913, %v831
  %v930 = vsel %vm898, %v914, %v838
  %v931 = vsel %vm899, %v915, %v845
  %v932 = vsel %vm900, %v916, %v852
  %vm933 = vcmp.lt.s32.totalorder %v917, 17
  %vm934 = vcmp.lt.s32.totalorder %v918, 17
  %vm935 = vcmp.lt.s32.totalorder %v919, 17
  %vm936 = vcmp.lt.s32.totalorder %v920, 17
  %vm937 = vcmp.lt.s32.totalorder %v921, 17
  %vm938 = vcmp.lt.s32.totalorder %v922, 17
  %vm939 = vcmp.lt.s32.totalorder %v923, 17
  %vm940 = vcmp.lt.s32.totalorder %v924, 17
  %vm941 = vcmp.lt.s32.totalorder %v925, 17
  %vm942 = vcmp.lt.s32.totalorder %v926, 17
  %vm943 = vcmp.lt.s32.totalorder %v927, 17
  %vm944 = vcmp.lt.s32.totalorder %v928, 17
  %vm945 = vcmp.lt.s32.totalorder %v929, 17
  %vm946 = vcmp.lt.s32.totalorder %v930, 17
  %vm947 = vcmp.lt.s32.totalorder %v931, 17
  %vm948 = vcmp.lt.s32.totalorder %v932, 17
  %v949 = vsel %vm933, 1, 0
  %v950 = vsel %vm934, 1, 0
  %v951 = vsel %vm935, 1, 0
  %v952 = vsel %vm936, 1, 0
  %v953 = vsel %vm937, 1, 0
  %v954 = vsel %vm938, 1, 0
  %v955 = vsel %vm939, 1, 0
  %v956 = vsel %vm940, 1, 0
  %v957 = vsel %vm941, 1, 0
  %v958 = vsel %vm942, 1, 0
  %v959 = vsel %vm943, 1, 0
  %v960 = vsel %vm944, 1, 0
  %v961 = vsel %vm945, 1, 0
  %v962 = vsel %vm946, 1, 0
  %v963 = vsel %vm947, 1, 0
  %v964 = vsel %vm948, 1, 0
  %vm965 = vcmp.eq.s32.totalorder %v949, 1
  %vm966 = vcmp.eq.s32.totalorder %v950, 1
  %vm967 = vcmp.eq.s32.totalorder %v951, 1
  %vm968 = vcmp.eq.s32.totalorder %v952, 1
  %vm969 = vcmp.eq.s32.totalorder %v953, 1
  %vm970 = vcmp.eq.s32.totalorder %v954, 1
  %vm971 = vcmp.eq.s32.totalorder %v955, 1
  %vm972 = vcmp.eq.s32.totalorder %v956, 1
  %vm973 = vcmp.eq.s32.totalorder %v957, 1
  %vm974 = vcmp.eq.s32.totalorder %v958, 1
  %vm975 = vcmp.eq.s32.totalorder %v959, 1
  %vm976 = vcmp.eq.s32.totalorder %v960, 1
  %vm977 = vcmp.eq.s32.totalorder %v961, 1
  %vm978 = vcmp.eq.s32.totalorder %v962, 1
  %vm979 = vcmp.eq.s32.totalorder %v963, 1
  %vm980 = vcmp.eq.s32.totalorder %v964, 1
  %v981 = vsel %vm965, %v662, 0.0
  %v982 = vsel %vm966, %v665, 0.0
  %v983 = vsel %vm967, %v670, 0.0
  %v984 = vsel %vm968, %v673, 0.0
  %v985 = vsel %vm969, %v678, 0.0
  %v986 = vsel %vm970, %v681, 0.0
  %v987 = vsel %vm971, %v686, 0.0
  %v988 = vsel %vm972, %v689, 0.0
  %v989 = vsel %vm973, %v694, 0.0
  %v990 = vsel %vm974, %v697, 0.0
  %v991 = vsel %vm975, %v702, 0.0
  %v992 = vsel %vm976, %v705, 0.0
  %v993 = vsel %vm977, %v710, 0.0
  %v994 = vsel %vm978, %v713, 0.0
  %v995 = vsel %vm979, %v718, 0.0
  %v996 = vsel %vm980, %v721, 0.0
  %v997 = vsel %vm610, %v981, 0.0
  %v998 = vsel %vm610, %v982, 0.0
  %v999 = vadd.f32 %v997, %v998
  %v1000 = vsel %vm610, %v983, 0.0
  %v1001 = vadd.f32 %v999, %v1000
  %v1002 = vsel %vm610, %v984, 0.0
  %v1003 = vadd.f32 %v1001, %v1002
  %v1004 = vsel %vm610, %v985, 0.0
  %v1005 = vadd.f32 %v1003, %v1004
  %v1006 = vsel %vm610, %v986, 0.0
  %v1007 = vadd.f32 %v1005, %v1006
  %v1008 = vsel %vm610, %v987, 0.0
  %v1009 = vadd.f32 %v1007, %v1008
  %v1010 = vsel %vm610, %v988, 0.0
  %v1011 = vadd.f32 %v1009, %v1010
  %v1012 = vsel %vm610, %v989, 0.0
  %v1013 = vadd.f32 %v1011, %v1012
  %v1014 = vsel %vm610, %v990, 0.0
  %v1015 = vadd.f32 %v1013, %v1014
  %v1016 = vsel %vm610, %v991, 0.0
  %v1017 = vadd.f32 %v1015, %v1016
  %v1018 = vsel %vm610, %v992, 0.0
  %v1019 = vadd.f32 %v1017, %v1018
  %v1020 = vsel %vm610, %v993, 0.0
  %v1021 = vadd.f32 %v1019, %v1020
  %v1022 = vsel %vm610, %v994, 0.0
  %v1023 = vadd.f32 %v1021, %v1022
  %v1024 = vsel %vm610, %v995, 0.0
  %v1025 = vadd.f32 %v1023, %v1024
  %v1026 = vsel %vm610, %v996, 0.0
  %v1027 = vadd.f32 %v1025, %v1026
  %v1028 = vrot.slane %v1027, 4
  %v1029 = vadd.f32 %v1027, %v1028
  %v1030 = vrot.slane %v1029, 2
  %v1031 = vadd.f32 %v1029, %v1030
  %v1032 = vrot.slane %v1031, 1
  %v1033 = vadd.f32 %v1031, %v1032
  %v1034 = vmul.f32 %v1033, 0.029411765
  %v1035 = vsub.f32 %v662, %v1034
  %v1036 = vsub.f32 %v665, %v1034
  %v1037 = vsub.f32 %v670, %v1034
  %v1038 = vsub.f32 %v673, %v1034
  %v1039 = vsub.f32 %v678, %v1034
  %v1040 = vsub.f32 %v681, %v1034
  %v1041 = vsub.f32 %v686, %v1034
  %v1042 = vsub.f32 %v689, %v1034
  %v1043 = vsub.f32 %v694, %v1034
  %v1044 = vsub.f32 %v697, %v1034
  %v1045 = vsub.f32 %v702, %v1034
  %v1046 = vsub.f32 %v705, %v1034
  %v1047 = vsub.f32 %v710, %v1034
  %v1048 = vsub.f32 %v713, %v1034
  %v1049 = vsub.f32 %v718, %v1034
  %v1050 = vsub.f32 %v721, %v1034
  %v1051 = vsel %vm965, %v1035, 0.0
  %v1052 = vsel %vm966, %v1036, 0.0
  %v1053 = vsel %vm967, %v1037, 0.0
  %v1054 = vsel %vm968, %v1038, 0.0
  %v1055 = vsel %vm969, %v1039, 0.0
  %v1056 = vsel %vm970, %v1040, 0.0
  %v1057 = vsel %vm971, %v1041, 0.0
  %v1058 = vsel %vm972, %v1042, 0.0
  %v1059 = vsel %vm973, %v1043, 0.0
  %v1060 = vsel %vm974, %v1044, 0.0
  %v1061 = vsel %vm975, %v1045, 0.0
  %v1062 = vsel %vm976, %v1046, 0.0
  %v1063 = vsel %vm977, %v1047, 0.0
  %v1064 = vsel %vm978, %v1048, 0.0
  %v1065 = vsel %vm979, %v1049, 0.0
  %v1066 = vsel %vm980, %v1050, 0.0
  %v1067 = vmul.f32 %v1051, %v1051
  %v1068 = vmul.f32 %v1052, %v1052
  %v1069 = vmul.f32 %v1053, %v1053
  %v1070 = vmul.f32 %v1054, %v1054
  %v1071 = vmul.f32 %v1055, %v1055
  %v1072 = vmul.f32 %v1056, %v1056
  %v1073 = vmul.f32 %v1057, %v1057
  %v1074 = vmul.f32 %v1058, %v1058
  %v1075 = vmul.f32 %v1059, %v1059
  %v1076 = vmul.f32 %v1060, %v1060
  %v1077 = vmul.f32 %v1061, %v1061
  %v1078 = vmul.f32 %v1062, %v1062
  %v1079 = vmul.f32 %v1063, %v1063
  %v1080 = vmul.f32 %v1064, %v1064
  %v1081 = vmul.f32 %v1065, %v1065
  %v1082 = vmul.f32 %v1066, %v1066
  %v1083 = vsel %vm610, %v1067, 0.0
  %v1084 = vsel %vm610, %v1068, 0.0
  %v1085 = vadd.f32 %v1083, %v1084
  %v1086 = vsel %vm610, %v1069, 0.0
  %v1087 = vadd.f32 %v1085, %v1086
  %v1088 = vsel %vm610, %v1070, 0.0
  %v1089 = vadd.f32 %v1087, %v1088
  %v1090 = vsel %vm610, %v1071, 0.0
  %v1091 = vadd.f32 %v1089, %v1090
  %v1092 = vsel %vm610, %v1072, 0.0
  %v1093 = vadd.f32 %v1091, %v1092
  %v1094 = vsel %vm610, %v1073, 0.0
  %v1095 = vadd.f32 %v1093, %v1094
  %v1096 = vsel %vm610, %v1074, 0.0
  %v1097 = vadd.f32 %v1095, %v1096
  %v1098 = vsel %vm610, %v1075, 0.0
  %v1099 = vadd.f32 %v1097, %v1098
  %v1100 = vsel %vm610, %v1076, 0.0
  %v1101 = vadd.f32 %v1099, %v1100
  %v1102 = vsel %vm610, %v1077, 0.0
  %v1103 = vadd.f32 %v1101, %v1102
  %v1104 = vsel %vm610, %v1078, 0.0
  %v1105 = vadd.f32 %v1103, %v1104
  %v1106 = vsel %vm610, %v1079, 0.0
  %v1107 = vadd.f32 %v1105, %v1106
  %v1108 = vsel %vm610, %v1080, 0.0
  %v1109 = vadd.f32 %v1107, %v1108
  %v1110 = vsel %vm610, %v1081, 0.0
  %v1111 = vadd.f32 %v1109, %v1110
  %v1112 = vsel %vm610, %v1082, 0.0
  %v1113 = vadd.f32 %v1111, %v1112
  %v1114 = vrot.slane %v1113, 4
  %v1115 = vadd.f32 %v1113, %v1114
  %v1116 = vrot.slane %v1115, 2
  %v1117 = vadd.f32 %v1115, %v1116
  %v1118 = vrot.slane %v1117, 1
  %v1119 = vadd.f32 %v1117, %v1118
  %v1120 = vmul.f32 %v1119, 0.029411765
  %v1121 = vadd.f32 %v1120, 1e-05
  %v1122 = vrsqrt.pop %v1121
  %v1123 = vmul.f32 %v1035, %v1122
  %v1124 = vmul.f32 %v1036, %v1122
  %v1125 = vmul.f32 %v1037, %v1122
  %v1126 = vmul.f32 %v1038, %v1122
  %v1127 = vmul.f32 %v1039, %v1122
  %v1128 = vmul.f32 %v1040, %v1122
  %v1129 = vmul.f32 %v1041, %v1122
  %v1130 = vmul.f32 %v1042, %v1122
  %v1131 = vmul.f32 %v1043, %v1122
  %v1132 = vmul.f32 %v1044, %v1122
  %v1133 = vmul.f32 %v1045, %v1122
  %v1134 = vmul.f32 %v1046, %v1122
  %v1135 = vmul.f32 %v1047, %v1122
  %v1136 = vmul.f32 %v1048, %v1122
  %v1137 = vmul.f32 %v1049, %v1122
  %v1138 = vmul.f32 %v1050, %v1122
  %v1139 = vmax.f32 %v1123, 0.0
  %v1140 = vmax.f32 %v1124, 0.0
  %v1141 = vmax.f32 %v1125, 0.0
  %v1142 = vmax.f32 %v1126, 0.0
  %v1143 = vmax.f32 %v1127, 0.0
  %v1144 = vmax.f32 %v1128, 0.0
  %v1145 = vmax.f32 %v1129, 0.0
  %v1146 = vmax.f32 %v1130, 0.0
  %v1147 = vmax.f32 %v1131, 0.0
  %v1148 = vmax.f32 %v1132, 0.0
  %v1149 = vmax.f32 %v1133, 0.0
  %v1150 = vmax.f32 %v1134, 0.0
  %v1151 = vmax.f32 %v1135, 0.0
  %v1152 = vmax.f32 %v1136, 0.0
  %v1153 = vmax.f32 %v1137, 0.0
  %v1154 = vmax.f32 %v1138, 0.0
  %v1155 = vsel %vm965, %v1139, 0.0
  %v1156 = vsel %vm966, %v1140, 0.0
  %v1157 = vsel %vm967, %v1141, 0.0
  %v1158 = vsel %vm968, %v1142, 0.0
  %v1159 = vsel %vm969, %v1143, 0.0
  %v1160 = vsel %vm970, %v1144, 0.0
  %v1161 = vsel %vm971, %v1145, 0.0
  %v1162 = vsel %vm972, %v1146, 0.0
  %v1163 = vsel %vm973, %v1147, 0.0
  %v1164 = vsel %vm974, %v1148, 0.0
  %v1165 = vsel %vm975, %v1149, 0.0
  %v1166 = vsel %vm976, %v1150, 0.0
  %v1167 = vsel %vm977, %v1151, 0.0
  %v1168 = vsel %vm978, %v1152, 0.0
  %v1169 = vsel %vm979, %v1153, 0.0
  %v1170 = vsel %vm980, %v1154, 0.0
  %1171 = vst.msk [vmem:[#allocation2] sm:$0xff] %vm610, 0.0
  %1172 = vst.msk [vmem:[#allocation2 + $0x8] sm:$0xff] %vm610, 0.0
  %1173 = vst.msk [vmem:[#allocation2 + $0x9] sm:$0xff] %vm610, %v1155
  %1174 = vst.msk [vmem:[#allocation2 + $0x11] sm:$0xff] %vm610, %v1156
  %1175 = vst.msk [vmem:[#allocation2 + $0x19] sm:$0xff] %vm610, %v1157
  %1176 = vst.msk [vmem:[#allocation2 + $0x21] sm:$0xff] %vm610, %v1158
  %1177 = vst.msk [vmem:[#allocation2 + $0x29] sm:$0xff] %vm610, %v1159
  %1178 = vst.msk [vmem:[#allocation2 + $0x31] sm:$0xff] %vm610, %v1160
  %1179 = vst.msk [vmem:[#allocation2 + $0x39] sm:$0xff] %vm610, %v1161
  %1180 = vst.msk [vmem:[#allocation2 + $0x41] sm:$0xff] %vm610, %v1162
  %1181 = vst.msk [vmem:[#allocation2 + $0x49] sm:$0xff] %vm610, %v1163
  %1182 = vst.msk [vmem:[#allocation2 + $0x51] sm:$0xff] %vm610, %v1164
  %1183 = vst.msk [vmem:[#allocation2 + $0x59] sm:$0xff] %vm610, %v1165
  %1184 = vst.msk [vmem:[#allocation2 + $0x61] sm:$0xff] %vm610, %v1166
  %1185 = vst.msk [vmem:[#allocation2 + $0x69] sm:$0xff] %vm610, %v1167
  %1186 = vst.msk [vmem:[#allocation2 + $0x71] sm:$0xff] %vm610, %v1168
  %1187 = vst.msk [vmem:[#allocation2 + $0x79] sm:$0xff] %vm610, %v1169
  %1188 = vst.msk [vmem:[#allocation2 + $0x81] sm:$0xff] %vm610, %v1170
  %v1189 = vld [vmem:[#allocation2] ss:$2 sm:$0xff]
  %s1190 = scalar_lea.vmem [#allocation2], 16
  %v1191 = vld [vmem:[%s1190] ss:$2 sm:$0xff]
  %s1192 = scalar_lea.vmem [#allocation2], 32
  %v1193 = vld [vmem:[%s1192] ss:$2 sm:$0xff]
  %s1194 = scalar_lea.vmem [#allocation2], 48
  %v1195 = vld [vmem:[%s1194] ss:$2 sm:$0xff]
  %s1196 = scalar_lea.vmem [#allocation2], 64
  %v1197 = vld [vmem:[%s1196] ss:$2 sm:$0xff]
  %s1198 = scalar_lea.vmem [#allocation2], 80
  %v1199 = vld [vmem:[%s1198] ss:$2 sm:$0xff]
  %s1200 = scalar_lea.vmem [#allocation2], 96
  %v1201 = vld [vmem:[%s1200] ss:$2 sm:$0xff]
  %s1202 = scalar_lea.vmem [#allocation2], 112
  %v1203 = vld [vmem:[%s1202] ss:$2 sm:$0xff]
  %s1204 = scalar_lea.vmem [#allocation2], 1
  %v1205 = vld [vmem:[%s1204] ss:$2 sm:$0xff]
  %s1206 = scalar_lea.vmem [#allocation2], 17
  %v1207 = vld [vmem:[%s1206] ss:$2 sm:$0xff]
  %s1208 = scalar_lea.vmem [#allocation2], 33
  %v1209 = vld [vmem:[%s1208] ss:$2 sm:$0xff]
  %s1210 = scalar_lea.vmem [#allocation2], 49
  %v1211 = vld [vmem:[%s1210] ss:$2 sm:$0xff]
  %s1212 = scalar_lea.vmem [#allocation2], 65
  %v1213 = vld [vmem:[%s1212] ss:$2 sm:$0xff]
  %s1214 = scalar_lea.vmem [#allocation2], 81
  %v1215 = vld [vmem:[%s1214] ss:$2 sm:$0xff]
  %s1216 = scalar_lea.vmem [#allocation2], 97
  %v1217 = vld [vmem:[%s1216] ss:$2 sm:$0xff]
  %s1218 = scalar_lea.vmem [#allocation2], 113
  %v1219 = vld [vmem:[%s1218] ss:$2 sm:$0xff]
  %v1220 = vmax.f32 %v1189, %v1205
  %v1221 = vmax.f32 %v1191, %v1207
  %v1222 = vmax.f32 %v1193, %v1209
  %v1223 = vmax.f32 %v1195, %v1211
  %v1224 = vmax.f32 %v1197, %v1213
  %v1225 = vmax.f32 %v1199, %v1215
  %v1226 = vmax.f32 %v1201, %v1217
  %v1227 = vmax.f32 %v1203, %v1219
  %v1228 = vpack.c.bf16 %v1221, %v1220
  %v1229 = vpack.c.bf16 %v1223, %v1222
  %v1230 = vpack.c.bf16 %v1225, %v1224
  %v1231 = vpack.c.bf16 %v1227, %v1226
  %v1236 = vunpack.c.l.b16 %v1228
  %v1237 = vunpack.c.h.b16 %v1228
  %v1238 = vunpack.c.l.b16 %v1229
  %v1239 = vunpack.c.h.b16 %v1229
  %v1240 = vunpack.c.l.b16 %v1230
  %v1241 = vunpack.c.h.b16 %v1230
  %v1242 = vunpack.c.l.b16 %v1231
  %v1243 = vunpack.c.h.b16 %v1231
  %v1244 = vpack.c.b16 %v1236, %v1236
  %v1245 = vpack.c.b16 %v1237, %v1237
  %v1246 = vpack.c.b16 %v1238, %v1238
  %v1247 = vpack.c.b16 %v1239, %v1239
  %v1248 = vpack.c.b16 %v1240, %v1240
  %v1249 = vpack.c.b16 %v1241, %v1241
  %v1250 = vpack.c.b16 %v1242, %v1242
  %v1251 = vpack.c.b16 %v1243, %v1243
  %vm1260 = vcmask 257024
  %1261 = vst.msk [vmem:[#allocation3] sm:$0xf] %vm1260, %v1244
  %1262 = vst.msk [vmem:[#allocation3 + $0x4] sm:$0xf] %vm1260, %v1245
  %1263 = vst.msk [vmem:[#allocation3 + $0x8] sm:$0xf] %vm1260, %v1246
  %1264 = vst.msk [vmem:[#allocation3 + $0xc] sm:$0xf] %vm1260, %v1247
  %1265 = vst.msk [vmem:[#allocation3 + $0x10] sm:$0xf] %vm1260, %v1248
  %1266 = vst.msk [vmem:[#allocation3 + $0x14] sm:$0xf] %vm1260, %v1249
  %1267 = vst.msk [vmem:[#allocation3 + $0x18] sm:$0xf] %vm1260, %v1250
  %1268 = vst.msk [vmem:[#allocation3 + $0x1c] sm:$0xf] %vm1260, %v1251
  %1269 = vst.msk [vmem:[#allocation3 + $0x20] sm:$0xf] %vm1260, 0
  %v1270 = vld [vmem:[#allocation3] sm:$0xf]
  %v1271 = vld [vmem:[#allocation3 + $0x4] sm:$0xf]
  %v1272 = vld [vmem:[#allocation3 + $0x8] sm:$0xf]
  %v1273 = vld [vmem:[#allocation3 + $0xc] sm:$0xf]
  %v1274 = vld [vmem:[#allocation3 + $0x10] sm:$0xf]
  %v1275 = vld [vmem:[#allocation3 + $0x14] sm:$0xf]
  %v1276 = vld [vmem:[#allocation3 + $0x18] sm:$0xf]
  %v1277 = vld [vmem:[#allocation3 + $0x1c] sm:$0xf]
  %v1278 = vld [vmem:[%s2] sm:$0xf]
  %v1279 = vld [vmem:[%s2 + $0x4] sm:$0xf]
  %v1280 = vld [vmem:[%s2 + $0x8] sm:$0xf]
  %v1281 = vld [vmem:[%s2 + $0xc] sm:$0xf]
  %v1282 = vld [vmem:[#allocation3 + $0x20] sm:$0x1]
  %s1283 = scalar_lea.vmem %s2, 16
  %v1284 = vld [vmem:[%s1283] sm:$0xf]
  %v1285 = vld [vmem:[%s1283 + $0x4] sm:$0xf]
  %v1286 = vld [vmem:[%s1283 + $0x8] sm:$0xf]
  %v1287 = vld [vmem:[%s1283 + $0xc] sm:$0xf]
  %v1297 = vunpack.c.l.b16 %v1270
  %v1298 = vunpack.c.l.b16 %v1271
  %v1299 = vunpack.c.l.b16 %v1272
  %v1300 = vunpack.c.l.b16 %v1273
  %v1301 = vunpack.c.l.b16 %v1274
  %v1302 = vunpack.c.l.b16 %v1275
  %v1303 = vunpack.c.l.b16 %v1276
  %v1304 = vunpack.c.l.b16 %v1277
  %v1305 = vunpack.c.l.b16 %v1282
  %v1306 = vpack.c.b16 %v1298, %v1297
  %v1307 = vpack.c.b16 %v1300, %v1299
  %v1308 = vpack.c.b16 %v1302, %v1301
  %v1309 = vpack.c.b16 %v1304, %v1303
  %v1310 = vpack.c.b16 %v1305, %v1305
  %v1312 = vshrl.u32 %v1306, 16
  %v1314 = vshll.u32 %v1306, 16
  %v1316 = vrot.slane %v1314, 1
  %v1317 = vor.u32 %v1312, %v1316
  %v1319 = vshll.u32 %v1307, 16
  %v1321 = vrot.slane %v1319, 1
  %v1322 = vsel %vm84, %v1317, %v1321
  %v1323 = vshrl.u32 %v1307, 16
  %v1325 = vor.u32 %v1323, %v1321
  %v1327 = vshll.u32 %v1308, 16
  %v1329 = vrot.slane %v1327, 1
  %v1330 = vsel %vm84, %v1325, %v1329
  %v1331 = vshrl.u32 %v1308, 16
  %v1333 = vor.u32 %v1331, %v1329
  %v1335 = vshll.u32 %v1309, 16
  %v1337 = vrot.slane %v1335, 1
  %v1338 = vsel %vm84, %v1333, %v1337
  %v1339 = vshrl.u32 %v1309, 16
  %v1341 = vor.u32 %v1339, %v1337
  %v1343 = vshll.u32 %v1310, 16
  %v1345 = vrot.slane %v1343, 1
  %v1346 = vsel %vm84, %v1341, %v1345
  %v1351 = vunpack.c.l.b16 %v1284
  %v1352 = vunpack.c.l.b16 %v1285
  %v1353 = vunpack.c.l.b16 %v1286
  %v1354 = vunpack.c.l.b16 %v1287
  %v1355 = vpack.c.b16 %v1352, %v1351
  %v1356 = vpack.c.b16 %v1354, %v1353
  %v1360 = vsel %vm610, %v1322, 0
  %v1363 = vsel %vm610, %v1330, 0
  %v1366 = vsel %vm610, %v1338, 0
  %v1369 = vsel %vm610, %v1346, 0
  %1371 = vmatprep.subr.bf16.mxu0 0
  %1372 = vmatpush1.bf16.msra.mxu0 0
  %1373 = vmatprep.subr.bf16.mxu0 0
  %1374 = vmatpush1.bf16.msra.mxu0 0
  %1375 = vmatprep.subr.bf16.mxu0 0
  %1376 = vmatpush1.bf16.msra.mxu0 0
  %1377 = vmatprep.subr.bf16.mxu0 0
  %1378 = vmatpush1.bf16.msra.mxu0 0
  %1379 = vmatprep.subr.bf16.mxu0 0
  %1380 = vmatpush1.bf16.msra.mxu0 0
  %1381 = vmatprep.subr.bf16.mxu0 0
  %1382 = vmatpush1.bf16.msra.mxu0 0
  %1383 = vmatprep.subr.bf16.mxu0 0
  %1384 = vmatpush1.bf16.msra.mxu0 %v1356
  %1385 = vmatprep.subr.bf16.mxu0 0
  %1386 = vmatpush1.bf16.msra.mxu0 %v1355
  %1387 = vmatprep.subr.bf16.mxu0 0
  %1388 = vmatpush2.bf16.msra.mxu0 0
  %1389 = vmatprep.subr.bf16.mxu0 0
  %1390 = vmatpush2.bf16.msra.mxu0 0
  %1391 = vmatprep.subr.bf16.mxu0 0
  %1392 = vmatpush2.bf16.msra.mxu0 0
  %1393 = vmatprep.subr.bf16.mxu0 0
  %1394 = vmatpush2.bf16.msra.mxu0 0
  %1395 = vmatprep.subr.bf16.mxu0 0
  %1396 = vmatpush2.bf16.msra.mxu0 0
  %1397 = vmatprep.subr.bf16.mxu0 0
  %1398 = vmatpush2.bf16.msra.mxu0 0
  %1399 = vmatprep.subr.bf16.mxu0 0
  %1400 = vmatpush2.bf16.msra.mxu0 0
  %1401 = vmatprep.subr.bf16.mxu0 0
  %1402 = vmatpush2.bf16.msra.mxu0 0
  %1403 = vmatprep.mubr.bf16.mxu0 0
  %1404 = vmatmul.mubr.bf16.gmra.mxu0 %v1360
  %v1405 = vpop.f32.mrf.mxu0
  %v1406 = vadd.f32 0.0, %v1405
  %v1407 = vpop.f32.mrf.mxu0
  %v1408 = vpop.f32.mrf.mxu0
  %v1409 = vadd.f32 0.0, %v1408
  %v1410 = vpop.f32.mrf.mxu0
  %1411 = vmatprep.mubr.bf16.mxu0 0
  %1412 = vmatmul.mubr.bf16.gmra.mxu0 %v1363
  %v1413 = vpop.f32.mrf.mxu0
  %v1414 = vadd.f32 0.0, %v1413
  %v1415 = vpop.f32.mrf.mxu0
  %v1416 = vpop.f32.mrf.mxu0
  %v1417 = vadd.f32 0.0, %v1416
  %v1418 = vpop.f32.mrf.mxu0
  %1419 = vmatprep.mubr.bf16.mxu0 0
  %1420 = vmatmul.mubr.bf16.gmra.mxu0 %v1366
  %v1421 = vpop.f32.mrf.mxu0
  %v1422 = vadd.f32 0.0, %v1421
  %v1423 = vpop.f32.mrf.mxu0
  %v1424 = vpop.f32.mrf.mxu0
  %v1425 = vadd.f32 0.0, %v1424
  %v1426 = vpop.f32.mrf.mxu0
  %1427 = vmatprep.mubr.bf16.mxu0 0
  %1428 = vmatmul.mubr.bf16.gmra.mxu0 %v1369
  %v1429 = vpop.f32.mrf.mxu0
  %v1430 = vadd.f32 0.0, %v1429
  %v1431 = vpop.f32.mrf.mxu0
  %v1432 = vpop.f32.mrf.mxu0
  %v1433 = vadd.f32 0.0, %v1432
  %v1434 = vpop.f32.mrf.mxu0
  %1435 = vdwg.mxu0
  %v1440 = vunpack.c.l.b16 %v1278
  %v1441 = vunpack.c.l.b16 %v1279
  %v1442 = vunpack.c.l.b16 %v1280
  %v1443 = vunpack.c.l.b16 %v1281
  %v1444 = vpack.c.b16 %v1441, %v1440
  %v1445 = vpack.c.b16 %v1443, %v1442
  %v1448 = vsel %vm610, %v1306, 0
  %v1450 = vsel %vm610, %v1307, 0
  %v1452 = vsel %vm610, %v1308, 0
  %v1454 = vsel %vm610, %v1309, 0
  %1456 = vmatprep.subr.bf16.mxu0 0
  %1457 = vmatpush1.bf16.msra.mxu0 0
  %1458 = vmatprep.subr.bf16.mxu0 0
  %1459 = vmatpush1.bf16.msra.mxu0 0
  %1460 = vmatprep.subr.bf16.mxu0 0
  %1461 = vmatpush1.bf16.msra.mxu0 0
  %1462 = vmatprep.subr.bf16.mxu0 0
  %1463 = vmatpush1.bf16.msra.mxu0 0
  %1464 = vmatprep.subr.bf16.mxu0 0
  %1465 = vmatpush1.bf16.msra.mxu0 0
  %1466 = vmatprep.subr.bf16.mxu0 0
  %1467 = vmatpush1.bf16.msra.mxu0 0
  %1468 = vmatprep.subr.bf16.mxu0 0
  %1469 = vmatpush1.bf16.msra.mxu0 %v1445
  %1470 = vmatprep.subr.bf16.mxu0 0
  %1471 = vmatpush1.bf16.msra.mxu0 %v1444
  %1472 = vmatprep.subr.bf16.mxu0 0
  %1473 = vmatpush2.bf16.msra.mxu0 0
  %1474 = vmatprep.subr.bf16.mxu0 0
  %1475 = vmatpush2.bf16.msra.mxu0 0
  %1476 = vmatprep.subr.bf16.mxu0 0
  %1477 = vmatpush2.bf16.msra.mxu0 0
  %1478 = vmatprep.subr.bf16.mxu0 0
  %1479 = vmatpush2.bf16.msra.mxu0 0
  %1480 = vmatprep.subr.bf16.mxu0 0
  %1481 = vmatpush2.bf16.msra.mxu0 0
  %1482 = vmatprep.subr.bf16.mxu0 0
  %1483 = vmatpush2.bf16.msra.mxu0 0
  %1484 = vmatprep.subr.bf16.mxu0 0
  %1485 = vmatpush2.bf16.msra.mxu0 0
  %1486 = vmatprep.subr.bf16.mxu0 0
  %1487 = vmatpush2.bf16.msra.mxu0 0
  %1488 = vmatprep.mubr.bf16.mxu0 0
  %1489 = vmatmul.mubr.bf16.gmra.mxu0 %v1448
  %v1490 = vpop.f32.mrf.mxu0
  %v1491 = vadd.f32 %v1406, %v1490
  %v1492 = vpop.f32.mrf.mxu0
  %v1493 = vpop.f32.mrf.mxu0
  %v1494 = vadd.f32 %v1409, %v1493
  %v1495 = vpop.f32.mrf.mxu0
  %1496 = vmatprep.mubr.bf16.mxu0 0
  %1497 = vmatmul.mubr.bf16.gmra.mxu0 %v1450
  %v1498 = vpop.f32.mrf.mxu0
  %v1499 = vadd.f32 %v1414, %v1498
  %v1500 = vpop.f32.mrf.mxu0
  %v1501 = vpop.f32.mrf.mxu0
  %v1502 = vadd.f32 %v1417, %v1501
  %v1503 = vpop.f32.mrf.mxu0
  %1504 = vmatprep.mubr.bf16.mxu0 0
  %1505 = vmatmul.mubr.bf16.gmra.mxu0 %v1452
  %v1506 = vpop.f32.mrf.mxu0
  %v1507 = vadd.f32 %v1422, %v1506
  %v1508 = vpop.f32.mrf.mxu0
  %v1509 = vpop.f32.mrf.mxu0
  %v1510 = vadd.f32 %v1425, %v1509
  %v1511 = vpop.f32.mrf.mxu0
  %1512 = vmatprep.mubr.bf16.mxu0 0
  %1513 = vmatmul.mubr.bf16.gmra.mxu0 %v1454
  %v1514 = vpop.f32.mrf.mxu0
  %v1515 = vadd.f32 %v1430, %v1514
  %v1516 = vpop.f32.mrf.mxu0
  %v1517 = vpop.f32.mrf.mxu0
  %v1518 = vadd.f32 %v1433, %v1517
  %v1519 = vpop.f32.mrf.mxu0
  %1520 = vdwg.mxu0
  %v1521 = vld [vmem:[#allocation3] sm:$0xe]
  %s1522 = scalar_lea.vmem %s2, 32
  %v1523 = vld [vmem:[%s1522] sm:$0xf]
  %v1524 = vld [vmem:[%s1522 + $0x4] sm:$0xf]
  %v1525 = vld [vmem:[%s1522 + $0x8] sm:$0xf]
  %v1526 = vld [vmem:[%s1522 + $0xc] sm:$0xf]
  %v1528 = vunpack.c.l.b16 %v1521
  %v1529 = vpack.c.b16 %v1298, %v1528
  %v1530 = vrot.slane %v1529, 1
  %v1531 = vrot.slane %v1307, 1
  %v1532 = vsel %vm172, %v1530, %v1531
  %v1533 = vrot.slane %v1308, 1
  %v1534 = vsel %vm172, %v1531, %v1533
  %v1535 = vrot.slane %v1309, 1
  %v1536 = vsel %vm172, %v1533, %v1535
  %v1537 = vrot.slane %v1310, 1
  %v1538 = vsel %vm172, %v1535, %v1537
  %v1543 = vunpack.c.l.b16 %v1523
  %v1544 = vunpack.c.l.b16 %v1524
  %v1545 = vunpack.c.l.b16 %v1525
  %v1546 = vunpack.c.l.b16 %v1526
  %v1547 = vpack.c.b16 %v1544, %v1543
  %v1548 = vpack.c.b16 %v1546, %v1545
  %v1552 = vsel %vm610, %v1532, 0
  %v1555 = vsel %vm610, %v1534, 0
  %v1558 = vsel %vm610, %v1536, 0
  %v1561 = vsel %vm610, %v1538, 0
  %1563 = vmatprep.subr.bf16.mxu0 0
  %1564 = vmatpush1.bf16.msra.mxu0 0
  %1565 = vmatprep.subr.bf16.mxu0 0
  %1566 = vmatpush1.bf16.msra.mxu0 0
  %1567 = vmatprep.subr.bf16.mxu0 0
  %1568 = vmatpush1.bf16.msra.mxu0 0
  %1569 = vmatprep.subr.bf16.mxu0 0
  %1570 = vmatpush1.bf16.msra.mxu0 0
  %1571 = vmatprep.subr.bf16.mxu0 0
  %1572 = vmatpush1.bf16.msra.mxu0 0
  %1573 = vmatprep.subr.bf16.mxu0 0
  %1574 = vmatpush1.bf16.msra.mxu0 0
  %1575 = vmatprep.subr.bf16.mxu0 0
  %1576 = vmatpush1.bf16.msra.mxu0 %v1548
  %1577 = vmatprep.subr.bf16.mxu0 0
  %1578 = vmatpush1.bf16.msra.mxu0 %v1547
  %1579 = vmatprep.subr.bf16.mxu0 0
  %1580 = vmatpush2.bf16.msra.mxu0 0
  %1581 = vmatprep.subr.bf16.mxu0 0
  %1582 = vmatpush2.bf16.msra.mxu0 0
  %1583 = vmatprep.subr.bf16.mxu0 0
  %1584 = vmatpush2.bf16.msra.mxu0 0
  %1585 = vmatprep.subr.bf16.mxu0 0
  %1586 = vmatpush2.bf16.msra.mxu0 0
  %1587 = vmatprep.subr.bf16.mxu0 0
  %1588 = vmatpush2.bf16.msra.mxu0 0
  %1589 = vmatprep.subr.bf16.mxu0 0
  %1590 = vmatpush2.bf16.msra.mxu0 0
  %1591 = vmatprep.subr.bf16.mxu0 0
  %1592 = vmatpush2.bf16.msra.mxu0 0
  %1593 = vmatprep.subr.bf16.mxu0 0
  %1594 = vmatpush2.bf16.msra.mxu0 0
  %1595 = vmatprep.mubr.bf16.mxu0 0
  %1596 = vmatmul.mubr.bf16.gmra.mxu0 %v1552
  %v1597 = vpop.f32.mrf.mxu0
  %v1598 = vadd.f32 0.0, %v1597
  %v1599 = vpop.f32.mrf.mxu0
  %v1600 = vpop.f32.mrf.mxu0
  %v1601 = vadd.f32 0.0, %v1600
  %v1602 = vpop.f32.mrf.mxu0
  %1603 = vmatprep.mubr.bf16.mxu0 0
  %1604 = vmatmul.mubr.bf16.gmra.mxu0 %v1555
  %v1605 = vpop.f32.mrf.mxu0
  %v1606 = vadd.f32 0.0, %v1605
  %v1607 = vpop.f32.mrf.mxu0
  %v1608 = vpop.f32.mrf.mxu0
  %v1609 = vadd.f32 0.0, %v1608
  %v1610 = vpop.f32.mrf.mxu0
  %1611 = vmatprep.mubr.bf16.mxu0 0
  %1612 = vmatmul.mubr.bf16.gmra.mxu0 %v1558
  %v1613 = vpop.f32.mrf.mxu0
  %v1614 = vadd.f32 0.0, %v1613
  %v1615 = vpop.f32.mrf.mxu0
  %v1616 = vpop.f32.mrf.mxu0
  %v1617 = vadd.f32 0.0, %v1616
  %v1618 = vpop.f32.mrf.mxu0
  %1619 = vmatprep.mubr.bf16.mxu0 0
  %1620 = vmatmul.mubr.bf16.gmra.mxu0 %v1561
  %v1621 = vpop.f32.mrf.mxu0
  %v1622 = vadd.f32 0.0, %v1621
  %v1623 = vpop.f32.mrf.mxu0
  %v1624 = vpop.f32.mrf.mxu0
  %v1625 = vadd.f32 0.0, %v1624
  %v1626 = vpop.f32.mrf.mxu0
  %1627 = vdwg.mxu0
  %v1628 = vadd.f32 %v1491, %v1598
  %v1629 = vadd.f32 %v1494, %v1601
  %v1630 = vadd.f32 %v1499, %v1606
  %v1631 = vadd.f32 %v1502, %v1609
  %v1632 = vadd.f32 %v1507, %v1614
  %v1633 = vadd.f32 %v1510, %v1617
  %v1634 = vadd.f32 %v1515, %v1622
  %v1635 = vadd.f32 %v1518, %v1625
  %v1636 = vld [vmem:[#allocation3 + $0x20] sm:$0x3]
  %s1637 = scalar_lea.vmem %s2, 48
  %v1638 = vld [vmem:[%s1637] sm:$0xf]
  %v1639 = vld [vmem:[%s1637 + $0x4] sm:$0xf]
  %v1640 = vld [vmem:[%s1637 + $0x8] sm:$0xf]
  %v1641 = vld [vmem:[%s1637 + $0xc] sm:$0xf]
  %v1643 = vunpack.c.l.b16 %v1636
  %v1644 = vpack.c.b16 %v1643, %v1643
  %v1646 = vshrl.u32 %v1529, 16
  %v1648 = vrot.slane %v1646, 1
  %v1649 = vshll.u32 %v1529, 16
  %v1651 = vrot.slane %v1649, 2
  %v1652 = vor.u32 %v1648, %v1651
  %v1653 = vrot.slane %v1323, 1
  %v1654 = vrot.slane %v1319, 2
  %v1655 = vor.u32 %v1653, %v1654
  %v1656 = vsel %vm209, %v1652, %v1655
  %v1657 = vrot.slane %v1331, 1
  %v1658 = vrot.slane %v1327, 2
  %v1659 = vor.u32 %v1657, %v1658
  %v1660 = vsel %vm209, %v1655, %v1659
  %v1661 = vrot.slane %v1339, 1
  %v1662 = vrot.slane %v1335, 2
  %v1663 = vor.u32 %v1661, %v1662
  %v1664 = vsel %vm209, %v1659, %v1663
  %v1666 = vshrl.u32 %v1644, 16
  %v1668 = vrot.slane %v1666, 1
  %v1669 = vshll.u32 %v1644, 16
  %v1671 = vrot.slane %v1669, 2
  %v1672 = vor.u32 %v1668, %v1671
  %v1673 = vsel %vm209, %v1663, %v1672
  %v1678 = vunpack.c.l.b16 %v1638
  %v1679 = vunpack.c.l.b16 %v1639
  %v1680 = vunpack.c.l.b16 %v1640
  %v1681 = vunpack.c.l.b16 %v1641
  %v1682 = vpack.c.b16 %v1679, %v1678
  %v1683 = vpack.c.b16 %v1681, %v1680
  %v1687 = vsel %vm610, %v1656, 0
  %v1690 = vsel %vm610, %v1660, 0
  %v1693 = vsel %vm610, %v1664, 0
  %v1696 = vsel %vm610, %v1673, 0
  %1698 = vmatprep.subr.bf16.mxu0 0
  %1699 = vmatpush1.bf16.msra.mxu0 0
  %1700 = vmatprep.subr.bf16.mxu0 0
  %1701 = vmatpush1.bf16.msra.mxu0 0
  %1702 = vmatprep.subr.bf16.mxu0 0
  %1703 = vmatpush1.bf16.msra.mxu0 0
  %1704 = vmatprep.subr.bf16.mxu0 0
  %1705 = vmatpush1.bf16.msra.mxu0 0
  %1706 = vmatprep.subr.bf16.mxu0 0
  %1707 = vmatpush1.bf16.msra.mxu0 0
  %1708 = vmatprep.subr.bf16.mxu0 0
  %1709 = vmatpush1.bf16.msra.mxu0 0
  %1710 = vmatprep.subr.bf16.mxu0 0
  %1711 = vmatpush1.bf16.msra.mxu0 %v1683
  %1712 = vmatprep.subr.bf16.mxu0 0
  %1713 = vmatpush1.bf16.msra.mxu0 %v1682
  %1714 = vmatprep.subr.bf16.mxu0 0
  %1715 = vmatpush2.bf16.msra.mxu0 0
  %1716 = vmatprep.subr.bf16.mxu0 0
  %1717 = vmatpush2.bf16.msra.mxu0 0
  %1718 = vmatprep.subr.bf16.mxu0 0
  %1719 = vmatpush2.bf16.msra.mxu0 0
  %1720 = vmatprep.subr.bf16.mxu0 0
  %1721 = vmatpush2.bf16.msra.mxu0 0
  %1722 = vmatprep.subr.bf16.mxu0 0
  %1723 = vmatpush2.bf16.msra.mxu0 0
  %1724 = vmatprep.subr.bf16.mxu0 0
  %1725 = vmatpush2.bf16.msra.mxu0 0
  %1726 = vmatprep.subr.bf16.mxu0 0
  %1727 = vmatpush2.bf16.msra.mxu0 0
  %1728 = vmatprep.subr.bf16.mxu0 0
  %1729 = vmatpush2.bf16.msra.mxu0 0
  %1730 = vmatprep.mubr.bf16.mxu0 0
  %1731 = vmatmul.mubr.bf16.gmra.mxu0 %v1687
  %v1732 = vpop.f32.mrf.mxu0
  %v1733 = vadd.f32 0.0, %v1732
  %v1734 = vpop.f32.mrf.mxu0
  %v1735 = vpop.f32.mrf.mxu0
  %v1736 = vadd.f32 0.0, %v1735
  %v1737 = vpop.f32.mrf.mxu0
  %1738 = vmatprep.mubr.bf16.mxu0 0
  %1739 = vmatmul.mubr.bf16.gmra.mxu0 %v1690
  %v1740 = vpop.f32.mrf.mxu0
  %v1741 = vadd.f32 0.0, %v1740
  %v1742 = vpop.f32.mrf.mxu0
  %v1743 = vpop.f32.mrf.mxu0
  %v1744 = vadd.f32 0.0, %v1743
  %v1745 = vpop.f32.mrf.mxu0
  %1746 = vmatprep.mubr.bf16.mxu0 0
  %1747 = vmatmul.mubr.bf16.gmra.mxu0 %v1693
  %v1748 = vpop.f32.mrf.mxu0
  %v1749 = vadd.f32 0.0, %v1748
  %v1750 = vpop.f32.mrf.mxu0
  %v1751 = vpop.f32.mrf.mxu0
  %v1752 = vadd.f32 0.0, %v1751
  %v1753 = vpop.f32.mrf.mxu0
  %1754 = vmatprep.mubr.bf16.mxu0 0
  %1755 = vmatmul.mubr.bf16.gmra.mxu0 %v1696
  %v1756 = vpop.f32.mrf.mxu0
  %v1757 = vadd.f32 0.0, %v1756
  %v1758 = vpop.f32.mrf.mxu0
  %v1759 = vpop.f32.mrf.mxu0
  %v1760 = vadd.f32 0.0, %v1759
  %v1761 = vpop.f32.mrf.mxu0
  %1762 = vdwg.mxu0
  %v1763 = vadd.f32 %v1628, %v1733
  %v1764 = vadd.f32 %v1629, %v1736
  %v1765 = vadd.f32 %v1630, %v1741
  %v1766 = vadd.f32 %v1631, %v1744
  %v1767 = vadd.f32 %v1632, %v1749
  %v1768 = vadd.f32 %v1633, %v1752
  %v1769 = vadd.f32 %v1634, %v1757
  %v1770 = vadd.f32 %v1635, %v1760
  %v1771 = vld [vmem:[#allocation3] sm:$0xc]
  %s1772 = scalar_lea.vmem %s2, 64
  %v1773 = vld [vmem:[%s1772] sm:$0xf]
  %v1774 = vld [vmem:[%s1772 + $0x4] sm:$0xf]
  %v1775 = vld [vmem:[%s1772 + $0x8] sm:$0xf]
  %v1776 = vld [vmem:[%s1772 + $0xc] sm:$0xf]
  %v1778 = vunpack.c.l.b16 %v1771
  %v1779 = vpack.c.b16 %v1298, %v1778
  %v1780 = vrot.slane %v1779, 2
  %v1781 = vrot.slane %v1307, 2
  %v1782 = vsel %vm274, %v1780, %v1781
  %v1783 = vrot.slane %v1308, 2
  %v1784 = vsel %vm274, %v1781, %v1783
  %v1785 = vrot.slane %v1309, 2
  %v1786 = vsel %vm274, %v1783, %v1785
  %v1787 = vrot.slane %v1644, 2
  %v1788 = vsel %vm274, %v1785, %v1787
  %v1793 = vunpack.c.l.b16 %v1773
  %v1794 = vunpack.c.l.b16 %v1774
  %v1795 = vunpack.c.l.b16 %v1775
  %v1796 = vunpack.c.l.b16 %v1776
  %v1797 = vpack.c.b16 %v1794, %v1793
  %v1798 = vpack.c.b16 %v1796, %v1795
  %v1802 = vsel %vm610, %v1782, 0
  %v1805 = vsel %vm610, %v1784, 0
  %v1808 = vsel %vm610, %v1786, 0
  %v1811 = vsel %vm610, %v1788, 0
  %1813 = vmatprep.subr.bf16.mxu0 0
  %1814 = vmatpush1.bf16.msra.mxu0 0
  %1815 = vmatprep.subr.bf16.mxu0 0
  %1816 = vmatpush1.bf16.msra.mxu0 0
  %1817 = vmatprep.subr.bf16.mxu0 0
  %1818 = vmatpush1.bf16.msra.mxu0 0
  %1819 = vmatprep.subr.bf16.mxu0 0
  %1820 = vmatpush1.bf16.msra.mxu0 0
  %1821 = vmatprep.subr.bf16.mxu0 0
  %1822 = vmatpush1.bf16.msra.mxu0 0
  %1823 = vmatprep.subr.bf16.mxu0 0
  %1824 = vmatpush1.bf16.msra.mxu0 0
  %1825 = vmatprep.subr.bf16.mxu0 0
  %1826 = vmatpush1.bf16.msra.mxu0 %v1798
  %1827 = vmatprep.subr.bf16.mxu0 0
  %1828 = vmatpush1.bf16.msra.mxu0 %v1797
  %1829 = vmatprep.subr.bf16.mxu0 0
  %1830 = vmatpush2.bf16.msra.mxu0 0
  %1831 = vmatprep.subr.bf16.mxu0 0
  %1832 = vmatpush2.bf16.msra.mxu0 0
  %1833 = vmatprep.subr.bf16.mxu0 0
  %1834 = vmatpush2.bf16.msra.mxu0 0
  %1835 = vmatprep.subr.bf16.mxu0 0
  %1836 = vmatpush2.bf16.msra.mxu0 0
  %1837 = vmatprep.subr.bf16.mxu0 0
  %1838 = vmatpush2.bf16.msra.mxu0 0
  %1839 = vmatprep.subr.bf16.mxu0 0
  %1840 = vmatpush2.bf16.msra.mxu0 0
  %1841 = vmatprep.subr.bf16.mxu0 0
  %1842 = vmatpush2.bf16.msra.mxu0 0
  %1843 = vmatprep.subr.bf16.mxu0 0
  %1844 = vmatpush2.bf16.msra.mxu0 0
  %1845 = vmatprep.mubr.bf16.mxu0 0
  %1846 = vmatmul.mubr.bf16.gmra.mxu0 %v1802
  %v1847 = vpop.f32.mrf.mxu0
  %v1848 = vadd.f32 0.0, %v1847
  %v1849 = vpop.f32.mrf.mxu0
  %v1850 = vpop.f32.mrf.mxu0
  %v1851 = vadd.f32 0.0, %v1850
  %v1852 = vpop.f32.mrf.mxu0
  %1853 = vmatprep.mubr.bf16.mxu0 0
  %1854 = vmatmul.mubr.bf16.gmra.mxu0 %v1805
  %v1855 = vpop.f32.mrf.mxu0
  %v1856 = vadd.f32 0.0, %v1855
  %v1857 = vpop.f32.mrf.mxu0
  %v1858 = vpop.f32.mrf.mxu0
  %v1859 = vadd.f32 0.0, %v1858
  %v1860 = vpop.f32.mrf.mxu0
  %1861 = vmatprep.mubr.bf16.mxu0 0
  %1862 = vmatmul.mubr.bf16.gmra.mxu0 %v1808
  %v1863 = vpop.f32.mrf.mxu0
  %v1864 = vadd.f32 0.0, %v1863
  %v1865 = vpop.f32.mrf.mxu0
  %v1866 = vpop.f32.mrf.mxu0
  %v1867 = vadd.f32 0.0, %v1866
  %v1868 = vpop.f32.mrf.mxu0
  %1869 = vmatprep.mubr.bf16.mxu0 0
  %1870 = vmatmul.mubr.bf16.gmra.mxu0 %v1811
  %v1871 = vpop.f32.mrf.mxu0
  %v1872 = vadd.f32 0.0, %v1871
  %v1873 = vpop.f32.mrf.mxu0
  %v1874 = vpop.f32.mrf.mxu0
  %v1875 = vadd.f32 0.0, %v1874
  %v1876 = vpop.f32.mrf.mxu0
  %1877 = vdwg.mxu0
  %v1878 = vadd.f32 %v1763, %v1848
  %v1879 = vadd.f32 %v1764, %v1851
  %v1880 = vadd.f32 %v1765, %v1856
  %v1881 = vadd.f32 %v1766, %v1859
  %v1882 = vadd.f32 %v1767, %v1864
  %v1883 = vadd.f32 %v1768, %v1867
  %v1884 = vadd.f32 %v1769, %v1872
  %v1885 = vadd.f32 %v1770, %v1875
  %v1886 = vld [vmem:[#allocation3 + $0x20] sm:$0x7]
  %s1887 = scalar_lea.vmem %s2, 80
  %v1888 = vld [vmem:[%s1887] sm:$0xf]
  %v1889 = vld [vmem:[%s1887 + $0x4] sm:$0xf]
  %v1890 = vld [vmem:[%s1887 + $0x8] sm:$0xf]
  %v1891 = vld [vmem:[%s1887 + $0xc] sm:$0xf]
  %v1893 = vunpack.c.l.b16 %v1886
  %v1894 = vpack.c.b16 %v1893, %v1893
  %v1896 = vshrl.u32 %v1779, 16
  %v1898 = vrot.slane %v1896, 2
  %v1899 = vshll.u32 %v1779, 16
  %v1901 = vrot.slane %v1899, 3
  %v1902 = vor.u32 %v1898, %v1901
  %v1903 = vrot.slane %v1323, 2
  %v1904 = vrot.slane %v1319, 3
  %v1905 = vor.u32 %v1903, %v1904
  %v1906 = vsel %vm311, %v1902, %v1905
  %v1907 = vrot.slane %v1331, 2
  %v1908 = vrot.slane %v1327, 3
  %v1909 = vor.u32 %v1907, %v1908
  %v1910 = vsel %vm311, %v1905, %v1909
  %v1911 = vrot.slane %v1339, 2
  %v1912 = vrot.slane %v1335, 3
  %v1913 = vor.u32 %v1911, %v1912
  %v1914 = vsel %vm311, %v1909, %v1913
  %v1916 = vshrl.u32 %v1894, 16
  %v1918 = vrot.slane %v1916, 2
  %v1919 = vshll.u32 %v1894, 16
  %v1921 = vrot.slane %v1919, 3
  %v1922 = vor.u32 %v1918, %v1921
  %v1923 = vsel %vm311, %v1913, %v1922
  %v1928 = vunpack.c.l.b16 %v1888
  %v1929 = vunpack.c.l.b16 %v1889
  %v1930 = vunpack.c.l.b16 %v1890
  %v1931 = vunpack.c.l.b16 %v1891
  %v1932 = vpack.c.b16 %v1929, %v1928
  %v1933 = vpack.c.b16 %v1931, %v1930
  %v1937 = vsel %vm610, %v1906, 0
  %v1940 = vsel %vm610, %v1910, 0
  %v1943 = vsel %vm610, %v1914, 0
  %v1946 = vsel %vm610, %v1923, 0
  %1948 = vmatprep.subr.bf16.mxu0 0
  %1949 = vmatpush1.bf16.msra.mxu0 0
  %1950 = vmatprep.subr.bf16.mxu0 0
  %1951 = vmatpush1.bf16.msra.mxu0 0
  %1952 = vmatprep.subr.bf16.mxu0 0
  %1953 = vmatpush1.bf16.msra.mxu0 0
  %1954 = vmatprep.subr.bf16.mxu0 0
  %1955 = vmatpush1.bf16.msra.mxu0 0
  %1956 = vmatprep.subr.bf16.mxu0 0
  %1957 = vmatpush1.bf16.msra.mxu0 0
  %1958 = vmatprep.subr.bf16.mxu0 0
  %1959 = vmatpush1.bf16.msra.mxu0 0
  %1960 = vmatprep.subr.bf16.mxu0 0
  %1961 = vmatpush1.bf16.msra.mxu0 %v1933
  %1962 = vmatprep.subr.bf16.mxu0 0
  %1963 = vmatpush1.bf16.msra.mxu0 %v1932
  %1964 = vmatprep.subr.bf16.mxu0 0
  %1965 = vmatpush2.bf16.msra.mxu0 0
  %1966 = vmatprep.subr.bf16.mxu0 0
  %1967 = vmatpush2.bf16.msra.mxu0 0
  %1968 = vmatprep.subr.bf16.mxu0 0
  %1969 = vmatpush2.bf16.msra.mxu0 0
  %1970 = vmatprep.subr.bf16.mxu0 0
  %1971 = vmatpush2.bf16.msra.mxu0 0
  %1972 = vmatprep.subr.bf16.mxu0 0
  %1973 = vmatpush2.bf16.msra.mxu0 0
  %1974 = vmatprep.subr.bf16.mxu0 0
  %1975 = vmatpush2.bf16.msra.mxu0 0
  %1976 = vmatprep.subr.bf16.mxu0 0
  %1977 = vmatpush2.bf16.msra.mxu0 0
  %1978 = vmatprep.subr.bf16.mxu0 0
  %1979 = vmatpush2.bf16.msra.mxu0 0
  %1980 = vmatprep.mubr.bf16.mxu0 0
  %1981 = vmatmul.mubr.bf16.gmra.mxu0 %v1937
  %v1982 = vpop.f32.mrf.mxu0
  %v1983 = vadd.f32 0.0, %v1982
  %v1984 = vpop.f32.mrf.mxu0
  %v1985 = vpop.f32.mrf.mxu0
  %v1986 = vadd.f32 0.0, %v1985
  %v1987 = vpop.f32.mrf.mxu0
  %1988 = vmatprep.mubr.bf16.mxu0 0
  %1989 = vmatmul.mubr.bf16.gmra.mxu0 %v1940
  %v1990 = vpop.f32.mrf.mxu0
  %v1991 = vadd.f32 0.0, %v1990
  %v1992 = vpop.f32.mrf.mxu0
  %v1993 = vpop.f32.mrf.mxu0
  %v1994 = vadd.f32 0.0, %v1993
  %v1995 = vpop.f32.mrf.mxu0
  %1996 = vmatprep.mubr.bf16.mxu0 0
  %1997 = vmatmul.mubr.bf16.gmra.mxu0 %v1943
  %v1998 = vpop.f32.mrf.mxu0
  %v1999 = vadd.f32 0.0, %v1998
  %v2000 = vpop.f32.mrf.mxu0
  %v2001 = vpop.f32.mrf.mxu0
  %v2002 = vadd.f32 0.0, %v2001
  %v2003 = vpop.f32.mrf.mxu0
  %2004 = vmatprep.mubr.bf16.mxu0 0
  %2005 = vmatmul.mubr.bf16.gmra.mxu0 %v1946
  %v2006 = vpop.f32.mrf.mxu0
  %v2007 = vadd.f32 0.0, %v2006
  %v2008 = vpop.f32.mrf.mxu0
  %v2009 = vpop.f32.mrf.mxu0
  %v2010 = vadd.f32 0.0, %v2009
  %v2011 = vpop.f32.mrf.mxu0
  %2012 = vdwg.mxu0
  %v2013 = vadd.f32 %v1878, %v1983
  %v2014 = vadd.f32 %v1879, %v1986
  %v2015 = vadd.f32 %v1880, %v1991
  %v2016 = vadd.f32 %v1881, %v1994
  %v2017 = vadd.f32 %v1882, %v1999
  %v2018 = vadd.f32 %v1883, %v2002
  %v2019 = vadd.f32 %v1884, %v2007
  %v2020 = vadd.f32 %v1885, %v2010
  %v2021 = vld [vmem:[#allocation3] sm:$0x8]
  %s2022 = scalar_lea.vmem %s2, 96
  %v2023 = vld [vmem:[%s2022] sm:$0xf]
  %v2024 = vld [vmem:[%s2022 + $0x4] sm:$0xf]
  %v2025 = vld [vmem:[%s2022 + $0x8] sm:$0xf]
  %v2026 = vld [vmem:[%s2022 + $0xc] sm:$0xf]
  %v2028 = vunpack.c.l.b16 %v2021
  %v2029 = vpack.c.b16 %v1298, %v2028
  %v2030 = vrot.slane %v2029, 3
  %v2031 = vrot.slane %v1307, 3
  %v2032 = vsel %vm376, %v2030, %v2031
  %v2033 = vrot.slane %v1308, 3
  %v2034 = vsel %vm376, %v2031, %v2033
  %v2035 = vrot.slane %v1309, 3
  %v2036 = vsel %vm376, %v2033, %v2035
  %v2037 = vrot.slane %v1894, 3
  %v2038 = vsel %vm376, %v2035, %v2037
  %v2043 = vunpack.c.l.b16 %v2023
  %v2044 = vunpack.c.l.b16 %v2024
  %v2045 = vunpack.c.l.b16 %v2025
  %v2046 = vunpack.c.l.b16 %v2026
  %v2047 = vpack.c.b16 %v2044, %v2043
  %v2048 = vpack.c.b16 %v2046, %v2045
  %v2052 = vsel %vm610, %v2032, 0
  %v2055 = vsel %vm610, %v2034, 0
  %v2058 = vsel %vm610, %v2036, 0
  %v2061 = vsel %vm610, %v2038, 0
  %2063 = vmatprep.subr.bf16.mxu0 0
  %2064 = vmatpush1.bf16.msra.mxu0 0
  %2065 = vmatprep.subr.bf16.mxu0 0
  %2066 = vmatpush1.bf16.msra.mxu0 0
  %2067 = vmatprep.subr.bf16.mxu0 0
  %2068 = vmatpush1.bf16.msra.mxu0 0
  %2069 = vmatprep.subr.bf16.mxu0 0
  %2070 = vmatpush1.bf16.msra.mxu0 0
  %2071 = vmatprep.subr.bf16.mxu0 0
  %2072 = vmatpush1.bf16.msra.mxu0 0
  %2073 = vmatprep.subr.bf16.mxu0 0
  %2074 = vmatpush1.bf16.msra.mxu0 0
  %2075 = vmatprep.subr.bf16.mxu0 0
  %2076 = vmatpush1.bf16.msra.mxu0 %v2048
  %2077 = vmatprep.subr.bf16.mxu0 0
  %2078 = vmatpush1.bf16.msra.mxu0 %v2047
  %2079 = vmatprep.subr.bf16.mxu0 0
  %2080 = vmatpush2.bf16.msra.mxu0 0
  %2081 = vmatprep.subr.bf16.mxu0 0
  %2082 = vmatpush2.bf16.msra.mxu0 0
  %2083 = vmatprep.subr.bf16.mxu0 0
  %2084 = vmatpush2.bf16.msra.mxu0 0
  %2085 = vmatprep.subr.bf16.mxu0 0
  %2086 = vmatpush2.bf16.msra.mxu0 0
  %2087 = vmatprep.subr.bf16.mxu0 0
  %2088 = vmatpush2.bf16.msra.mxu0 0
  %2089 = vmatprep.subr.bf16.mxu0 0
  %2090 = vmatpush2.bf16.msra.mxu0 0
  %2091 = vmatprep.subr.bf16.mxu0 0
  %2092 = vmatpush2.bf16.msra.mxu0 0
  %2093 = vmatprep.subr.bf16.mxu0 0
  %2094 = vmatpush2.bf16.msra.mxu0 0
  %2095 = vmatprep.mubr.bf16.mxu0 0
  %2096 = vmatmul.mubr.bf16.gmra.mxu0 %v2052
  %v2097 = vpop.f32.mrf.mxu0
  %v2098 = vadd.f32 0.0, %v2097
  %v2099 = vpop.f32.mrf.mxu0
  %v2100 = vpop.f32.mrf.mxu0
  %v2101 = vadd.f32 0.0, %v2100
  %v2102 = vpop.f32.mrf.mxu0
  %2103 = vmatprep.mubr.bf16.mxu0 0
  %2104 = vmatmul.mubr.bf16.gmra.mxu0 %v2055
  %v2105 = vpop.f32.mrf.mxu0
  %v2106 = vadd.f32 0.0, %v2105
  %v2107 = vpop.f32.mrf.mxu0
  %v2108 = vpop.f32.mrf.mxu0
  %v2109 = vadd.f32 0.0, %v2108
  %v2110 = vpop.f32.mrf.mxu0
  %2111 = vmatprep.mubr.bf16.mxu0 0
  %2112 = vmatmul.mubr.bf16.gmra.mxu0 %v2058
  %v2113 = vpop.f32.mrf.mxu0
  %v2114 = vadd.f32 0.0, %v2113
  %v2115 = vpop.f32.mrf.mxu0
  %v2116 = vpop.f32.mrf.mxu0
  %v2117 = vadd.f32 0.0, %v2116
  %v2118 = vpop.f32.mrf.mxu0
  %2119 = vmatprep.mubr.bf16.mxu0 0
  %2120 = vmatmul.mubr.bf16.gmra.mxu0 %v2061
  %v2121 = vpop.f32.mrf.mxu0
  %v2122 = vadd.f32 0.0, %v2121
  %v2123 = vpop.f32.mrf.mxu0
  %v2124 = vpop.f32.mrf.mxu0
  %v2125 = vadd.f32 0.0, %v2124
  %v2126 = vpop.f32.mrf.mxu0
  %2127 = vdwg.mxu0
  %v2128 = vadd.f32 %v2013, %v2098
  %v2129 = vadd.f32 %v2014, %v2101
  %v2130 = vadd.f32 %v2015, %v2106
  %v2131 = vadd.f32 %v2016, %v2109
  %v2132 = vadd.f32 %v2017, %v2114
  %v2133 = vadd.f32 %v2018, %v2117
  %v2134 = vadd.f32 %v2019, %v2122
  %v2135 = vadd.f32 %v2020, %v2125
  %v2136 = vld [vmem:[#allocation3 + $0x20] sm:$0xf]
  %s2137 = scalar_lea.vmem %s2, 112
  %v2138 = vld [vmem:[%s2137] sm:$0xf]
  %v2139 = vld [vmem:[%s2137 + $0x4] sm:$0xf]
  %v2140 = vld [vmem:[%s2137 + $0x8] sm:$0xf]
  %v2141 = vld [vmem:[%s2137 + $0xc] sm:$0xf]
  %v2143 = vunpack.c.l.b16 %v2136
  %v2144 = vpack.c.b16 %v2143, %v2143
  %v2146 = vshrl.u32 %v2029, 16
  %v2148 = vrot.slane %v2146, 3
  %v2149 = vshll.u32 %v2029, 16
  %v2151 = vrot.slane %v2149, 4
  %v2152 = vor.u32 %v2148, %v2151
  %v2153 = vrot.slane %v1323, 3
  %v2154 = vrot.slane %v1319, 4
  %v2155 = vor.u32 %v2153, %v2154
  %v2156 = vsel %vm413, %v2152, %v2155
  %v2157 = vrot.slane %v1331, 3
  %v2158 = vrot.slane %v1327, 4
  %v2159 = vor.u32 %v2157, %v2158
  %v2160 = vsel %vm413, %v2155, %v2159
  %v2161 = vrot.slane %v1339, 3
  %v2162 = vrot.slane %v1335, 4
  %v2163 = vor.u32 %v2161, %v2162
  %v2164 = vsel %vm413, %v2159, %v2163
  %v2166 = vshrl.u32 %v2144, 16
  %v2168 = vrot.slane %v2166, 3
  %v2169 = vshll.u32 %v2144, 16
  %v2171 = vrot.slane %v2169, 4
  %v2172 = vor.u32 %v2168, %v2171
  %v2173 = vsel %vm413, %v2163, %v2172
  %v2178 = vunpack.c.l.b16 %v2138
  %v2179 = vunpack.c.l.b16 %v2139
  %v2180 = vunpack.c.l.b16 %v2140
  %v2181 = vunpack.c.l.b16 %v2141
  %v2182 = vpack.c.b16 %v2179, %v2178
  %v2183 = vpack.c.b16 %v2181, %v2180
  %v2187 = vsel %vm610, %v2156, 0
  %v2190 = vsel %vm610, %v2160, 0
  %v2193 = vsel %vm610, %v2164, 0
  %v2196 = vsel %vm610, %v2173, 0
  %2198 = vmatprep.subr.bf16.mxu0 0
  %2199 = vmatpush1.bf16.msra.mxu0 0
  %2200 = vmatprep.subr.bf16.mxu0 0
  %2201 = vmatpush1.bf16.msra.mxu0 0
  %2202 = vmatprep.subr.bf16.mxu0 0
  %2203 = vmatpush1.bf16.msra.mxu0 0
  %2204 = vmatprep.subr.bf16.mxu0 0
  %2205 = vmatpush1.bf16.msra.mxu0 0
  %2206 = vmatprep.subr.bf16.mxu0 0
  %2207 = vmatpush1.bf16.msra.mxu0 0
  %2208 = vmatprep.subr.bf16.mxu0 0
  %2209 = vmatpush1.bf16.msra.mxu0 0
  %2210 = vmatprep.subr.bf16.mxu0 0
  %2211 = vmatpush1.bf16.msra.mxu0 %v2183
  %2212 = vmatprep.subr.bf16.mxu0 0
  %2213 = vmatpush1.bf16.msra.mxu0 %v2182
  %2214 = vmatprep.subr.bf16.mxu0 0
  %2215 = vmatpush2.bf16.msra.mxu0 0
  %2216 = vmatprep.subr.bf16.mxu0 0
  %2217 = vmatpush2.bf16.msra.mxu0 0
  %2218 = vmatprep.subr.bf16.mxu0 0
  %2219 = vmatpush2.bf16.msra.mxu0 0
  %2220 = vmatprep.subr.bf16.mxu0 0
  %2221 = vmatpush2.bf16.msra.mxu0 0
  %2222 = vmatprep.subr.bf16.mxu0 0
  %2223 = vmatpush2.bf16.msra.mxu0 0
  %2224 = vmatprep.subr.bf16.mxu0 0
  %2225 = vmatpush2.bf16.msra.mxu0 0
  %2226 = vmatprep.subr.bf16.mxu0 0
  %2227 = vmatpush2.bf16.msra.mxu0 0
  %2228 = vmatprep.subr.bf16.mxu0 0
  %2229 = vmatpush2.bf16.msra.mxu0 0
  %2230 = vmatprep.mubr.bf16.mxu0 0
  %2231 = vmatmul.mubr.bf16.gmra.mxu0 %v2187
  %v2232 = vpop.f32.mrf.mxu0
  %v2233 = vadd.f32 0.0, %v2232
  %v2234 = vpop.f32.mrf.mxu0
  %v2235 = vpop.f32.mrf.mxu0
  %v2236 = vadd.f32 0.0, %v2235
  %v2237 = vpop.f32.mrf.mxu0
  %2238 = vmatprep.mubr.bf16.mxu0 0
  %2239 = vmatmul.mubr.bf16.gmra.mxu0 %v2190
  %v2240 = vpop.f32.mrf.mxu0
  %v2241 = vadd.f32 0.0, %v2240
  %v2242 = vpop.f32.mrf.mxu0
  %v2243 = vpop.f32.mrf.mxu0
  %v2244 = vadd.f32 0.0, %v2243
  %v2245 = vpop.f32.mrf.mxu0
  %2246 = vmatprep.mubr.bf16.mxu0 0
  %2247 = vmatmul.mubr.bf16.gmra.mxu0 %v2193
  %v2248 = vpop.f32.mrf.mxu0
  %v2249 = vadd.f32 0.0, %v2248
  %v2250 = vpop.f32.mrf.mxu0
  %v2251 = vpop.f32.mrf.mxu0
  %v2252 = vadd.f32 0.0, %v2251
  %v2253 = vpop.f32.mrf.mxu0
  %2254 = vmatprep.mubr.bf16.mxu0 0
  %2255 = vmatmul.mubr.bf16.gmra.mxu0 %v2196
  %v2256 = vpop.f32.mrf.mxu0
  %v2257 = vadd.f32 0.0, %v2256
  %v2258 = vpop.f32.mrf.mxu0
  %v2259 = vpop.f32.mrf.mxu0
  %v2260 = vadd.f32 0.0, %v2259
  %v2261 = vpop.f32.mrf.mxu0
  %2262 = vdwg.mxu0
  %v2263 = vadd.f32 %v2128, %v2233
  %v2264 = vadd.f32 %v2129, %v2236
  %v2265 = vadd.f32 %v2130, %v2241
  %v2266 = vadd.f32 %v2131, %v2244
  %v2267 = vadd.f32 %v2132, %v2249
  %v2268 = vadd.f32 %v2133, %v2252
  %v2269 = vadd.f32 %v2134, %v2257
  %v2270 = vadd.f32 %v2135, %v2260
  %vm2271 = vcmp.lt.s32.totalorder %v725, 0
  %v2272 = vsub.s32 0, %v725
  %v2273 = vsel %vm2271, %v2272, %v725
  %v2274 = vshrl.u32 %v2273, 5
  %v2275 = vand.u32 %v2273, 31
  %v2276 = vsub.s32 0, %v2275
  %v2277 = vsel %vm2271, %v2276, %v2275
  %vm2278 = vcmp.lt.s32.totalorder %v726, 0
  %v2279 = vsub.s32 0, %v726
  %v2280 = vsel %vm2278, %v2279, %v726
  %v2281 = vshrl.u32 %v2280, 5
  %v2282 = vand.u32 %v2280, 31
  %v2283 = vsub.s32 0, %v2282
  %v2284 = vsel %vm2278, %v2283, %v2282
  %vm2285 = vcmp.lt.s32.totalorder %v727, 0
  %v2286 = vsub.s32 0, %v727
  %v2287 = vsel %vm2285, %v2286, %v727
  %v2288 = vshrl.u32 %v2287, 5
  %v2289 = vand.u32 %v2287, 31
  %v2290 = vsub.s32 0, %v2289
  %v2291 = vsel %vm2285, %v2290, %v2289
  %vm2292 = vcmp.lt.s32.totalorder %v728, 0
  %v2293 = vsub.s32 0, %v728
  %v2294 = vsel %vm2292, %v2293, %v728
  %v2295 = vshrl.u32 %v2294, 5
  %v2296 = vand.u32 %v2294, 31
  %v2297 = vsub.s32 0, %v2296
  %v2298 = vsel %vm2292, %v2297, %v2296
  %vm2299 = vcmp.lt.s32.totalorder %v729, 0
  %v2300 = vsub.s32 0, %v729
  %v2301 = vsel %vm2299, %v2300, %v729
  %v2302 = vshrl.u32 %v2301, 5
  %v2303 = vand.u32 %v2301, 31
  %v2304 = vsub.s32 0, %v2303
  %v2305 = vsel %vm2299, %v2304, %v2303
  %vm2306 = vcmp.lt.s32.totalorder %v730, 0
  %v2307 = vsub.s32 0, %v730
  %v2308 = vsel %vm2306, %v2307, %v730
  %v2309 = vshrl.u32 %v2308, 5
  %v2310 = vand.u32 %v2308, 31
  %v2311 = vsub.s32 0, %v2310
  %v2312 = vsel %vm2306, %v2311, %v2310
  %vm2313 = vcmp.lt.s32.totalorder %v731, 0
  %v2314 = vsub.s32 0, %v731
  %v2315 = vsel %vm2313, %v2314, %v731
  %v2316 = vshrl.u32 %v2315, 5
  %v2317 = vand.u32 %v2315, 31
  %v2318 = vsub.s32 0, %v2317
  %v2319 = vsel %vm2313, %v2318, %v2317
  %vm2320 = vcmp.lt.s32.totalorder %v732, 0
  %v2321 = vsub.s32 0, %v732
  %v2322 = vsel %vm2320, %v2321, %v732
  %v2323 = vshrl.u32 %v2322, 5
  %v2324 = vand.u32 %v2322, 31
  %v2325 = vsub.s32 0, %v2324
  %v2326 = vsel %vm2320, %v2325, %v2324
  %vm2327 = vcmp.ne.s32.totalorder %v2277, 0
  %vm2328 = vcmp.ne.s32.totalorder %v2284, 0
  %vm2329 = vcmp.ne.s32.totalorder %v2291, 0
  %vm2330 = vcmp.ne.s32.totalorder %v2298, 0
  %vm2331 = vcmp.ne.s32.totalorder %v2305, 0
  %vm2332 = vcmp.ne.s32.totalorder %v2312, 0
  %vm2333 = vcmp.ne.s32.totalorder %v2319, 0
  %vm2334 = vcmp.ne.s32.totalorder %v2326, 0
  %vm2335 = vcmp.lt.s32.totalorder %v2277, 0
  %vm2336 = vcmp.lt.s32.totalorder %v2284, 0
  %vm2337 = vcmp.lt.s32.totalorder %v2291, 0
  %vm2338 = vcmp.lt.s32.totalorder %v2298, 0
  %vm2339 = vcmp.lt.s32.totalorder %v2305, 0
  %vm2340 = vcmp.lt.s32.totalorder %v2312, 0
  %vm2341 = vcmp.lt.s32.totalorder %v2319, 0
  %vm2342 = vcmp.lt.s32.totalorder %v2326, 0
  %vm2343 = vmand %vm2335, %vm2327
  %vm2344 = vmand %vm2336, %vm2328
  %vm2345 = vmand %vm2337, %vm2329
  %vm2346 = vmand %vm2338, %vm2330
  %vm2347 = vmand %vm2339, %vm2331
  %vm2348 = vmand %vm2340, %vm2332
  %vm2349 = vmand %vm2341, %vm2333
  %vm2350 = vmand %vm2342, %vm2334
  %v2351 = vadd.s32 %v2277, 32
  %v2352 = vadd.s32 %v2284, 32
  %v2353 = vadd.s32 %v2291, 32
  %v2354 = vadd.s32 %v2298, 32
  %v2355 = vadd.s32 %v2305, 32
  %v2356 = vadd.s32 %v2312, 32
  %v2357 = vadd.s32 %v2319, 32
  %v2358 = vadd.s32 %v2326, 32
  %v2359 = vsel %vm2343, %v2351, %v2277
  %v2360 = vsel %vm2344, %v2352, %v2284
  %v2361 = vsel %vm2345, %v2353, %v2291
  %v2362 = vsel %vm2346, %v2354, %v2298
  %v2363 = vsel %vm2347, %v2355, %v2305
  %v2364 = vsel %vm2348, %v2356, %v2312
  %v2365 = vsel %vm2349, %v2357, %v2319
  %v2366 = vsel %vm2350, %v2358, %v2326
  %vm2367 = vcmp.lt.s32.totalorder %v2359, 10
  %vm2368 = vcmp.lt.s32.totalorder %v2360, 10
  %vm2369 = vcmp.lt.s32.totalorder %v2361, 10
  %vm2370 = vcmp.lt.s32.totalorder %v2362, 10
  %vm2371 = vcmp.lt.s32.totalorder %v2363, 10
  %vm2372 = vcmp.lt.s32.totalorder %v2364, 10
  %vm2373 = vcmp.lt.s32.totalorder %v2365, 10
  %vm2374 = vcmp.lt.s32.totalorder %v2366, 10
  %v2375 = vsel %vm2367, 1, 0
  %v2376 = vsel %vm2368, 1, 0
  %v2377 = vsel %vm2369, 1, 0
  %v2378 = vsel %vm2370, 1, 0
  %v2379 = vsel %vm2371, 1, 0
  %v2380 = vsel %vm2372, 1, 0
  %v2381 = vsel %vm2373, 1, 0
  %v2382 = vsel %vm2374, 1, 0
  %vm2383 = vcmp.eq.s32.totalorder %v2375, 1
  %vm2384 = vcmp.eq.s32.totalorder %v2376, 1
  %vm2385 = vcmp.eq.s32.totalorder %v2377, 1
  %vm2386 = vcmp.eq.s32.totalorder %v2378, 1
  %vm2387 = vcmp.eq.s32.totalorder %v2379, 1
  %vm2388 = vcmp.eq.s32.totalorder %v2380, 1
  %vm2389 = vcmp.eq.s32.totalorder %v2381, 1
  %vm2390 = vcmp.eq.s32.totalorder %v2382, 1
  %v2391 = vsel %vm2383, %v2263, 0.0
  %v2392 = vsel %vm2384, %v2264, 0.0
  %v2393 = vsel %vm2385, %v2265, 0.0
  %v2394 = vsel %vm2386, %v2266, 0.0
  %v2395 = vsel %vm2387, %v2267, 0.0
  %v2396 = vsel %vm2388, %v2268, 0.0
  %v2397 = vsel %vm2389, %v2269, 0.0
  %v2398 = vsel %vm2390, %v2270, 0.0
  %vm2399 = vcmask 523264
  %v2400 = vsel %vm2399, %v2391, 0.0
  %v2401 = vsel %vm2399, %v2392, 0.0
  %v2402 = vadd.f32 %v2400, %v2401
  %v2403 = vsel %vm2399, %v2393, 0.0
  %v2404 = vadd.f32 %v2402, %v2403
  %v2405 = vsel %vm2399, %v2394, 0.0
  %v2406 = vadd.f32 %v2404, %v2405
  %v2407 = vsel %vm2399, %v2395, 0.0
  %v2408 = vadd.f32 %v2406, %v2407
  %v2409 = vsel %vm2399, %v2396, 0.0
  %v2410 = vadd.f32 %v2408, %v2409
  %v2411 = vsel %vm2399, %v2397, 0.0
  %v2412 = vadd.f32 %v2410, %v2411
  %v2413 = vsel %vm2399, %v2398, 0.0
  %v2414 = vadd.f32 %v2412, %v2413
  %v2415 = vrot.slane %v2414, 4
  %v2416 = vadd.f32 %v2414, %v2415
  %v2417 = vrot.slane %v2416, 2
  %v2418 = vadd.f32 %v2416, %v2417
  %v2419 = vrot.slane %v2418, 1
  %v2420 = vadd.f32 %v2418, %v2419
  %v2421 = vmul.f32 %v2420, 0.05
  %v2422 = vsub.f32 %v2263, %v2421
  %v2423 = vsub.f32 %v2264, %v2421
  %v2424 = vsub.f32 %v2265, %v2421
  %v2425 = vsub.f32 %v2266, %v2421
  %v2426 = vsub.f32 %v2267, %v2421
  %v2427 = vsub.f32 %v2268, %v2421
  %v2428 = vsub.f32 %v2269, %v2421
  %v2429 = vsub.f32 %v2270, %v2421
  %v2430 = vsel %vm2383, %v2422, 0.0
  %v2431 = vsel %vm2384, %v2423, 0.0
  %v2432 = vsel %vm2385, %v2424, 0.0
  %v2433 = vsel %vm2386, %v2425, 0.0
  %v2434 = vsel %vm2387, %v2426, 0.0
  %v2435 = vsel %vm2388, %v2427, 0.0
  %v2436 = vsel %vm2389, %v2428, 0.0
  %v2437 = vsel %vm2390, %v2429, 0.0
  %v2438 = vmul.f32 %v2430, %v2430
  %v2439 = vmul.f32 %v2431, %v2431
  %v2440 = vmul.f32 %v2432, %v2432
  %v2441 = vmul.f32 %v2433, %v2433
  %v2442 = vmul.f32 %v2434, %v2434
  %v2443 = vmul.f32 %v2435, %v2435
  %v2444 = vmul.f32 %v2436, %v2436
  %v2445 = vmul.f32 %v2437, %v2437
  %v2446 = vsel %vm2399, %v2438, 0.0
  %v2447 = vsel %vm2399, %v2439, 0.0
  %v2448 = vadd.f32 %v2446, %v2447
  %v2449 = vsel %vm2399, %v2440, 0.0
  %v2450 = vadd.f32 %v2448, %v2449
  %v2451 = vsel %vm2399, %v2441, 0.0
  %v2452 = vadd.f32 %v2450, %v2451
  %v2453 = vsel %vm2399, %v2442, 0.0
  %v2454 = vadd.f32 %v2452, %v2453
  %v2455 = vsel %vm2399, %v2443, 0.0
  %v2456 = vadd.f32 %v2454, %v2455
  %v2457 = vsel %vm2399, %v2444, 0.0
  %v2458 = vadd.f32 %v2456, %v2457
  %v2459 = vsel %vm2399, %v2445, 0.0
  %v2460 = vadd.f32 %v2458, %v2459
  %v2461 = vrot.slane %v2460, 4
  %v2462 = vadd.f32 %v2460, %v2461
  %v2463 = vrot.slane %v2462, 2
  %v2464 = vadd.f32 %v2462, %v2463
  %v2465 = vrot.slane %v2464, 1
  %v2466 = vadd.f32 %v2464, %v2465
  %v2467 = vmul.f32 %v2466, 0.05
  %v2468 = vadd.f32 %v2467, 1e-05
  %v2469 = vrsqrt.pop %v2468
  %v2470 = vmul.f32 %v2422, %v2469
  %v2471 = vmul.f32 %v2423, %v2469
  %v2472 = vmul.f32 %v2424, %v2469
  %v2473 = vmul.f32 %v2425, %v2469
  %v2474 = vmul.f32 %v2426, %v2469
  %v2475 = vmul.f32 %v2427, %v2469
  %v2476 = vmul.f32 %v2428, %v2469
  %v2477 = vmul.f32 %v2429, %v2469
  %v2478 = vmax.f32 %v2470, 0.0
  %v2479 = vmax.f32 %v2471, 0.0
  %v2480 = vmax.f32 %v2472, 0.0
  %v2481 = vmax.f32 %v2473, 0.0
  %v2482 = vmax.f32 %v2474, 0.0
  %v2483 = vmax.f32 %v2475, 0.0
  %v2484 = vmax.f32 %v2476, 0.0
  %v2485 = vmax.f32 %v2477, 0.0
  %v2486 = vsel %vm2383, %v2478, 0.0
  %v2487 = vsel %vm2384, %v2479, 0.0
  %v2488 = vsel %vm2385, %v2480, 0.0
  %v2489 = vsel %vm2386, %v2481, 0.0
  %v2490 = vsel %vm2387, %v2482, 0.0
  %v2491 = vsel %vm2388, %v2483, 0.0
  %v2492 = vsel %vm2389, %v2484, 0.0
  %v2493 = vsel %vm2390, %v2485, 0.0
  %2494 = vst.msk [vmem:[#allocation4] sm:$0xff] %vm2399, 0.0
  %2495 = vst.msk [vmem:[#allocation4 + $0x8] sm:$0xff] %vm2399, 0.0
  %2496 = vst.msk [vmem:[#allocation4 + $0x9] sm:$0xff] %vm2399, %v2486
  %2497 = vst.msk [vmem:[#allocation4 + $0x11] sm:$0xff] %vm2399, %v2487
  %2498 = vst.msk [vmem:[#allocation4 + $0x19] sm:$0xff] %vm2399, %v2488
  %2499 = vst.msk [vmem:[#allocation4 + $0x21] sm:$0xff] %vm2399, %v2489
  %2500 = vst.msk [vmem:[#allocation4 + $0x29] sm:$0xff] %vm2399, %v2490
  %2501 = vst.msk [vmem:[#allocation4 + $0x31] sm:$0xff] %vm2399, %v2491
  %2502 = vst.msk [vmem:[#allocation4 + $0x39] sm:$0xff] %vm2399, %v2492
  %2503 = vst.msk [vmem:[#allocation4 + $0x41] sm:$0xff] %vm2399, %v2493
  %v2504 = vld [vmem:[#allocation4] ss:$2 sm:$0xff]
  %s2505 = scalar_lea.vmem [#allocation4], 16
  %v2506 = vld [vmem:[%s2505] ss:$2 sm:$0xff]
  %s2507 = scalar_lea.vmem [#allocation4], 32
  %v2508 = vld [vmem:[%s2507] ss:$2 sm:$0xff]
  %s2509 = scalar_lea.vmem [#allocation4], 48
  %v2510 = vld [vmem:[%s2509] ss:$2 sm:$0xff]
  %s2511 = scalar_lea.vmem [#allocation4], 1
  %v2512 = vld [vmem:[%s2511] ss:$2 sm:$0xff]
  %s2513 = scalar_lea.vmem [#allocation4], 17
  %v2514 = vld [vmem:[%s2513] ss:$2 sm:$0xff]
  %s2515 = scalar_lea.vmem [#allocation4], 33
  %v2516 = vld [vmem:[%s2515] ss:$2 sm:$0xff]
  %s2517 = scalar_lea.vmem [#allocation4], 49
  %v2518 = vld [vmem:[%s2517] ss:$2 sm:$0xff]
  %v2519 = vmax.f32 %v2504, %v2512
  %v2520 = vmax.f32 %v2506, %v2514
  %v2521 = vmax.f32 %v2508, %v2516
  %v2522 = vmax.f32 %v2510, %v2518
  %v2523 = vpack.c.bf16 %v2520, %v2519
  %v2524 = vpack.c.bf16 %v2522, %v2521
  %v2527 = vunpack.c.l.b16 %v2523
  %v2528 = vunpack.c.h.b16 %v2523
  %v2529 = vunpack.c.l.b16 %v2524
  %v2530 = vunpack.c.h.b16 %v2524
  %v2531 = vpack.c.b16 %v2527, %v2527
  %v2532 = vpack.c.b16 %v2528, %v2528
  %v2533 = vpack.c.b16 %v2529, %v2529
  %v2534 = vpack.c.b16 %v2530, %v2530
  %vm2539 = vcmask 519168
  %2540 = vst.msk [vmem:[#allocation5] sm:$0xf] %vm2539, %v2531
  %2541 = vst.msk [vmem:[#allocation5 + $0x4] sm:$0xf] %vm2539, %v2532
  %2542 = vst.msk [vmem:[#allocation5 + $0x8] sm:$0xf] %vm2539, %v2533
  %2543 = vst.msk [vmem:[#allocation5 + $0xc] sm:$0xf] %vm2539, %v2534
  %2544 = vst.msk [vmem:[#allocation5 + $0x10] sm:$0xf] %vm2539, 0
  %v2545 = vld [vmem:[#allocation5] sm:$0xf]
  %v2546 = vld [vmem:[#allocation5 + $0x4] sm:$0xf]
  %v2547 = vld [vmem:[#allocation5 + $0x8] sm:$0xf]
  %v2548 = vld [vmem:[#allocation5 + $0xc] sm:$0xf]
  %v2549 = vld [vmem:[%s3] sm:$0xf]
  %v2550 = vld [vmem:[%s3 + $0x4] sm:$0xf]
  %v2551 = vld [vmem:[%s3 + $0x8] sm:$0xf]
  %v2552 = vld [vmem:[%s3 + $0xc] sm:$0xf]
  %v2553 = vld [vmem:[%s3 + $0x10] sm:$0xf]
  %v2554 = vld [vmem:[%s3 + $0x14] sm:$0xf]
  %v2555 = vld [vmem:[%s3 + $0x18] sm:$0xf]
  %v2556 = vld [vmem:[%s3 + $0x1c] sm:$0xf]
  %v2557 = vld [vmem:[#allocation5 + $0x10] sm:$0x1]
  %s2558 = scalar_lea.vmem %s3, 32
  %v2559 = vld [vmem:[%s2558] sm:$0xf]
  %v2560 = vld [vmem:[%s2558 + $0x4] sm:$0xf]
  %v2561 = vld [vmem:[%s2558 + $0x8] sm:$0xf]
  %v2562 = vld [vmem:[%s2558 + $0xc] sm:$0xf]
  %v2563 = vld [vmem:[%s2558 + $0x10] sm:$0xf]
  %v2564 = vld [vmem:[%s2558 + $0x14] sm:$0xf]
  %v2565 = vld [vmem:[%s2558 + $0x18] sm:$0xf]
  %v2566 = vld [vmem:[%s2558 + $0x1c] sm:$0xf]
  %v2572 = vunpack.c.l.b16 %v2545
  %v2573 = vunpack.c.l.b16 %v2546
  %v2574 = vunpack.c.l.b16 %v2547
  %v2575 = vunpack.c.l.b16 %v2548
  %v2576 = vunpack.c.l.b16 %v2557
  %v2577 = vpack.c.b16 %v2573, %v2572
  %v2578 = vpack.c.b16 %v2575, %v2574
  %v2579 = vpack.c.b16 %v2576, %v2576
  %v2581 = vshrl.u32 %v2577, 16
  %v2583 = vshll.u32 %v2577, 16
  %v2585 = vrot.slane %v2583, 1
  %v2586 = vor.u32 %v2581, %v2585
  %v2588 = vshll.u32 %v2578, 16
  %v2590 = vrot.slane %v2588, 1
  %v2591 = vsel %vm84, %v2586, %v2590
  %v2592 = vshrl.u32 %v2578, 16
  %v2594 = vor.u32 %v2592, %v2590
  %v2596 = vshll.u32 %v2579, 16
  %v2598 = vrot.slane %v2596, 1
  %v2599 = vsel %vm84, %v2594, %v2598
  %v2608 = vunpack.c.l.b16 %v2559
  %v2609 = vunpack.c.l.b16 %v2560
  %v2610 = vunpack.c.l.b16 %v2561
  %v2611 = vunpack.c.l.b16 %v2562
  %v2612 = vunpack.c.l.b16 %v2563
  %v2613 = vunpack.c.l.b16 %v2564
  %v2614 = vunpack.c.l.b16 %v2565
  %v2615 = vunpack.c.l.b16 %v2566
  %v2616 = vpack.c.b16 %v2609, %v2608
  %v2617 = vpack.c.b16 %v2611, %v2610
  %v2618 = vpack.c.b16 %v2613, %v2612
  %v2619 = vpack.c.b16 %v2615, %v2614
  %v2625 = vsel %vm2399, %v2591, 0
  %v2628 = vsel %vm2399, %v2599, 0
  %2630 = vmatprep.subr.bf16.mxu0 0
  %2631 = vmatpush1.bf16.msra.mxu0 0
  %2632 = vmatprep.subr.bf16.mxu0 0
  %2633 = vmatpush1.bf16.msra.mxu0 0
  %2634 = vmatprep.subr.bf16.mxu0 0
  %2635 = vmatpush1.bf16.msra.mxu0 0
  %2636 = vmatprep.subr.bf16.mxu0 0
  %2637 = vmatpush1.bf16.msra.mxu0 0
  %2638 = vmatprep.subr.bf16.mxu0 0
  %2639 = vmatpush1.bf16.msra.mxu0 %v2619
  %2640 = vmatprep.subr.bf16.mxu0 0
  %2641 = vmatpush1.bf16.msra.mxu0 %v2618
  %2642 = vmatprep.subr.bf16.mxu0 0
  %2643 = vmatpush1.bf16.msra.mxu0 %v2617
  %2644 = vmatprep.subr.bf16.mxu0 0
  %2645 = vmatpush1.bf16.msra.mxu0 %v2616
  %2646 = vmatprep.subr.bf16.mxu0 0
  %2647 = vmatpush2.bf16.msra.mxu0 0
  %2648 = vmatprep.subr.bf16.mxu0 0
  %2649 = vmatpush2.bf16.msra.mxu0 0
  %2650 = vmatprep.subr.bf16.mxu0 0
  %2651 = vmatpush2.bf16.msra.mxu0 0
  %2652 = vmatprep.subr.bf16.mxu0 0
  %2653 = vmatpush2.bf16.msra.mxu0 0
  %2654 = vmatprep.subr.bf16.mxu0 0
  %2655 = vmatpush2.bf16.msra.mxu0 0
  %2656 = vmatprep.subr.bf16.mxu0 0
  %2657 = vmatpush2.bf16.msra.mxu0 0
  %2658 = vmatprep.subr.bf16.mxu0 0
  %2659 = vmatpush2.bf16.msra.mxu0 0
  %2660 = vmatprep.subr.bf16.mxu0 0
  %2661 = vmatpush2.bf16.msra.mxu0 0
  %2662 = vmatprep.mubr.bf16.mxu0 0
  %2663 = vmatmul.mubr.bf16.gmra.mxu0 %v2625
  %v2664 = vpop.f32.mrf.mxu0
  %v2665 = vadd.f32 0.0, %v2664
  %v2666 = vpop.f32.mrf.mxu0
  %v2667 = vpop.f32.mrf.mxu0
  %v2668 = vadd.f32 0.0, %v2667
  %v2669 = vpop.f32.mrf.mxu0
  %2670 = vmatprep.mubr.bf16.mxu0 0
  %2671 = vmatmul.mubr.bf16.gmra.mxu0 %v2628
  %v2672 = vpop.f32.mrf.mxu0
  %v2673 = vadd.f32 0.0, %v2672
  %v2674 = vpop.f32.mrf.mxu0
  %v2675 = vpop.f32.mrf.mxu0
  %v2676 = vadd.f32 0.0, %v2675
  %v2677 = vpop.f32.mrf.mxu0
  %2678 = vdwg.mxu0
  %v2687 = vunpack.c.l.b16 %v2549
  %v2688 = vunpack.c.l.b16 %v2550
  %v2689 = vunpack.c.l.b16 %v2551
  %v2690 = vunpack.c.l.b16 %v2552
  %v2691 = vunpack.c.l.b16 %v2553
  %v2692 = vunpack.c.l.b16 %v2554
  %v2693 = vunpack.c.l.b16 %v2555
  %v2694 = vunpack.c.l.b16 %v2556
  %v2695 = vpack.c.b16 %v2688, %v2687
  %v2696 = vpack.c.b16 %v2690, %v2689
  %v2697 = vpack.c.b16 %v2692, %v2691
  %v2698 = vpack.c.b16 %v2694, %v2693
  %v2703 = vsel %vm2399, %v2577, 0
  %v2705 = vsel %vm2399, %v2578, 0
  %2707 = vmatprep.subr.bf16.mxu0 0
  %2708 = vmatpush1.bf16.msra.mxu0 0
  %2709 = vmatprep.subr.bf16.mxu0 0
  %2710 = vmatpush1.bf16.msra.mxu0 0
  %2711 = vmatprep.subr.bf16.mxu0 0
  %2712 = vmatpush1.bf16.msra.mxu0 0
  %2713 = vmatprep.subr.bf16.mxu0 0
  %2714 = vmatpush1.bf16.msra.mxu0 0
  %2715 = vmatprep.subr.bf16.mxu0 0
  %2716 = vmatpush1.bf16.msra.mxu0 %v2698
  %2717 = vmatprep.subr.bf16.mxu0 0
  %2718 = vmatpush1.bf16.msra.mxu0 %v2697
  %2719 = vmatprep.subr.bf16.mxu0 0
  %2720 = vmatpush1.bf16.msra.mxu0 %v2696
  %2721 = vmatprep.subr.bf16.mxu0 0
  %2722 = vmatpush1.bf16.msra.mxu0 %v2695
  %2723 = vmatprep.subr.bf16.mxu0 0
  %2724 = vmatpush2.bf16.msra.mxu0 0
  %2725 = vmatprep.subr.bf16.mxu0 0
  %2726 = vmatpush2.bf16.msra.mxu0 0
  %2727 = vmatprep.subr.bf16.mxu0 0
  %2728 = vmatpush2.bf16.msra.mxu0 0
  %2729 = vmatprep.subr.bf16.mxu0 0
  %2730 = vmatpush2.bf16.msra.mxu0 0
  %2731 = vmatprep.subr.bf16.mxu0 0
  %2732 = vmatpush2.bf16.msra.mxu0 0
  %2733 = vmatprep.subr.bf16.mxu0 0
  %2734 = vmatpush2.bf16.msra.mxu0 0
  %2735 = vmatprep.subr.bf16.mxu0 0
  %2736 = vmatpush2.bf16.msra.mxu0 0
  %2737 = vmatprep.subr.bf16.mxu0 0
  %2738 = vmatpush2.bf16.msra.mxu0 0
  %2739 = vmatprep.mubr.bf16.mxu0 0
  %2740 = vmatmul.mubr.bf16.gmra.mxu0 %v2703
  %v2741 = vpop.f32.mrf.mxu0
  %v2742 = vadd.f32 %v2665, %v2741
  %v2743 = vpop.f32.mrf.mxu0
  %v2744 = vpop.f32.mrf.mxu0
  %v2745 = vadd.f32 %v2668, %v2744
  %v2746 = vpop.f32.mrf.mxu0
  %2747 = vmatprep.mubr.bf16.mxu0 0
  %2748 = vmatmul.mubr.bf16.gmra.mxu0 %v2705
  %v2749 = vpop.f32.mrf.mxu0
  %v2750 = vadd.f32 %v2673, %v2749
  %v2751 = vpop.f32.mrf.mxu0
  %v2752 = vpop.f32.mrf.mxu0
  %v2753 = vadd.f32 %v2676, %v2752
  %v2754 = vpop.f32.mrf.mxu0
  %2755 = vdwg.mxu0
  %v2756 = vld [vmem:[#allocation5] sm:$0xe]
  %s2757 = scalar_lea.vmem %s3, 64
  %v2758 = vld [vmem:[%s2757] sm:$0xf]
  %v2759 = vld [vmem:[%s2757 + $0x4] sm:$0xf]
  %v2760 = vld [vmem:[%s2757 + $0x8] sm:$0xf]
  %v2761 = vld [vmem:[%s2757 + $0xc] sm:$0xf]
  %v2762 = vld [vmem:[%s2757 + $0x10] sm:$0xf]
  %v2763 = vld [vmem:[%s2757 + $0x14] sm:$0xf]
  %v2764 = vld [vmem:[%s2757 + $0x18] sm:$0xf]
  %v2765 = vld [vmem:[%s2757 + $0x1c] sm:$0xf]
  %v2767 = vunpack.c.l.b16 %v2756
  %v2768 = vpack.c.b16 %v2573, %v2767
  %v2769 = vrot.slane %v2768, 1
  %v2770 = vrot.slane %v2578, 1
  %v2771 = vsel %vm172, %v2769, %v2770
  %v2772 = vrot.slane %v2579, 1
  %v2773 = vsel %vm172, %v2770, %v2772
  %v2782 = vunpack.c.l.b16 %v2758
  %v2783 = vunpack.c.l.b16 %v2759
  %v2784 = vunpack.c.l.b16 %v2760
  %v2785 = vunpack.c.l.b16 %v2761
  %v2786 = vunpack.c.l.b16 %v2762
  %v2787 = vunpack.c.l.b16 %v2763
  %v2788 = vunpack.c.l.b16 %v2764
  %v2789 = vunpack.c.l.b16 %v2765
  %v2790 = vpack.c.b16 %v2783, %v2782
  %v2791 = vpack.c.b16 %v2785, %v2784
  %v2792 = vpack.c.b16 %v2787, %v2786
  %v2793 = vpack.c.b16 %v2789, %v2788
  %v2799 = vsel %vm2399, %v2771, 0
  %v2802 = vsel %vm2399, %v2773, 0
  %2804 = vmatprep.subr.bf16.mxu0 0
  %2805 = vmatpush1.bf16.msra.mxu0 0
  %2806 = vmatprep.subr.bf16.mxu0 0
  %2807 = vmatpush1.bf16.msra.mxu0 0
  %2808 = vmatprep.subr.bf16.mxu0 0
  %2809 = vmatpush1.bf16.msra.mxu0 0
  %2810 = vmatprep.subr.bf16.mxu0 0
  %2811 = vmatpush1.bf16.msra.mxu0 0
  %2812 = vmatprep.subr.bf16.mxu0 0
  %2813 = vmatpush1.bf16.msra.mxu0 %v2793
  %2814 = vmatprep.subr.bf16.mxu0 0
  %2815 = vmatpush1.bf16.msra.mxu0 %v2792
  %2816 = vmatprep.subr.bf16.mxu0 0
  %2817 = vmatpush1.bf16.msra.mxu0 %v2791
  %2818 = vmatprep.subr.bf16.mxu0 0
  %2819 = vmatpush1.bf16.msra.mxu0 %v2790
  %2820 = vmatprep.subr.bf16.mxu0 0
  %2821 = vmatpush2.bf16.msra.mxu0 0
  %2822 = vmatprep.subr.bf16.mxu0 0
  %2823 = vmatpush2.bf16.msra.mxu0 0
  %2824 = vmatprep.subr.bf16.mxu0 0
  %2825 = vmatpush2.bf16.msra.mxu0 0
  %2826 = vmatprep.subr.bf16.mxu0 0
  %2827 = vmatpush2.bf16.msra.mxu0 0
  %2828 = vmatprep.subr.bf16.mxu0 0
  %2829 = vmatpush2.bf16.msra.mxu0 0
  %2830 = vmatprep.subr.bf16.mxu0 0
  %2831 = vmatpush2.bf16.msra.mxu0 0
  %2832 = vmatprep.subr.bf16.mxu0 0
  %2833 = vmatpush2.bf16.msra.mxu0 0
  %2834 = vmatprep.subr.bf16.mxu0 0
  %2835 = vmatpush2.bf16.msra.mxu0 0
  %2836 = vmatprep.mubr.bf16.mxu0 0
  %2837 = vmatmul.mubr.bf16.gmra.mxu0 %v2799
  %v2838 = vpop.f32.mrf.mxu0
  %v2839 = vadd.f32 0.0, %v2838
  %v2840 = vpop.f32.mrf.mxu0
  %v2841 = vpop.f32.mrf.mxu0
  %v2842 = vadd.f32 0.0, %v2841
  %v2843 = vpop.f32.mrf.mxu0
  %2844 = vmatprep.mubr.bf16.mxu0 0
  %2845 = vmatmul.mubr.bf16.gmra.mxu0 %v2802
  %v2846 = vpop.f32.mrf.mxu0
  %v2847 = vadd.f32 0.0, %v2846
  %v2848 = vpop.f32.mrf.mxu0
  %v2849 = vpop.f32.mrf.mxu0
  %v2850 = vadd.f32 0.0, %v2849
  %v2851 = vpop.f32.mrf.mxu0
  %2852 = vdwg.mxu0
  %v2853 = vadd.f32 %v2742, %v2839
  %v2854 = vadd.f32 %v2745, %v2842
  %v2855 = vadd.f32 %v2750, %v2847
  %v2856 = vadd.f32 %v2753, %v2850
  %v2857 = vld [vmem:[#allocation5 + $0x10] sm:$0x3]
  %s2858 = scalar_lea.vmem %s3, 96
  %v2859 = vld [vmem:[%s2858] sm:$0xf]
  %v2860 = vld [vmem:[%s2858 + $0x4] sm:$0xf]
  %v2861 = vld [vmem:[%s2858 + $0x8] sm:$0xf]
  %v2862 = vld [vmem:[%s2858 + $0xc] sm:$0xf]
  %v2863 = vld [vmem:[%s2858 + $0x10] sm:$0xf]
  %v2864 = vld [vmem:[%s2858 + $0x14] sm:$0xf]
  %v2865 = vld [vmem:[%s2858 + $0x18] sm:$0xf]
  %v2866 = vld [vmem:[%s2858 + $0x1c] sm:$0xf]
  %v2868 = vunpack.c.l.b16 %v2857
  %v2869 = vpack.c.b16 %v2868, %v2868
  %v2871 = vshrl.u32 %v2768, 16
  %v2873 = vrot.slane %v2871, 1
  %v2874 = vshll.u32 %v2768, 16
  %v2876 = vrot.slane %v2874, 2
  %v2877 = vor.u32 %v2873, %v2876
  %v2878 = vrot.slane %v2592, 1
  %v2879 = vrot.slane %v2588, 2
  %v2880 = vor.u32 %v2878, %v2879
  %v2881 = vsel %vm209, %v2877, %v2880
  %v2883 = vshrl.u32 %v2869, 16
  %v2885 = vrot.slane %v2883, 1
  %v2886 = vshll.u32 %v2869, 16
  %v2888 = vrot.slane %v2886, 2
  %v2889 = vor.u32 %v2885, %v2888
  %v2890 = vsel %vm209, %v2880, %v2889
  %v2899 = vunpack.c.l.b16 %v2859
  %v2900 = vunpack.c.l.b16 %v2860
  %v2901 = vunpack.c.l.b16 %v2861
  %v2902 = vunpack.c.l.b16 %v2862
  %v2903 = vunpack.c.l.b16 %v2863
  %v2904 = vunpack.c.l.b16 %v2864
  %v2905 = vunpack.c.l.b16 %v2865
  %v2906 = vunpack.c.l.b16 %v2866
  %v2907 = vpack.c.b16 %v2900, %v2899
  %v2908 = vpack.c.b16 %v2902, %v2901
  %v2909 = vpack.c.b16 %v2904, %v2903
  %v2910 = vpack.c.b16 %v2906, %v2905
  %v2916 = vsel %vm2399, %v2881, 0
  %v2919 = vsel %vm2399, %v2890, 0
  %2921 = vmatprep.subr.bf16.mxu0 0
  %2922 = vmatpush1.bf16.msra.mxu0 0
  %2923 = vmatprep.subr.bf16.mxu0 0
  %2924 = vmatpush1.bf16.msra.mxu0 0
  %2925 = vmatprep.subr.bf16.mxu0 0
  %2926 = vmatpush1.bf16.msra.mxu0 0
  %2927 = vmatprep.subr.bf16.mxu0 0
  %2928 = vmatpush1.bf16.msra.mxu0 0
  %2929 = vmatprep.subr.bf16.mxu0 0
  %2930 = vmatpush1.bf16.msra.mxu0 %v2910
  %2931 = vmatprep.subr.bf16.mxu0 0
  %2932 = vmatpush1.bf16.msra.mxu0 %v2909
  %2933 = vmatprep.subr.bf16.mxu0 0
  %2934 = vmatpush1.bf16.msra.mxu0 %v2908
  %2935 = vmatprep.subr.bf16.mxu0 0
  %2936 = vmatpush1.bf16.msra.mxu0 %v2907
  %2937 = vmatprep.subr.bf16.mxu0 0
  %2938 = vmatpush2.bf16.msra.mxu0 0
  %2939 = vmatprep.subr.bf16.mxu0 0
  %2940 = vmatpush2.bf16.msra.mxu0 0
  %2941 = vmatprep.subr.bf16.mxu0 0
  %2942 = vmatpush2.bf16.msra.mxu0 0
  %2943 = vmatprep.subr.bf16.mxu0 0
  %2944 = vmatpush2.bf16.msra.mxu0 0
  %2945 = vmatprep.subr.bf16.mxu0 0
  %2946 = vmatpush2.bf16.msra.mxu0 0
  %2947 = vmatprep.subr.bf16.mxu0 0
  %2948 = vmatpush2.bf16.msra.mxu0 0
  %2949 = vmatprep.subr.bf16.mxu0 0
  %2950 = vmatpush2.bf16.msra.mxu0 0
  %2951 = vmatprep.subr.bf16.mxu0 0
  %2952 = vmatpush2.bf16.msra.mxu0 0
  %2953 = vmatprep.mubr.bf16.mxu0 0
  %2954 = vmatmul.mubr.bf16.gmra.mxu0 %v2916
  %v2955 = vpop.f32.mrf.mxu0
  %v2956 = vadd.f32 0.0, %v2955
  %v2957 = vpop.f32.mrf.mxu0
  %v2958 = vpop.f32.mrf.mxu0
  %v2959 = vadd.f32 0.0, %v2958
  %v2960 = vpop.f32.mrf.mxu0
  %2961 = vmatprep.mubr.bf16.mxu0 0
  %2962 = vmatmul.mubr.bf16.gmra.mxu0 %v2919
  %v2963 = vpop.f32.mrf.mxu0
  %v2964 = vadd.f32 0.0, %v2963
  %v2965 = vpop.f32.mrf.mxu0
  %v2966 = vpop.f32.mrf.mxu0
  %v2967 = vadd.f32 0.0, %v2966
  %v2968 = vpop.f32.mrf.mxu0
  %2969 = vdwg.mxu0
  %v2970 = vadd.f32 %v2853, %v2956
  %v2971 = vadd.f32 %v2854, %v2959
  %v2972 = vadd.f32 %v2855, %v2964
  %v2973 = vadd.f32 %v2856, %v2967
  %v2974 = vld [vmem:[#allocation5] sm:$0xc]
  %s2975 = scalar_lea.vmem %s3, 128
  %v2976 = vld [vmem:[%s2975] sm:$0xf]
  %v2977 = vld [vmem:[%s2975 + $0x4] sm:$0xf]
  %v2978 = vld [vmem:[%s2975 + $0x8] sm:$0xf]
  %v2979 = vld [vmem:[%s2975 + $0xc] sm:$0xf]
  %v2980 = vld [vmem:[%s2975 + $0x10] sm:$0xf]
  %v2981 = vld [vmem:[%s2975 + $0x14] sm:$0xf]
  %v2982 = vld [vmem:[%s2975 + $0x18] sm:$0xf]
  %v2983 = vld [vmem:[%s2975 + $0x1c] sm:$0xf]
  %v2985 = vunpack.c.l.b16 %v2974
  %v2986 = vpack.c.b16 %v2573, %v2985
  %v2987 = vrot.slane %v2986, 2
  %v2988 = vrot.slane %v2578, 2
  %v2989 = vsel %vm274, %v2987, %v2988
  %v2990 = vrot.slane %v2869, 2
  %v2991 = vsel %vm274, %v2988, %v2990
  %v3000 = vunpack.c.l.b16 %v2976
  %v3001 = vunpack.c.l.b16 %v2977
  %v3002 = vunpack.c.l.b16 %v2978
  %v3003 = vunpack.c.l.b16 %v2979
  %v3004 = vunpack.c.l.b16 %v2980
  %v3005 = vunpack.c.l.b16 %v2981
  %v3006 = vunpack.c.l.b16 %v2982
  %v3007 = vunpack.c.l.b16 %v2983
  %v3008 = vpack.c.b16 %v3001, %v3000
  %v3009 = vpack.c.b16 %v3003, %v3002
  %v3010 = vpack.c.b16 %v3005, %v3004
  %v3011 = vpack.c.b16 %v3007, %v3006
  %v3017 = vsel %vm2399, %v2989, 0
  %v3020 = vsel %vm2399, %v2991, 0
  %3022 = vmatprep.subr.bf16.mxu0 0
  %3023 = vmatpush1.bf16.msra.mxu0 0
  %3024 = vmatprep.subr.bf16.mxu0 0
  %3025 = vmatpush1.bf16.msra.mxu0 0
  %3026 = vmatprep.subr.bf16.mxu0 0
  %3027 = vmatpush1.bf16.msra.mxu0 0
  %3028 = vmatprep.subr.bf16.mxu0 0
  %3029 = vmatpush1.bf16.msra.mxu0 0
  %3030 = vmatprep.subr.bf16.mxu0 0
  %3031 = vmatpush1.bf16.msra.mxu0 %v3011
  %3032 = vmatprep.subr.bf16.mxu0 0
  %3033 = vmatpush1.bf16.msra.mxu0 %v3010
  %3034 = vmatprep.subr.bf16.mxu0 0
  %3035 = vmatpush1.bf16.msra.mxu0 %v3009
  %3036 = vmatprep.subr.bf16.mxu0 0
  %3037 = vmatpush1.bf16.msra.mxu0 %v3008
  %3038 = vmatprep.subr.bf16.mxu0 0
  %3039 = vmatpush2.bf16.msra.mxu0 0
  %3040 = vmatprep.subr.bf16.mxu0 0
  %3041 = vmatpush2.bf16.msra.mxu0 0
  %3042 = vmatprep.subr.bf16.mxu0 0
  %3043 = vmatpush2.bf16.msra.mxu0 0
  %3044 = vmatprep.subr.bf16.mxu0 0
  %3045 = vmatpush2.bf16.msra.mxu0 0
  %3046 = vmatprep.subr.bf16.mxu0 0
  %3047 = vmatpush2.bf16.msra.mxu0 0
  %3048 = vmatprep.subr.bf16.mxu0 0
  %3049 = vmatpush2.bf16.msra.mxu0 0
  %3050 = vmatprep.subr.bf16.mxu0 0
  %3051 = vmatpush2.bf16.msra.mxu0 0
  %3052 = vmatprep.subr.bf16.mxu0 0
  %3053 = vmatpush2.bf16.msra.mxu0 0
  %3054 = vmatprep.mubr.bf16.mxu0 0
  %3055 = vmatmul.mubr.bf16.gmra.mxu0 %v3017
  %v3056 = vpop.f32.mrf.mxu0
  %v3057 = vadd.f32 0.0, %v3056
  %v3058 = vpop.f32.mrf.mxu0
  %v3059 = vpop.f32.mrf.mxu0
  %v3060 = vadd.f32 0.0, %v3059
  %v3061 = vpop.f32.mrf.mxu0
  %3062 = vmatprep.mubr.bf16.mxu0 0
  %3063 = vmatmul.mubr.bf16.gmra.mxu0 %v3020
  %v3064 = vpop.f32.mrf.mxu0
  %v3065 = vadd.f32 0.0, %v3064
  %v3066 = vpop.f32.mrf.mxu0
  %v3067 = vpop.f32.mrf.mxu0
  %v3068 = vadd.f32 0.0, %v3067
  %v3069 = vpop.f32.mrf.mxu0
  %3070 = vdwg.mxu0
  %v3071 = vadd.f32 %v2970, %v3057
  %v3072 = vadd.f32 %v2971, %v3060
  %v3073 = vadd.f32 %v2972, %v3065
  %v3074 = vadd.f32 %v2973, %v3068
  %v3075 = vld [vmem:[#allocation5 + $0x10] sm:$0x7]
  %s3076 = scalar_lea.vmem %s3, 160
  %v3077 = vld [vmem:[%s3076] sm:$0xf]
  %v3078 = vld [vmem:[%s3076 + $0x4] sm:$0xf]
  %v3079 = vld [vmem:[%s3076 + $0x8] sm:$0xf]
  %v3080 = vld [vmem:[%s3076 + $0xc] sm:$0xf]
  %v3081 = vld [vmem:[%s3076 + $0x10] sm:$0xf]
  %v3082 = vld [vmem:[%s3076 + $0x14] sm:$0xf]
  %v3083 = vld [vmem:[%s3076 + $0x18] sm:$0xf]
  %v3084 = vld [vmem:[%s3076 + $0x1c] sm:$0xf]
  %v3086 = vunpack.c.l.b16 %v3075
  %v3087 = vpack.c.b16 %v3086, %v3086
  %v3089 = vshrl.u32 %v2986, 16
  %v3091 = vrot.slane %v3089, 2
  %v3092 = vshll.u32 %v2986, 16
  %v3094 = vrot.slane %v3092, 3
  %v3095 = vor.u32 %v3091, %v3094
  %v3096 = vrot.slane %v2592, 2
  %v3097 = vrot.slane %v2588, 3
  %v3098 = vor.u32 %v3096, %v3097
  %v3099 = vsel %vm311, %v3095, %v3098
  %v3101 = vshrl.u32 %v3087, 16
  %v3103 = vrot.slane %v3101, 2
  %v3104 = vshll.u32 %v3087, 16
  %v3106 = vrot.slane %v3104, 3
  %v3107 = vor.u32 %v3103, %v3106
  %v3108 = vsel %vm311, %v3098, %v3107
  %v3117 = vunpack.c.l.b16 %v3077
  %v3118 = vunpack.c.l.b16 %v3078
  %v3119 = vunpack.c.l.b16 %v3079
  %v3120 = vunpack.c.l.b16 %v3080
  %v3121 = vunpack.c.l.b16 %v3081
  %v3122 = vunpack.c.l.b16 %v3082
  %v3123 = vunpack.c.l.b16 %v3083
  %v3124 = vunpack.c.l.b16 %v3084
  %v3125 = vpack.c.b16 %v3118, %v3117
  %v3126 = vpack.c.b16 %v3120, %v3119
  %v3127 = vpack.c.b16 %v3122, %v3121
  %v3128 = vpack.c.b16 %v3124, %v3123
  %v3134 = vsel %vm2399, %v3099, 0
  %v3137 = vsel %vm2399, %v3108, 0
  %3139 = vmatprep.subr.bf16.mxu0 0
  %3140 = vmatpush1.bf16.msra.mxu0 0
  %3141 = vmatprep.subr.bf16.mxu0 0
  %3142 = vmatpush1.bf16.msra.mxu0 0
  %3143 = vmatprep.subr.bf16.mxu0 0
  %3144 = vmatpush1.bf16.msra.mxu0 0
  %3145 = vmatprep.subr.bf16.mxu0 0
  %3146 = vmatpush1.bf16.msra.mxu0 0
  %3147 = vmatprep.subr.bf16.mxu0 0
  %3148 = vmatpush1.bf16.msra.mxu0 %v3128
  %3149 = vmatprep.subr.bf16.mxu0 0
  %3150 = vmatpush1.bf16.msra.mxu0 %v3127
  %3151 = vmatprep.subr.bf16.mxu0 0
  %3152 = vmatpush1.bf16.msra.mxu0 %v3126
  %3153 = vmatprep.subr.bf16.mxu0 0
  %3154 = vmatpush1.bf16.msra.mxu0 %v3125
  %3155 = vmatprep.subr.bf16.mxu0 0
  %3156 = vmatpush2.bf16.msra.mxu0 0
  %3157 = vmatprep.subr.bf16.mxu0 0
  %3158 = vmatpush2.bf16.msra.mxu0 0
  %3159 = vmatprep.subr.bf16.mxu0 0
  %3160 = vmatpush2.bf16.msra.mxu0 0
  %3161 = vmatprep.subr.bf16.mxu0 0
  %3162 = vmatpush2.bf16.msra.mxu0 0
  %3163 = vmatprep.subr.bf16.mxu0 0
  %3164 = vmatpush2.bf16.msra.mxu0 0
  %3165 = vmatprep.subr.bf16.mxu0 0
  %3166 = vmatpush2.bf16.msra.mxu0 0
  %3167 = vmatprep.subr.bf16.mxu0 0
  %3168 = vmatpush2.bf16.msra.mxu0 0
  %3169 = vmatprep.subr.bf16.mxu0 0
  %3170 = vmatpush2.bf16.msra.mxu0 0
  %3171 = vmatprep.mubr.bf16.mxu0 0
  %3172 = vmatmul.mubr.bf16.gmra.mxu0 %v3134
  %v3173 = vpop.f32.mrf.mxu0
  %v3174 = vadd.f32 0.0, %v3173
  %v3175 = vpop.f32.mrf.mxu0
  %v3176 = vpop.f32.mrf.mxu0
  %v3177 = vadd.f32 0.0, %v3176
  %v3178 = vpop.f32.mrf.mxu0
  %3179 = vmatprep.mubr.bf16.mxu0 0
  %3180 = vmatmul.mubr.bf16.gmra.mxu0 %v3137
  %v3181 = vpop.f32.mrf.mxu0
  %v3182 = vadd.f32 0.0, %v3181
  %v3183 = vpop.f32.mrf.mxu0
  %v3184 = vpop.f32.mrf.mxu0
  %v3185 = vadd.f32 0.0, %v3184
  %v3186 = vpop.f32.mrf.mxu0
  %3187 = vdwg.mxu0
  %v3188 = vadd.f32 %v3071, %v3174
  %v3189 = vadd.f32 %v3072, %v3177
  %v3190 = vadd.f32 %v3073, %v3182
  %v3191 = vadd.f32 %v3074, %v3185
  %v3192 = vld [vmem:[#allocation5] sm:$0x8]
  %s3193 = scalar_lea.vmem %s3, 192
  %v3194 = vld [vmem:[%s3193] sm:$0xf]
  %v3195 = vld [vmem:[%s3193 + $0x4] sm:$0xf]
  %v3196 = vld [vmem:[%s3193 + $0x8] sm:$0xf]
  %v3197 = vld [vmem:[%s3193 + $0xc] sm:$0xf]
  %v3198 = vld [vmem:[%s3193 + $0x10] sm:$0xf]
  %v3199 = vld [vmem:[%s3193 + $0x14] sm:$0xf]
  %v3200 = vld [vmem:[%s3193 + $0x18] sm:$0xf]
  %v3201 = vld [vmem:[%s3193 + $0x1c] sm:$0xf]
  %v3203 = vunpack.c.l.b16 %v3192
  %v3204 = vpack.c.b16 %v2573, %v3203
  %v3205 = vrot.slane %v3204, 3
  %v3206 = vrot.slane %v2578, 3
  %v3207 = vsel %vm376, %v3205, %v3206
  %v3208 = vrot.slane %v3087, 3
  %v3209 = vsel %vm376, %v3206, %v3208
  %v3218 = vunpack.c.l.b16 %v3194
  %v3219 = vunpack.c.l.b16 %v3195
  %v3220 = vunpack.c.l.b16 %v3196
  %v3221 = vunpack.c.l.b16 %v3197
  %v3222 = vunpack.c.l.b16 %v3198
  %v3223 = vunpack.c.l.b16 %v3199
  %v3224 = vunpack.c.l.b16 %v3200
  %v3225 = vunpack.c.l.b16 %v3201
  %v3226 = vpack.c.b16 %v3219, %v3218
  %v3227 = vpack.c.b16 %v3221, %v3220
  %v3228 = vpack.c.b16 %v3223, %v3222
  %v3229 = vpack.c.b16 %v3225, %v3224
  %v3235 = vsel %vm2399, %v3207, 0
  %v3238 = vsel %vm2399, %v3209, 0
  %3240 = vmatprep.subr.bf16.mxu0 0
  %3241 = vmatpush1.bf16.msra.mxu0 0
  %3242 = vmatprep.subr.bf16.mxu0 0
  %3243 = vmatpush1.bf16.msra.mxu0 0
  %3244 = vmatprep.subr.bf16.mxu0 0
  %3245 = vmatpush1.bf16.msra.mxu0 0
  %3246 = vmatprep.subr.bf16.mxu0 0
  %3247 = vmatpush1.bf16.msra.mxu0 0
  %3248 = vmatprep.subr.bf16.mxu0 0
  %3249 = vmatpush1.bf16.msra.mxu0 %v3229
  %3250 = vmatprep.subr.bf16.mxu0 0
  %3251 = vmatpush1.bf16.msra.mxu0 %v3228
  %3252 = vmatprep.subr.bf16.mxu0 0
  %3253 = vmatpush1.bf16.msra.mxu0 %v3227
  %3254 = vmatprep.subr.bf16.mxu0 0
  %3255 = vmatpush1.bf16.msra.mxu0 %v3226
  %3256 = vmatprep.subr.bf16.mxu0 0
  %3257 = vmatpush2.bf16.msra.mxu0 0
  %3258 = vmatprep.subr.bf16.mxu0 0
  %3259 = vmatpush2.bf16.msra.mxu0 0
  %3260 = vmatprep.subr.bf16.mxu0 0
  %3261 = vmatpush2.bf16.msra.mxu0 0
  %3262 = vmatprep.subr.bf16.mxu0 0
  %3263 = vmatpush2.bf16.msra.mxu0 0
  %3264 = vmatprep.subr.bf16.mxu0 0
  %3265 = vmatpush2.bf16.msra.mxu0 0
  %3266 = vmatprep.subr.bf16.mxu0 0
  %3267 = vmatpush2.bf16.msra.mxu0 0
  %3268 = vmatprep.subr.bf16.mxu0 0
  %3269 = vmatpush2.bf16.msra.mxu0 0
  %3270 = vmatprep.subr.bf16.mxu0 0
  %3271 = vmatpush2.bf16.msra.mxu0 0
  %3272 = vmatprep.mubr.bf16.mxu0 0
  %3273 = vmatmul.mubr.bf16.gmra.mxu0 %v3235
  %v3274 = vpop.f32.mrf.mxu0
  %v3275 = vadd.f32 0.0, %v3274
  %v3276 = vpop.f32.mrf.mxu0
  %v3277 = vpop.f32.mrf.mxu0
  %v3278 = vadd.f32 0.0, %v3277
  %v3279 = vpop.f32.mrf.mxu0
  %3280 = vmatprep.mubr.bf16.mxu0 0
  %3281 = vmatmul.mubr.bf16.gmra.mxu0 %v3238
  %v3282 = vpop.f32.mrf.mxu0
  %v3283 = vadd.f32 0.0, %v3282
  %v3284 = vpop.f32.mrf.mxu0
  %v3285 = vpop.f32.mrf.mxu0
  %v3286 = vadd.f32 0.0, %v3285
  %v3287 = vpop.f32.mrf.mxu0
  %3288 = vdwg.mxu0
  %v3289 = vadd.f32 %v3188, %v3275
  %v3290 = vadd.f32 %v3189, %v3278
  %v3291 = vadd.f32 %v3190, %v3283
  %v3292 = vadd.f32 %v3191, %v3286
  %v3293 = vld [vmem:[#allocation5 + $0x10] sm:$0xf]
  %s3294 = scalar_lea.vmem %s3, 224
  %v3295 = vld [vmem:[%s3294] sm:$0xf]
  %v3296 = vld [vmem:[%s3294 + $0x4] sm:$0xf]
  %v3297 = vld [vmem:[%s3294 + $0x8] sm:$0xf]
  %v3298 = vld [vmem:[%s3294 + $0xc] sm:$0xf]
  %v3299 = vld [vmem:[%s3294 + $0x10] sm:$0xf]
  %v3300 = vld [vmem:[%s3294 + $0x14] sm:$0xf]
  %v3301 = vld [vmem:[%s3294 + $0x18] sm:$0xf]
  %v3302 = vld [vmem:[%s3294 + $0x1c] sm:$0xf]
  %v3304 = vunpack.c.l.b16 %v3293
  %v3305 = vpack.c.b16 %v3304, %v3304
  %v3307 = vshrl.u32 %v3204, 16
  %v3309 = vrot.slane %v3307, 3
  %v3310 = vshll.u32 %v3204, 16
  %v3312 = vrot.slane %v3310, 4
  %v3313 = vor.u32 %v3309, %v3312
  %v3314 = vrot.slane %v2592, 3
  %v3315 = vrot.slane %v2588, 4
  %v3316 = vor.u32 %v3314, %v3315
  %v3317 = vsel %vm413, %v3313, %v3316
  %v3319 = vshrl.u32 %v3305, 16
  %v3321 = vrot.slane %v3319, 3
  %v3322 = vshll.u32 %v3305, 16
  %v3324 = vrot.slane %v3322, 4
  %v3325 = vor.u32 %v3321, %v3324
  %v3326 = vsel %vm413, %v3316, %v3325
  %v3335 = vunpack.c.l.b16 %v3295
  %v3336 = vunpack.c.l.b16 %v3296
  %v3337 = vunpack.c.l.b16 %v3297
  %v3338 = vunpack.c.l.b16 %v3298
  %v3339 = vunpack.c.l.b16 %v3299
  %v3340 = vunpack.c.l.b16 %v3300
  %v3341 = vunpack.c.l.b16 %v3301
  %v3342 = vunpack.c.l.b16 %v3302
  %v3343 = vpack.c.b16 %v3336, %v3335
  %v3344 = vpack.c.b16 %v3338, %v3337
  %v3345 = vpack.c.b16 %v3340, %v3339
  %v3346 = vpack.c.b16 %v3342, %v3341
  %v3352 = vsel %vm2399, %v3317, 0
  %v3355 = vsel %vm2399, %v3326, 0
  %3357 = vmatprep.subr.bf16.mxu0 0
  %3358 = vmatpush1.bf16.msra.mxu0 0
  %3359 = vmatprep.subr.bf16.mxu0 0
  %3360 = vmatpush1.bf16.msra.mxu0 0
  %3361 = vmatprep.subr.bf16.mxu0 0
  %3362 = vmatpush1.bf16.msra.mxu0 0
  %3363 = vmatprep.subr.bf16.mxu0 0
  %3364 = vmatpush1.bf16.msra.mxu0 0
  %3365 = vmatprep.subr.bf16.mxu0 0
  %3366 = vmatpush1.bf16.msra.mxu0 %v3346
  %3367 = vmatprep.subr.bf16.mxu0 0
  %3368 = vmatpush1.bf16.msra.mxu0 %v3345
  %3369 = vmatprep.subr.bf16.mxu0 0
  %3370 = vmatpush1.bf16.msra.mxu0 %v3344
  %3371 = vmatprep.subr.bf16.mxu0 0
  %3372 = vmatpush1.bf16.msra.mxu0 %v3343
  %3373 = vmatprep.subr.bf16.mxu0 0
  %3374 = vmatpush2.bf16.msra.mxu0 0
  %3375 = vmatprep.subr.bf16.mxu0 0
  %3376 = vmatpush2.bf16.msra.mxu0 0
  %3377 = vmatprep.subr.bf16.mxu0 0
  %3378 = vmatpush2.bf16.msra.mxu0 0
  %3379 = vmatprep.subr.bf16.mxu0 0
  %3380 = vmatpush2.bf16.msra.mxu0 0
  %3381 = vmatprep.subr.bf16.mxu0 0
  %3382 = vmatpush2.bf16.msra.mxu0 0
  %3383 = vmatprep.subr.bf16.mxu0 0
  %3384 = vmatpush2.bf16.msra.mxu0 0
  %3385 = vmatprep.subr.bf16.mxu0 0
  %3386 = vmatpush2.bf16.msra.mxu0 0
  %3387 = vmatprep.subr.bf16.mxu0 0
  %3388 = vmatpush2.bf16.msra.mxu0 0
  %3389 = vmatprep.mubr.bf16.mxu0 0
  %3390 = vmatmul.mubr.bf16.gmra.mxu0 %v3352
  %v3391 = vpop.f32.mrf.mxu0
  %v3392 = vadd.f32 0.0, %v3391
  %v3393 = vpop.f32.mrf.mxu0
  %v3394 = vpop.f32.mrf.mxu0
  %v3395 = vadd.f32 0.0, %v3394
  %v3396 = vpop.f32.mrf.mxu0
  %3397 = vmatprep.mubr.bf16.mxu0 0
  %3398 = vmatmul.mubr.bf16.gmra.mxu0 %v3355
  %v3399 = vpop.f32.mrf.mxu0
  %v3400 = vadd.f32 0.0, %v3399
  %v3401 = vpop.f32.mrf.mxu0
  %v3402 = vpop.f32.mrf.mxu0
  %v3403 = vadd.f32 0.0, %v3402
  %v3404 = vpop.f32.mrf.mxu0
  %3405 = vdwg.mxu0
  %v3406 = vadd.f32 %v3289, %v3392
  %v3407 = vadd.f32 %v3290, %v3395
  %v3408 = vadd.f32 %v3291, %v3400
  %v3409 = vadd.f32 %v3292, %v3403
  %vm3410 = vcmp.lt.s32.totalorder %v725, 0
  %v3411 = vsub.s32 0, %v725
  %v3412 = vsel %vm3410, %v3411, %v725
  %v3413 = vshrl.u32 %v3412, 4
  %v3414 = vand.u32 %v3412, 15
  %v3415 = vsub.s32 0, %v3414
  %v3416 = vsel %vm3410, %v3415, %v3414
  %vm3417 = vcmp.lt.s32.totalorder %v726, 0
  %v3418 = vsub.s32 0, %v726
  %v3419 = vsel %vm3417, %v3418, %v726
  %v3420 = vshrl.u32 %v3419, 4
  %v3421 = vand.u32 %v3419, 15
  %v3422 = vsub.s32 0, %v3421
  %v3423 = vsel %vm3417, %v3422, %v3421
  %vm3424 = vcmp.lt.s32.totalorder %v727, 0
  %v3425 = vsub.s32 0, %v727
  %v3426 = vsel %vm3424, %v3425, %v727
  %v3427 = vshrl.u32 %v3426, 4
  %v3428 = vand.u32 %v3426, 15
  %v3429 = vsub.s32 0, %v3428
  %v3430 = vsel %vm3424, %v3429, %v3428
  %vm3431 = vcmp.lt.s32.totalorder %v728, 0
  %v3432 = vsub.s32 0, %v728
  %v3433 = vsel %vm3431, %v3432, %v728
  %v3434 = vshrl.u32 %v3433, 4
  %v3435 = vand.u32 %v3433, 15
  %v3436 = vsub.s32 0, %v3435
  %v3437 = vsel %vm3431, %v3436, %v3435
  %vm3438 = vcmp.ne.s32.totalorder %v3416, 0
  %vm3439 = vcmp.ne.s32.totalorder %v3423, 0
  %vm3440 = vcmp.ne.s32.totalorder %v3430, 0
  %vm3441 = vcmp.ne.s32.totalorder %v3437, 0
  %vm3442 = vcmp.lt.s32.totalorder %v3416, 0
  %vm3443 = vcmp.lt.s32.totalorder %v3423, 0
  %vm3444 = vcmp.lt.s32.totalorder %v3430, 0
  %vm3445 = vcmp.lt.s32.totalorder %v3437, 0
  %vm3446 = vmand %vm3442, %vm3438
  %vm3447 = vmand %vm3443, %vm3439
  %vm3448 = vmand %vm3444, %vm3440
  %vm3449 = vmand %vm3445, %vm3441
  %v3450 = vadd.s32 %v3416, 16
  %v3451 = vadd.s32 %v3423, 16
  %v3452 = vadd.s32 %v3430, 16
  %v3453 = vadd.s32 %v3437, 16
  %v3454 = vsel %vm3446, %v3450, %v3416
  %v3455 = vsel %vm3447, %v3451, %v3423
  %v3456 = vsel %vm3448, %v3452, %v3430
  %v3457 = vsel %vm3449, %v3453, %v3437
  %vm3458 = vcmp.lt.s32.totalorder %v3454, 7
  %vm3459 = vcmp.lt.s32.totalorder %v3455, 7
  %vm3460 = vcmp.lt.s32.totalorder %v3456, 7
  %vm3461 = vcmp.lt.s32.totalorder %v3457, 7
  %v3462 = vsel %vm3458, 1, 0
  %v3463 = vsel %vm3459, 1, 0
  %v3464 = vsel %vm3460, 1, 0
  %v3465 = vsel %vm3461, 1, 0
  %vm3466 = vcmp.eq.s32.totalorder %v3462, 1
  %vm3467 = vcmp.eq.s32.totalorder %v3463, 1
  %vm3468 = vcmp.eq.s32.totalorder %v3464, 1
  %vm3469 = vcmp.eq.s32.totalorder %v3465, 1
  %v3470 = vsel %vm3466, %v3406, 0.0
  %v3471 = vsel %vm3467, %v3407, 0.0
  %v3472 = vsel %vm3468, %v3408, 0.0
  %v3473 = vsel %vm3469, %v3409, 0.0
  %v3474 = vadd.f32 %v3470, %v3471
  %v3475 = vadd.f32 %v3474, %v3472
  %v3476 = vadd.f32 %v3475, %v3473
  %v3477 = vrot.slane %v3476, 4
  %v3478 = vadd.f32 %v3476, %v3477
  %v3479 = vrot.slane %v3478, 2
  %v3480 = vadd.f32 %v3478, %v3479
  %v3481 = vrot.slane %v3480, 1
  %v3482 = vadd.f32 %v3480, %v3481
  %v3483 = vmul.f32 %v3482, 0.071428575
  %v3484 = vsub.f32 %v3406, %v3483
  %v3485 = vsub.f32 %v3407, %v3483
  %v3486 = vsub.f32 %v3408, %v3483
  %v3487 = vsub.f32 %v3409, %v3483
  %v3488 = vsel %vm3466, %v3484, 0.0
  %v3489 = vsel %vm3467, %v3485, 0.0
  %v3490 = vsel %vm3468, %v3486, 0.0
  %v3491 = vsel %vm3469, %v3487, 0.0
  %v3492 = vmul.f32 %v3488, %v3488
  %v3493 = vmul.f32 %v3489, %v3489
  %v3494 = vmul.f32 %v3490, %v3490
  %v3495 = vmul.f32 %v3491, %v3491
  %v3496 = vadd.f32 %v3492, %v3493
  %v3497 = vadd.f32 %v3496, %v3494
  %v3498 = vadd.f32 %v3497, %v3495
  %v3499 = vrot.slane %v3498, 4
  %v3500 = vadd.f32 %v3498, %v3499
  %v3501 = vrot.slane %v3500, 2
  %v3502 = vadd.f32 %v3500, %v3501
  %v3503 = vrot.slane %v3502, 1
  %v3504 = vadd.f32 %v3502, %v3503
  %v3505 = vmul.f32 %v3504, 0.071428575
  %v3506 = vadd.f32 %v3505, 1e-05
  %v3507 = vrsqrt.pop %v3506
  %v3508 = vmul.f32 %v3484, %v3507
  %v3509 = vmul.f32 %v3485, %v3507
  %v3510 = vmul.f32 %v3486, %v3507
  %v3511 = vmul.f32 %v3487, %v3507
  %v3512 = vmax.f32 %v3508, 0.0
  %v3513 = vmax.f32 %v3509, 0.0
  %v3514 = vmax.f32 %v3510, 0.0
  %v3515 = vmax.f32 %v3511, 0.0
  %v3516 = vsel %vm3466, %v3512, 0.0
  %v3517 = vsel %vm3467, %v3513, 0.0
  %v3518 = vsel %vm3468, %v3514, 0.0
  %v3519 = vsel %vm3469, %v3515, 0.0
  %3520 = vst [vmem:[#allocation6] sm:$0xff] 0.0
  %3521 = vst [vmem:[#allocation6 + $0x8] sm:$0xff] 0.0
  %3522 = vst [vmem:[#allocation6 + $0x9] sm:$0xff] %v3516
  %3523 = vst [vmem:[#allocation6 + $0x11] sm:$0xff] %v3517
  %3524 = vst [vmem:[#allocation6 + $0x19] sm:$0xff] %v3518
  %3525 = vst [vmem:[#allocation6 + $0x21] sm:$0xff] %v3519
  %v3526 = vld [vmem:[#allocation6] ss:$2 sm:$0xff]
  %s3527 = scalar_lea.vmem [#allocation6], 16
  %v3528 = vld [vmem:[%s3527] ss:$2 sm:$0xff]
  %s3529 = scalar_lea.vmem [#allocation6], 1
  %v3530 = vld [vmem:[%s3529] ss:$2 sm:$0xff]
  %s3531 = scalar_lea.vmem [#allocation6], 17
  %v3532 = vld [vmem:[%s3531] ss:$2 sm:$0xff]
  %v3533 = vmax.f32 %v3526, %v3530
  %v3534 = vmax.f32 %v3528, %v3532
  %3535 = vst [vmem:[%s4] sm:$0xff] %v3533
  %3536 = vst [vmem:[%s4 + $0x8] sm:$0xff] %v3534
  // Predicated region
  $region18: #{tfc_conv_block.1} parent=0 // pred_check
    _
  $region19: #{tfc_conv_block.1} parent=0 // pred_check_branch
    %3538 = sbr.rel (0) target = $region21
  $region20: #{tfc_conv_block.1} parent=0 // pred_region
    _
  $region21: #{tfc_conv_block.1} parent=0 // pred_fallthru
    _
  // Predicated region
  $region22: #{tfc_conv_block.1} parent=0 // pred_check
    _
  $region23: #{tfc_conv_block.1} parent=0 // pred_check_branch
    %3540 = sbr.rel (0) target = $region25
  $region24: #{tfc_conv_block.1} parent=0 // pred_region
    _
  $region25: #{tfc_conv_block.1} parent=0 // pred_fallthru
    _

</llo_original>
